<compile_context>
chip_gen: v7x
topology: tpu7x:2x2x1
jax: 0.10.0
libtpu: 0.0.40
codegen_flags: <defaults>
</compile_context>

<pallas_src>
import functools

import jax
import jax.numpy as jnp
from jax.experimental import pallas as pl
from jax.experimental.pallas import tpu as pltpu


# Set to jnp.bfloat16 on v6e/v7x to halve MXU/HBM traffic for the matmuls
# (recurrence elementwise math stays f32; accumulation stays f32).
MXU_DTYPE = jnp.float32


# --------------------------- Fused forward kernel ---------------------------


def _make_fused_kernel(L, B, depth, n_d):
    """Build the fused forward kernel for static (L, B, depth, n_d)."""
    LB = L * B

    def kernel(emb_ref,      # (LB, n_e)            MXU dtype
               w0_ref,       # (4, n_e, n_d)        gate-major layer-0 weights
               wrest_ref,    # (max(depth-1,1), 3, n_d, n_d)  gate-major fused P1@P2
               wc_ref,       # (depth, 2, 1, n_d)   [v_forget, v_reset]
               b_ref,        # (depth, 2, 1, n_d)   [b_forget, b_reset]
               c0_ref,       # (depth, B, n_d)      initial cell states
               wout_ref,     # (n_d, n_V)
               bout_ref,     # (1, n_V)
               logits_ref,   # (LB, n_V)            out
               cfinal_ref,   # (depth, B, n_d)      out
               h_scr):       # (LB, n_d) f32        VMEM scratch: current hidden stream

        def sru_recurrence(layer, u0, u1, u2, resid):
            # u0/u1/u2/resid: (LB, n_d) f32 values, time-major rows [t*B : (t+1)*B].
            wcl = wc_ref[layer]            # (2, 1, n_d)
            bl = b_ref[layer]              # (2, 1, n_d)
            fw, rw = wcl[0], wcl[1]        # (1, n_d) each
            fb, rb = bl[0], bl[1]
            c = c0_ref[layer]              # (B, n_d) value carry
            # Static unrolled time loop: no grid-step overhead, U stays in vregs/VMEM.
            # TODO(synk): for long sequences switch to a chunked lax.fori_loop(unroll=k)
            #             over time to bound trace size / live ranges.
            for t in range(L):
                lo, hi = t * B, (t + 1) * B
                fg = jax.nn.sigmoid(u1[lo:hi] + fw * c + fb)
                c = (c - u0[lo:hi]) * fg + u0[lo:hi]
                rg = jax.nn.sigmoid(u2[lo:hi] + rw * c + rb)
                x_t = resid[lo:hi]
                h_scr[lo:hi, :] = (c - x_t) * rg + x_t
            # Final cell state written exactly once (no per-step redundant stores).
            cfinal_ref[layer] = c

        # ------- layer 0: k = 4 gates from the embedding stream (gate-major) -------
        x0 = emb_ref[...]                              # (LB, n_e)
        w0 = w0_ref[...]                               # (4, n_e, n_d)
        u0 = jnp.dot(x0, w0[0], preferred_element_type=jnp.float32)
        u1 = jnp.dot(x0, w0[1], preferred_element_type=jnp.float32)
        u2 = jnp.dot(x0, w0[2], preferred_element_type=jnp.float32)
        resid = jnp.dot(x0, w0[3], preferred_element_type=jnp.float32)
        sru_recurrence(0, u0, u1, u2, resid)

        # ------- layers 1..depth-1: k = 3, residual = layer input ------------------
        for layer in range(1, depth):
            h_prev = h_scr[...]                        # (LB, n_d) f32, value (no aliasing)
            xm = h_prev.astype(wrest_ref.dtype)
            wl = wrest_ref[layer - 1]                  # (3, n_d, n_d)
            u0 = jnp.dot(xm, wl[0], preferred_element_type=jnp.float32)
            u1 = jnp.dot(xm, wl[1], preferred_element_type=jnp.float32)
            u2 = jnp.dot(xm, wl[2], preferred_element_type=jnp.float32)
            sru_recurrence(layer, u0, u1, u2, h_prev)

        # ------- output projection --------------------------------------------------
        # TODO(synk): for realistic vocab sizes (tens of thousands) split this into a
        #             separate (M, N)-tiled pallas_call with a parallel grid so it fits
        #             VMEM (v7x: 64 MiB) and can use both v7x TensorCores.
        logits_ref[...] = (
            jnp.dot(h_scr[...].astype(wout_ref.dtype), wout_ref[...],
                    preferred_element_type=jnp.float32)
            + bout_ref[...]
        )

    return kernel


# ------------------------------- Model forward ------------------------------


@functools.partial(jax.jit, static_argnames=("depth", "n_d"))
def model_forward(params, x_tokens, hidden, *, depth, n_d):
    L, B = x_tokens.shape
    n_e = params["emb"].shape[1]
    n_V = params["Wout"].shape[1]

    # Embedding lookup (gather) + dropout(eval)=identity: plain-JAX glue, one XLA op.
    emb = params["emb"][x_tokens].reshape(L * B, n_e).astype(MXU_DTYPE)

    # Gate-major weight prep (tiny, done once per call by XLA; eval-mode exact):
    #   W (in, k*n_d) -> (k, in, n_d) so each gate is a lane-aligned dot in the kernel.
    w0 = params["layers"][0]["W"].reshape(n_e, 4, n_d).transpose(1, 0, 2).astype(MXU_DTYPE)

    if depth > 1:
        wrest = jnp.stack([
            jnp.dot(params["layers"][i]["P1"], params["layers"][i]["P2"])
            .reshape(n_d, 3, n_d).transpose(1, 0, 2)
            for i in range(1, depth)
        ]).astype(MXU_DTYPE)                           # (depth-1, 3, n_d, n_d)
    else:
        wrest = jnp.zeros((1, 3, n_d, n_d), MXU_DTYPE)  # unused dummy

    wc = jnp.stack([params["layers"][i]["wc"] for i in range(depth)])      # (depth, 2, 1, n_d)
    bias = jnp.stack([params["layers"][i]["bias"] for i in range(depth)])  # (depth, 2, 1, n_d)
    wout = params["Wout"].astype(MXU_DTYPE)
    bout = params["bout"]

    kernel = _make_fused_kernel(L, B, depth, n_d)
    logits, c_final = pl.pallas_call(
        kernel,
        out_shape=(
            jax.ShapeDtypeStruct((L * B, n_V), jnp.float32),
            jax.ShapeDtypeStruct((depth, B, n_d), jnp.float32),
        ),
        scratch_shapes=[pltpu.VMEM((L * B, n_d), jnp.float32)],
    )(emb, w0, wrest, wc, bias, hidden, wout, bout)
    return logits, c_final


# ------------------------------ Parameter init -------------------------------


def init_params(key, *, n_V, n_e, n_d, n_proj, depth):
    def uniform(k, shape, bound):
        return jax.random.uniform(k, shape, jnp.float32, -bound, bound)

    keys = jax.random.split(key, 4 + 4 * depth)
    ki = iter(keys)

    params = {}
    # embedding / output layer: uniform(-sqrt(3/size(0)), +sqrt(3/size(0))), bias zero
    params["emb"] = uniform(next(ki), (n_V, n_e), (3.0 / n_V) ** 0.5)
    params["Wout"] = uniform(next(ki), (n_d, n_V), (3.0 / n_V) ** 0.5)
    params["bout"] = jnp.zeros((1, n_V), jnp.float32)

    layers = []
    for layer in range(depth):
        lw = {}
        if layer == 0:
            lw["W"] = uniform(next(ki), (n_e, 4 * n_d), (3.0 / n_e) ** 0.5)
        else:
            lw["P1"] = uniform(next(ki), (n_d, n_proj), (3.0 / n_d) ** 0.5)
            lw["P2"] = uniform(next(ki), (n_proj, 3 * n_d), (3.0 / n_proj) ** 0.5)
        # SRU cell parameters: weight_c [v_f, v_r], bias [b_f, b_r] (highway_bias = 0)
        lw["wc"] = uniform(next(ki), (2, 1, n_d), (3.0 / n_d) ** 0.5)
        lw["bias"] = jnp.zeros((2, 1, n_d), jnp.float32)
        layers.append(lw)
    params["layers"] = layers
    return params


# ----------------------------------- Main ------------------------------------

if __name__ == "__main__":
    # Small config consistent with Model.__init__:
    #   words -> n_V = 16, args.n_d = 32, n_e = min(n_V, n_d) = 16,
    #   args.depth = 3, args.n_proj = 8, dropout = 0, bias = 0,
    #   layer_norm = False, rescale = False.
    n_V, n_d, n_proj, depth = 16, 32, 8, 3
    n_e = n_V if n_V < n_d else n_d  # = 16
    L, B = 8, 2

    key = jax.random.PRNGKey(0)
    k_param, k_tok = jax.random.split(key)

    params = init_params(k_param, n_V=n_V, n_e=n_e, n_d=n_d,
                         n_proj=n_proj, depth=depth)
    x_tokens = jax.random.randint(k_tok, (L, B), 0, n_V, dtype=jnp.int32)
    hidden0 = jnp.zeros((depth, B, n_d), jnp.float32)  # Model.init_hidden

    logits, hidden1 = model_forward(params, x_tokens, hidden0,
                                    depth=depth, n_d=n_d)
    jax.block_until_ready((logits, hidden1))

    assert logits.shape == (L * B, n_V)
    assert hidden1.shape == (depth, B, n_d)
    print("KERNEL_OK")
</pallas_src>

<mosaic_0001>
module attributes {stable_mosaic.version = 11 : i64} {
  func.func @kernel(%arg0: memref<16x16xf32, #tpu.memory_space<vmem>>, %arg1: memref<4x16x32xf32, #tpu.memory_space<vmem>>, %arg2: memref<2x3x32x32xf32, #tpu.memory_space<vmem>>, %arg3: memref<3x2x1x32xf32, #tpu.memory_space<vmem>>, %arg4: memref<3x2x1x32xf32, #tpu.memory_space<vmem>>, %arg5: memref<3x2x32xf32, #tpu.memory_space<vmem>>, %arg6: memref<32x16xf32, #tpu.memory_space<vmem>>, %arg7: memref<1x16xf32, #tpu.memory_space<vmem>>, %arg8: memref<16x16xf32, #tpu.memory_space<vmem>>, %arg9: memref<3x2x32xf32, #tpu.memory_space<vmem>>, %arg10: memref<16x32xf32, #tpu.memory_space<vmem>>) attributes {dimension_semantics = [], scalar_prefetch = 0 : i64, scratch_operands = 1 : i64, tpu.core_type = #tpu.core_type<tc>} {
    %c0 = arith.constant 0 : index
    %c0_0 = arith.constant 0 : index
    %0 = vector.load %arg0[%c0, %c0_0] : memref<16x16xf32, #tpu.memory_space<vmem>>, vector<16x16xf32>
    %c0_1 = arith.constant 0 : index
    %c0_2 = arith.constant 0 : index
    %c0_3 = arith.constant 0 : index
    %1 = vector.load %arg1[%c0_1, %c0_2, %c0_3] : memref<4x16x32xf32, #tpu.memory_space<vmem>>, vector<4x16x32xf32>
    %2 = vector.extract_strided_slice %1 {offsets = [0, 0, 0], sizes = [1, 16, 32], strides = [1, 1, 1]} : vector<4x16x32xf32> to vector<1x16x32xf32>
    %3 = vector.shape_cast %2 : vector<1x16x32xf32> to vector<16x32xf32>
    %cst = arith.constant dense<0.000000e+00> : vector<16x32xf32>
    %4 = tpu.matmul %0, %3, %cst {dimension_numbers = #tpu.dot_dimension_numbers<[1], [0], [0], [1], [0, 0, 1, 1], [], []>} : vector<16x16xf32>, vector<16x32xf32>, vector<16x32xf32> -> vector<16x32xf32>
    %5 = vector.extract_strided_slice %1 {offsets = [1, 0, 0], sizes = [1, 16, 32], strides = [1, 1, 1]} : vector<4x16x32xf32> to vector<1x16x32xf32>
    %6 = vector.shape_cast %5 : vector<1x16x32xf32> to vector<16x32xf32>
    %cst_4 = arith.constant dense<0.000000e+00> : vector<16x32xf32>
    %7 = tpu.matmul %0, %6, %cst_4 {dimension_numbers = #tpu.dot_dimension_numbers<[1], [0], [0], [1], [0, 0, 1, 1], [], []>} : vector<16x16xf32>, vector<16x32xf32>, vector<16x32xf32> -> vector<16x32xf32>
    %8 = vector.extract_strided_slice %1 {offsets = [2, 0, 0], sizes = [1, 16, 32], strides = [1, 1, 1]} : vector<4x16x32xf32> to vector<1x16x32xf32>
    %9 = vector.shape_cast %8 : vector<1x16x32xf32> to vector<16x32xf32>
    %cst_5 = arith.constant dense<0.000000e+00> : vector<16x32xf32>
    %10 = tpu.matmul %0, %9, %cst_5 {dimension_numbers = #tpu.dot_dimension_numbers<[1], [0], [0], [1], [0, 0, 1, 1], [], []>} : vector<16x16xf32>, vector<16x32xf32>, vector<16x32xf32> -> vector<16x32xf32>
    %11 = vector.extract_strided_slice %1 {offsets = [3, 0, 0], sizes = [1, 16, 32], strides = [1, 1, 1]} : vector<4x16x32xf32> to vector<1x16x32xf32>
    %12 = vector.shape_cast %11 : vector<1x16x32xf32> to vector<16x32xf32>
    %cst_6 = arith.constant dense<0.000000e+00> : vector<16x32xf32>
    %13 = tpu.matmul %0, %12, %cst_6 {dimension_numbers = #tpu.dot_dimension_numbers<[1], [0], [0], [1], [0, 0, 1, 1], [], []>} : vector<16x16xf32>, vector<16x32xf32>, vector<16x32xf32> -> vector<16x32xf32>
    %c0_7 = arith.constant 0 : index
    %c0_8 = arith.constant 0 : index
    %c0_9 = arith.constant 0 : index
    %c0_10 = arith.constant 0 : index
    %14 = vector.load %arg3[%c0_7, %c0_8, %c0_9, %c0_10] : memref<3x2x1x32xf32, #tpu.memory_space<vmem>>, vector<1x2x1x32xf32>
    %15 = vector.shape_cast %14 : vector<1x2x1x32xf32> to vector<2x1x32xf32>
    %c0_11 = arith.constant 0 : index
    %c0_12 = arith.constant 0 : index
    %c0_13 = arith.constant 0 : index
    %c0_14 = arith.constant 0 : index
    %16 = vector.load %arg4[%c0_11, %c0_12, %c0_13, %c0_14] : memref<3x2x1x32xf32, #tpu.memory_space<vmem>>, vector<1x2x1x32xf32>
    %17 = vector.shape_cast %16 : vector<1x2x1x32xf32> to vector<2x1x32xf32>
    %18 = vector.extract_strided_slice %15 {offsets = [0, 0, 0], sizes = [1, 1, 32], strides = [1, 1, 1]} : vector<2x1x32xf32> to vector<1x1x32xf32>
    %19 = vector.shape_cast %18 : vector<1x1x32xf32> to vector<1x32xf32>
    %20 = vector.extract_strided_slice %15 {offsets = [1, 0, 0], sizes = [1, 1, 32], strides = [1, 1, 1]} : vector<2x1x32xf32> to vector<1x1x32xf32>
    %21 = vector.shape_cast %20 : vector<1x1x32xf32> to vector<1x32xf32>
    %22 = vector.extract_strided_slice %17 {offsets = [0, 0, 0], sizes = [1, 1, 32], strides = [1, 1, 1]} : vector<2x1x32xf32> to vector<1x1x32xf32>
    %23 = vector.shape_cast %22 : vector<1x1x32xf32> to vector<1x32xf32>
    %24 = vector.extract_strided_slice %17 {offsets = [1, 0, 0], sizes = [1, 1, 32], strides = [1, 1, 1]} : vector<2x1x32xf32> to vector<1x1x32xf32>
    %25 = vector.shape_cast %24 : vector<1x1x32xf32> to vector<1x32xf32>
    %c0_15 = arith.constant 0 : index
    %c0_16 = arith.constant 0 : index
    %c0_17 = arith.constant 0 : index
    %26 = vector.load %arg5[%c0_15, %c0_16, %c0_17] : memref<3x2x32xf32, #tpu.memory_space<vmem>>, vector<1x2x32xf32>
    %27 = vector.shape_cast %26 : vector<1x2x32xf32> to vector<2x32xf32>
    %28 = vector.extract_strided_slice %7 {offsets = [0, 0], sizes = [2, 32], strides = [1, 1]} : vector<16x32xf32> to vector<2x32xf32>
    %29 = vector.broadcast %19 : vector<1x32xf32> to vector<2x32xf32>
    %30 = arith.mulf %29, %27 : vector<2x32xf32>
    %31 = arith.addf %28, %30 : vector<2x32xf32>
    %32 = vector.broadcast %23 : vector<1x32xf32> to vector<2x32xf32>
    %33 = arith.addf %31, %32 : vector<2x32xf32>
    %34 = arith.negf %33 : vector<2x32xf32>
    %35 = math.exp %34 : vector<2x32xf32>
    %cst_18 = arith.constant 1.000000e+00 : f32
    %36 = vector.broadcast %cst_18 : f32 to vector<2x32xf32>
    %37 = arith.addf %36, %35 : vector<2x32xf32>
    %38 = arith.divf %36, %37 : vector<2x32xf32>
    %39 = vector.extract_strided_slice %4 {offsets = [0, 0], sizes = [2, 32], strides = [1, 1]} : vector<16x32xf32> to vector<2x32xf32>
    %40 = arith.subf %27, %39 : vector<2x32xf32>
    %41 = arith.mulf %40, %38 : vector<2x32xf32>
    %42 = vector.extract_strided_slice %4 {offsets = [0, 0], sizes = [2, 32], strides = [1, 1]} : vector<16x32xf32> to vector<2x32xf32>
    %43 = arith.addf %41, %42 : vector<2x32xf32>
    %44 = vector.extract_strided_slice %10 {offsets = [0, 0], sizes = [2, 32], strides = [1, 1]} : vector<16x32xf32> to vector<2x32xf32>
    %45 = vector.broadcast %21 : vector<1x32xf32> to vector<2x32xf32>
    %46 = arith.mulf %45, %43 : vector<2x32xf32>
    %47 = arith.addf %44, %46 : vector<2x32xf32>
    %48 = vector.broadcast %25 : vector<1x32xf32> to vector<2x32xf32>
    %49 = arith.addf %47, %48 : vector<2x32xf32>
    %50 = arith.negf %49 : vector<2x32xf32>
    %51 = math.exp %50 : vector<2x32xf32>
    %cst_19 = arith.constant 1.000000e+00 : f32
    %52 = vector.broadcast %cst_19 : f32 to vector<2x32xf32>
    %53 = arith.addf %52, %51 : vector<2x32xf32>
    %54 = arith.divf %52, %53 : vector<2x32xf32>
    %55 = vector.extract_strided_slice %13 {offsets = [0, 0], sizes = [2, 32], strides = [1, 1]} : vector<16x32xf32> to vector<2x32xf32>
    %56 = arith.subf %43, %55 : vector<2x32xf32>
    %57 = arith.mulf %56, %54 : vector<2x32xf32>
    %58 = arith.addf %57, %55 : vector<2x32xf32>
    %c0_20 = arith.constant 0 : index
    %c0_21 = arith.constant 0 : index
    %59 = vector.load %arg10[%c0_20, %c0_21] : memref<16x32xf32, #tpu.memory_space<vmem>>, vector<2x32xf32>
    tpu.vector_store %arg10[%c0_20, %c0_21], %58 {strides = array<i32>} : memref<16x32xf32, #tpu.memory_space<vmem>>, vector<2x32xf32>,
    %60 = vector.extract_strided_slice %7 {offsets = [2, 0], sizes = [2, 32], strides = [1, 1]} : vector<16x32xf32> to vector<2x32xf32>
    %61 = vector.broadcast %19 : vector<1x32xf32> to vector<2x32xf32>
    %62 = arith.mulf %61, %43 : vector<2x32xf32>
    %63 = arith.addf %60, %62 : vector<2x32xf32>
    %64 = vector.broadcast %23 : vector<1x32xf32> to vector<2x32xf32>
    %65 = arith.addf %63, %64 : vector<2x32xf32>
    %66 = arith.negf %65 : vector<2x32xf32>
    %67 = math.exp %66 : vector<2x32xf32>
    %cst_22 = arith.constant 1.000000e+00 : f32
    %68 = vector.broadcast %cst_22 : f32 to vector<2x32xf32>
    %69 = arith.addf %68, %67 : vector<2x32xf32>
    %70 = arith.divf %68, %69 : vector<2x32xf32>
    %71 = vector.extract_strided_slice %4 {offsets = [2, 0], sizes = [2, 32], strides = [1, 1]} : vector<16x32xf32> to vector<2x32xf32>
    %72 = arith.subf %43, %71 : vector<2x32xf32>
    %73 = arith.mulf %72, %70 : vector<2x32xf32>
    %74 = vector.extract_strided_slice %4 {offsets = [2, 0], sizes = [2, 32], strides = [1, 1]} : vector<16x32xf32> to vector<2x32xf32>
    %75 = arith.addf %73, %74 : vector<2x32xf32>
    %76 = vector.extract_strided_slice %10 {offsets = [2, 0], sizes = [2, 32], strides = [1, 1]} : vector<16x32xf32> to vector<2x32xf32>
    %77 = vector.broadcast %21 : vector<1x32xf32> to vector<2x32xf32>
    %78 = arith.mulf %77, %75 : vector<2x32xf32>
    %79 = arith.addf %76, %78 : vector<2x32xf32>
    %80 = vector.broadcast %25 : vector<1x32xf32> to vector<2x32xf32>
    %81 = arith.addf %79, %80 : vector<2x32xf32>
    %82 = arith.negf %81 : vector<2x32xf32>
    %83 = math.exp %82 : vector<2x32xf32>
    %cst_23 = arith.constant 1.000000e+00 : f32
    %84 = vector.broadcast %cst_23 : f32 to vector<2x32xf32>
    %85 = arith.addf %84, %83 : vector<2x32xf32>
    %86 = arith.divf %84, %85 : vector<2x32xf32>
    %87 = vector.extract_strided_slice %13 {offsets = [2, 0], sizes = [2, 32], strides = [1, 1]} : vector<16x32xf32> to vector<2x32xf32>
    %88 = arith.subf %75, %87 : vector<2x32xf32>
    %89 = arith.mulf %88, %86 : vector<2x32xf32>
    %90 = arith.addf %89, %87 : vector<2x32xf32>
    %c2 = arith.constant 2 : index
    %c0_24 = arith.constant 0 : index
    %91 = vector.load %arg10[%c2, %c0_24] : memref<16x32xf32, #tpu.memory_space<vmem>>, vector<2x32xf32>
    tpu.vector_store %arg10[%c2, %c0_24], %90 {strides = array<i32>} : memref<16x32xf32, #tpu.memory_space<vmem>>, vector<2x32xf32>,
    %92 = vector.extract_strided_slice %7 {offsets = [4, 0], sizes = [2, 32], strides = [1, 1]} : vector<16x32xf32> to vector<2x32xf32>
    %93 = vector.broadcast %19 : vector<1x32xf32> to vector<2x32xf32>
    %94 = arith.mulf %93, %75 : vector<2x32xf32>
    %95 = arith.addf %92, %94 : vector<2x32xf32>
    %96 = vector.broadcast %23 : vector<1x32xf32> to vector<2x32xf32>
    %97 = arith.addf %95, %96 : vector<2x32xf32>
    %98 = arith.negf %97 : vector<2x32xf32>
    %99 = math.exp %98 : vector<2x32xf32>
    %cst_25 = arith.constant 1.000000e+00 : f32
    %100 = vector.broadcast %cst_25 : f32 to vector<2x32xf32>
    %101 = arith.addf %100, %99 : vector<2x32xf32>
    %102 = arith.divf %100, %101 : vector<2x32xf32>
    %103 = vector.extract_strided_slice %4 {offsets = [4, 0], sizes = [2, 32], strides = [1, 1]} : vector<16x32xf32> to vector<2x32xf32>
    %104 = arith.subf %75, %103 : vector<2x32xf32>
    %105 = arith.mulf %104, %102 : vector<2x32xf32>
    %106 = vector.extract_strided_slice %4 {offsets = [4, 0], sizes = [2, 32], strides = [1, 1]} : vector<16x32xf32> to vector<2x32xf32>
    %107 = arith.addf %105, %106 : vector<2x32xf32>
    %108 = vector.extract_strided_slice %10 {offsets = [4, 0], sizes = [2, 32], strides = [1, 1]} : vector<16x32xf32> to vector<2x32xf32>
    %109 = vector.broadcast %21 : vector<1x32xf32> to vector<2x32xf32>
    %110 = arith.mulf %109, %107 : vector<2x32xf32>
    %111 = arith.addf %108, %110 : vector<2x32xf32>
    %112 = vector.broadcast %25 : vector<1x32xf32> to vector<2x32xf32>
    %113 = arith.addf %111, %112 : vector<2x32xf32>
    %114 = arith.negf %113 : vector<2x32xf32>
    %115 = math.exp %114 : vector<2x32xf32>
    %cst_26 = arith.constant 1.000000e+00 : f32
    %116 = vector.broadcast %cst_26 : f32 to vector<2x32xf32>
    %117 = arith.addf %116, %115 : vector<2x32xf32>
    %118 = arith.divf %116, %117 : vector<2x32xf32>
    %119 = vector.extract_strided_slice %13 {offsets = [4, 0], sizes = [2, 32], strides = [1, 1]} : vector<16x32xf32> to vector<2x32xf32>
    %120 = arith.subf %107, %119 : vector<2x32xf32>
    %121 = arith.mulf %120, %118 : vector<2x32xf32>
    %122 = arith.addf %121, %119 : vector<2x32xf32>
    %c4 = arith.constant 4 : index
    %c0_27 = arith.constant 0 : index
    %123 = vector.load %arg10[%c4, %c0_27] : memref<16x32xf32, #tpu.memory_space<vmem>>, vector<2x32xf32>
    tpu.vector_store %arg10[%c4, %c0_27], %122 {strides = array<i32>} : memref<16x32xf32, #tpu.memory_space<vmem>>, vector<2x32xf32>,
    %124 = vector.extract_strided_slice %7 {offsets = [6, 0], sizes = [2, 32], strides = [1, 1]} : vector<16x32xf32> to vector<2x32xf32>
    %125 = vector.broadcast %19 : vector<1x32xf32> to vector<2x32xf32>
    %126 = arith.mulf %125, %107 : vector<2x32xf32>
    %127 = arith.addf %124, %126 : vector<2x32xf32>
    %128 = vector.broadcast %23 : vector<1x32xf32> to vector<2x32xf32>
    %129 = arith.addf %127, %128 : vector<2x32xf32>
    %130 = arith.negf %129 : vector<2x32xf32>
    %131 = math.exp %130 : vector<2x32xf32>
    %cst_28 = arith.constant 1.000000e+00 : f32
    %132 = vector.broadcast %cst_28 : f32 to vector<2x32xf32>
    %133 = arith.addf %132, %131 : vector<2x32xf32>
    %134 = arith.divf %132, %133 : vector<2x32xf32>
    %135 = vector.extract_strided_slice %4 {offsets = [6, 0], sizes = [2, 32], strides = [1, 1]} : vector<16x32xf32> to vector<2x32xf32>
    %136 = arith.subf %107, %135 : vector<2x32xf32>
    %137 = arith.mulf %136, %134 : vector<2x32xf32>
    %138 = vector.extract_strided_slice %4 {offsets = [6, 0], sizes = [2, 32], strides = [1, 1]} : vector<16x32xf32> to vector<2x32xf32>
    %139 = arith.addf %137, %138 : vector<2x32xf32>
    %140 = vector.extract_strided_slice %10 {offsets = [6, 0], sizes = [2, 32], strides = [1, 1]} : vector<16x32xf32> to vector<2x32xf32>
    %141 = vector.broadcast %21 : vector<1x32xf32> to vector<2x32xf32>
    %142 = arith.mulf %141, %139 : vector<2x32xf32>
    %143 = arith.addf %140, %142 : vector<2x32xf32>
    %144 = vector.broadcast %25 : vector<1x32xf32> to vector<2x32xf32>
    %145 = arith.addf %143, %144 : vector<2x32xf32>
    %146 = arith.negf %145 : vector<2x32xf32>
    %147 = math.exp %146 : vector<2x32xf32>
    %cst_29 = arith.constant 1.000000e+00 : f32
    %148 = vector.broadcast %cst_29 : f32 to vector<2x32xf32>
    %149 = arith.addf %148, %147 : vector<2x32xf32>
    %150 = arith.divf %148, %149 : vector<2x32xf32>
    %151 = vector.extract_strided_slice %13 {offsets = [6, 0], sizes = [2, 32], strides = [1, 1]} : vector<16x32xf32> to vector<2x32xf32>
    %152 = arith.subf %139, %151 : vector<2x32xf32>
    %153 = arith.mulf %152, %150 : vector<2x32xf32>
    %154 = arith.addf %153, %151 : vector<2x32xf32>
    %c6 = arith.constant 6 : index
    %c0_30 = arith.constant 0 : index
    %155 = vector.load %arg10[%c6, %c0_30] : memref<16x32xf32, #tpu.memory_space<vmem>>, vector<2x32xf32>
    tpu.vector_store %arg10[%c6, %c0_30], %154 {strides = array<i32>} : memref<16x32xf32, #tpu.memory_space<vmem>>, vector<2x32xf32>,
    %156 = vector.extract_strided_slice %7 {offsets = [8, 0], sizes = [2, 32], strides = [1, 1]} : vector<16x32xf32> to vector<2x32xf32>
    %157 = vector.broadcast %19 : vector<1x32xf32> to vector<2x32xf32>
    %158 = arith.mulf %157, %139 : vector<2x32xf32>
    %159 = arith.addf %156, %158 : vector<2x32xf32>
    %160 = vector.broadcast %23 : vector<1x32xf32> to vector<2x32xf32>
    %161 = arith.addf %159, %160 : vector<2x32xf32>
    %162 = arith.negf %161 : vector<2x32xf32>
    %163 = math.exp %162 : vector<2x32xf32>
    %cst_31 = arith.constant 1.000000e+00 : f32
    %164 = vector.broadcast %cst_31 : f32 to vector<2x32xf32>
    %165 = arith.addf %164, %163 : vector<2x32xf32>
    %166 = arith.divf %164, %165 : vector<2x32xf32>
    %167 = vector.extract_strided_slice %4 {offsets = [8, 0], sizes = [2, 32], strides = [1, 1]} : vector<16x32xf32> to vector<2x32xf32>
    %168 = arith.subf %139, %167 : vector<2x32xf32>
    %169 = arith.mulf %168, %166 : vector<2x32xf32>
    %170 = vector.extract_strided_slice %4 {offsets = [8, 0], sizes = [2, 32], strides = [1, 1]} : vector<16x32xf32> to vector<2x32xf32>
    %171 = arith.addf %169, %170 : vector<2x32xf32>
    %172 = vector.extract_strided_slice %10 {offsets = [8, 0], sizes = [2, 32], strides = [1, 1]} : vector<16x32xf32> to vector<2x32xf32>
    %173 = vector.broadcast %21 : vector<1x32xf32> to vector<2x32xf32>
    %174 = arith.mulf %173, %171 : vector<2x32xf32>
    %175 = arith.addf %172, %174 : vector<2x32xf32>
    %176 = vector.broadcast %25 : vector<1x32xf32> to vector<2x32xf32>
    %177 = arith.addf %175, %176 : vector<2x32xf32>
    %178 = arith.negf %177 : vector<2x32xf32>
    %179 = math.exp %178 : vector<2x32xf32>
    %cst_32 = arith.constant 1.000000e+00 : f32
    %180 = vector.broadcast %cst_32 : f32 to vector<2x32xf32>
    %181 = arith.addf %180, %179 : vector<2x32xf32>
    %182 = arith.divf %180, %181 : vector<2x32xf32>
    %183 = vector.extract_strided_slice %13 {offsets = [8, 0], sizes = [2, 32], strides = [1, 1]} : vector<16x32xf32> to vector<2x32xf32>
    %184 = arith.subf %171, %183 : vector<2x32xf32>
    %185 = arith.mulf %184, %182 : vector<2x32xf32>
    %186 = arith.addf %185, %183 : vector<2x32xf32>
    %c8 = arith.constant 8 : index
    %c0_33 = arith.constant 0 : index
    %187 = vector.load %arg10[%c8, %c0_33] : memref<16x32xf32, #tpu.memory_space<vmem>>, vector<2x32xf32>
    tpu.vector_store %arg10[%c8, %c0_33], %186 {strides = array<i32>} : memref<16x32xf32, #tpu.memory_space<vmem>>, vector<2x32xf32>,
    %188 = vector.extract_strided_slice %7 {offsets = [10, 0], sizes = [2, 32], strides = [1, 1]} : vector<16x32xf32> to vector<2x32xf32>
    %189 = vector.broadcast %19 : vector<1x32xf32> to vector<2x32xf32>
    %190 = arith.mulf %189, %171 : vector<2x32xf32>
    %191 = arith.addf %188, %190 : vector<2x32xf32>
    %192 = vector.broadcast %23 : vector<1x32xf32> to vector<2x32xf32>
    %193 = arith.addf %191, %192 : vector<2x32xf32>
    %194 = arith.negf %193 : vector<2x32xf32>
    %195 = math.exp %194 : vector<2x32xf32>
    %cst_34 = arith.constant 1.000000e+00 : f32
    %196 = vector.broadcast %cst_34 : f32 to vector<2x32xf32>
    %197 = arith.addf %196, %195 : vector<2x32xf32>
    %198 = arith.divf %196, %197 : vector<2x32xf32>
    %199 = vector.extract_strided_slice %4 {offsets = [10, 0], sizes = [2, 32], strides = [1, 1]} : vector<16x32xf32> to vector<2x32xf32>
    %200 = arith.subf %171, %199 : vector<2x32xf32>
    %201 = arith.mulf %200, %198 : vector<2x32xf32>
    %202 = vector.extract_strided_slice %4 {offsets = [10, 0], sizes = [2, 32], strides = [1, 1]} : vector<16x32xf32> to vector<2x32xf32>
    %203 = arith.addf %201, %202 : vector<2x32xf32>
    %204 = vector.extract_strided_slice %10 {offsets = [10, 0], sizes = [2, 32], strides = [1, 1]} : vector<16x32xf32> to vector<2x32xf32>
    %205 = vector.broadcast %21 : vector<1x32xf32> to vector<2x32xf32>
    %206 = arith.mulf %205, %203 : vector<2x32xf32>
    %207 = arith.addf %204, %206 : vector<2x32xf32>
    %208 = vector.broadcast %25 : vector<1x32xf32> to vector<2x32xf32>
    %209 = arith.addf %207, %208 : vector<2x32xf32>
    %210 = arith.negf %209 : vector<2x32xf32>
    %211 = math.exp %210 : vector<2x32xf32>
    %cst_35 = arith.constant 1.000000e+00 : f32
    %212 = vector.broadcast %cst_35 : f32 to vector<2x32xf32>
    %213 = arith.addf %212, %211 : vector<2x32xf32>
    %214 = arith.divf %212, %213 : vector<2x32xf32>
    %215 = vector.extract_strided_slice %13 {offsets = [10, 0], sizes = [2, 32], strides = [1, 1]} : vector<16x32xf32> to vector<2x32xf32>
    %216 = arith.subf %203, %215 : vector<2x32xf32>
    %217 = arith.mulf %216, %214 : vector<2x32xf32>
    %218 = arith.addf %217, %215 : vector<2x32xf32>
    %c10 = arith.constant 10 : index
    %c0_36 = arith.constant 0 : index
    %219 = vector.load %arg10[%c10, %c0_36] : memref<16x32xf32, #tpu.memory_space<vmem>>, vector<2x32xf32>
    tpu.vector_store %arg10[%c10, %c0_36], %218 {strides = array<i32>} : memref<16x32xf32, #tpu.memory_space<vmem>>, vector<2x32xf32>,
    %220 = vector.extract_strided_slice %7 {offsets = [12, 0], sizes = [2, 32], strides = [1, 1]} : vector<16x32xf32> to vector<2x32xf32>
    %221 = vector.broadcast %19 : vector<1x32xf32> to vector<2x32xf32>
    %222 = arith.mulf %221, %203 : vector<2x32xf32>
    %223 = arith.addf %220, %222 : vector<2x32xf32>
    %224 = vector.broadcast %23 : vector<1x32xf32> to vector<2x32xf32>
    %225 = arith.addf %223, %224 : vector<2x32xf32>
    %226 = arith.negf %225 : vector<2x32xf32>
    %227 = math.exp %226 : vector<2x32xf32>
    %cst_37 = arith.constant 1.000000e+00 : f32
    %228 = vector.broadcast %cst_37 : f32 to vector<2x32xf32>
    %229 = arith.addf %228, %227 : vector<2x32xf32>
    %230 = arith.divf %228, %229 : vector<2x32xf32>
    %231 = vector.extract_strided_slice %4 {offsets = [12, 0], sizes = [2, 32], strides = [1, 1]} : vector<16x32xf32> to vector<2x32xf32>
    %232 = arith.subf %203, %231 : vector<2x32xf32>
    %233 = arith.mulf %232, %230 : vector<2x32xf32>
    %234 = vector.extract_strided_slice %4 {offsets = [12, 0], sizes = [2, 32], strides = [1, 1]} : vector<16x32xf32> to vector<2x32xf32>
    %235 = arith.addf %233, %234 : vector<2x32xf32>
    %236 = vector.extract_strided_slice %10 {offsets = [12, 0], sizes = [2, 32], strides = [1, 1]} : vector<16x32xf32> to vector<2x32xf32>
    %237 = vector.broadcast %21 : vector<1x32xf32> to vector<2x32xf32>
    %238 = arith.mulf %237, %235 : vector<2x32xf32>
    %239 = arith.addf %236, %238 : vector<2x32xf32>
    %240 = vector.broadcast %25 : vector<1x32xf32> to vector<2x32xf32>
    %241 = arith.addf %239, %240 : vector<2x32xf32>
    %242 = arith.negf %241 : vector<2x32xf32>
    %243 = math.exp %242 : vector<2x32xf32>
    %cst_38 = arith.constant 1.000000e+00 : f32
    %244 = vector.broadcast %cst_38 : f32 to vector<2x32xf32>
    %245 = arith.addf %244, %243 : vector<2x32xf32>
    %246 = arith.divf %244, %245 : vector<2x32xf32>
    %247 = vector.extract_strided_slice %13 {offsets = [12, 0], sizes = [2, 32], strides = [1, 1]} : vector<16x32xf32> to vector<2x32xf32>
    %248 = arith.subf %235, %247 : vector<2x32xf32>
    %249 = arith.mulf %248, %246 : vector<2x32xf32>
    %250 = arith.addf %249, %247 : vector<2x32xf32>
    %c12 = arith.constant 12 : index
    %c0_39 = arith.constant 0 : index
    %251 = vector.load %arg10[%c12, %c0_39] : memref<16x32xf32, #tpu.memory_space<vmem>>, vector<2x32xf32>
    tpu.vector_store %arg10[%c12, %c0_39], %250 {strides = array<i32>} : memref<16x32xf32, #tpu.memory_space<vmem>>, vector<2x32xf32>,
    %252 = vector.extract_strided_slice %7 {offsets = [14, 0], sizes = [2, 32], strides = [1, 1]} : vector<16x32xf32> to vector<2x32xf32>
    %253 = vector.broadcast %19 : vector<1x32xf32> to vector<2x32xf32>
    %254 = arith.mulf %253, %235 : vector<2x32xf32>
    %255 = arith.addf %252, %254 : vector<2x32xf32>
    %256 = vector.broadcast %23 : vector<1x32xf32> to vector<2x32xf32>
    %257 = arith.addf %255, %256 : vector<2x32xf32>
    %258 = arith.negf %257 : vector<2x32xf32>
    %259 = math.exp %258 : vector<2x32xf32>
    %cst_40 = arith.constant 1.000000e+00 : f32
    %260 = vector.broadcast %cst_40 : f32 to vector<2x32xf32>
    %261 = arith.addf %260, %259 : vector<2x32xf32>
    %262 = arith.divf %260, %261 : vector<2x32xf32>
    %263 = vector.extract_strided_slice %4 {offsets = [14, 0], sizes = [2, 32], strides = [1, 1]} : vector<16x32xf32> to vector<2x32xf32>
    %264 = arith.subf %235, %263 : vector<2x32xf32>
    %265 = arith.mulf %264, %262 : vector<2x32xf32>
    %266 = vector.extract_strided_slice %4 {offsets = [14, 0], sizes = [2, 32], strides = [1, 1]} : vector<16x32xf32> to vector<2x32xf32>
    %267 = arith.addf %265, %266 : vector<2x32xf32>
    %268 = vector.extract_strided_slice %10 {offsets = [14, 0], sizes = [2, 32], strides = [1, 1]} : vector<16x32xf32> to vector<2x32xf32>
    %269 = vector.broadcast %21 : vector<1x32xf32> to vector<2x32xf32>
    %270 = arith.mulf %269, %267 : vector<2x32xf32>
    %271 = arith.addf %268, %270 : vector<2x32xf32>
    %272 = vector.broadcast %25 : vector<1x32xf32> to vector<2x32xf32>
    %273 = arith.addf %271, %272 : vector<2x32xf32>
    %274 = arith.negf %273 : vector<2x32xf32>
    %275 = math.exp %274 : vector<2x32xf32>
    %cst_41 = arith.constant 1.000000e+00 : f32
    %276 = vector.broadcast %cst_41 : f32 to vector<2x32xf32>
    %277 = arith.addf %276, %275 : vector<2x32xf32>
    %278 = arith.divf %276, %277 : vector<2x32xf32>
    %279 = vector.extract_strided_slice %13 {offsets = [14, 0], sizes = [2, 32], strides = [1, 1]} : vector<16x32xf32> to vector<2x32xf32>
    %280 = arith.subf %267, %279 : vector<2x32xf32>
    %281 = arith.mulf %280, %278 : vector<2x32xf32>
    %282 = arith.addf %281, %279 : vector<2x32xf32>
    %c14 = arith.constant 14 : index
    %c0_42 = arith.constant 0 : index
    %283 = vector.load %arg10[%c14, %c0_42] : memref<16x32xf32, #tpu.memory_space<vmem>>, vector<2x32xf32>
    tpu.vector_store %arg10[%c14, %c0_42], %282 {strides = array<i32>} : memref<16x32xf32, #tpu.memory_space<vmem>>, vector<2x32xf32>,
    %c0_43 = arith.constant 0 : index
    %c0_44 = arith.constant 0 : index
    %c0_45 = arith.constant 0 : index
    %284 = vector.load %arg9[%c0_43, %c0_44, %c0_45] : memref<3x2x32xf32, #tpu.memory_space<vmem>>, vector<1x2x32xf32>
    %285 = vector.shape_cast %284 : vector<1x2x32xf32> to vector<2x32xf32>
    %286 = vector.shape_cast %267 : vector<2x32xf32> to vector<1x2x32xf32>
    tpu.vector_store %arg9[%c0_43, %c0_44, %c0_45], %286 {strides = array<i32>} : memref<3x2x32xf32, #tpu.memory_space<vmem>>, vector<1x2x32xf32>,
    %c0_46 = arith.constant 0 : index
    %c0_47 = arith.constant 0 : index
    %287 = vector.load %arg10[%c0_46, %c0_47] : memref<16x32xf32, #tpu.memory_space<vmem>>, vector<16x32xf32>
    %c0_48 = arith.constant 0 : index
    %c0_49 = arith.constant 0 : index
    %c0_50 = arith.constant 0 : index
    %c0_51 = arith.constant 0 : index
    %288 = vector.load %arg2[%c0_48, %c0_49, %c0_50, %c0_51] : memref<2x3x32x32xf32, #tpu.memory_space<vmem>>, vector<1x3x32x32xf32>
    %289 = vector.shape_cast %288 : vector<1x3x32x32xf32> to vector<3x32x32xf32>
    %290 = vector.extract_strided_slice %289 {offsets = [0, 0, 0], sizes = [1, 32, 32], strides = [1, 1, 1]} : vector<3x32x32xf32> to vector<1x32x32xf32>
    %291 = vector.shape_cast %290 : vector<1x32x32xf32> to vector<32x32xf32>
    %cst_52 = arith.constant dense<0.000000e+00> : vector<16x32xf32>
    %292 = tpu.matmul %287, %291, %cst_52 {dimension_numbers = #tpu.dot_dimension_numbers<[1], [0], [0], [1], [0, 0, 1, 1], [], []>} : vector<16x32xf32>, vector<32x32xf32>, vector<16x32xf32> -> vector<16x32xf32>
    %293 = vector.extract_strided_slice %289 {offsets = [1, 0, 0], sizes = [1, 32, 32], strides = [1, 1, 1]} : vector<3x32x32xf32> to vector<1x32x32xf32>
    %294 = vector.shape_cast %293 : vector<1x32x32xf32> to vector<32x32xf32>
    %cst_53 = arith.constant dense<0.000000e+00> : vector<16x32xf32>
    %295 = tpu.matmul %287, %294, %cst_53 {dimension_numbers = #tpu.dot_dimension_numbers<[1], [0], [0], [1], [0, 0, 1, 1], [], []>} : vector<16x32xf32>, vector<32x32xf32>, vector<16x32xf32> -> vector<16x32xf32>
    %296 = vector.extract_strided_slice %289 {offsets = [2, 0, 0], sizes = [1, 32, 32], strides = [1, 1, 1]} : vector<3x32x32xf32> to vector<1x32x32xf32>
    %297 = vector.shape_cast %296 : vector<1x32x32xf32> to vector<32x32xf32>
    %cst_54 = arith.constant dense<0.000000e+00> : vector<16x32xf32>
    %298 = tpu.matmul %287, %297, %cst_54 {dimension_numbers = #tpu.dot_dimension_numbers<[1], [0], [0], [1], [0, 0, 1, 1], [], []>} : vector<16x32xf32>, vector<32x32xf32>, vector<16x32xf32> -> vector<16x32xf32>
    %c1 = arith.constant 1 : index
    %c0_55 = arith.constant 0 : index
    %c0_56 = arith.constant 0 : index
    %c0_57 = arith.constant 0 : index
    %299 = vector.load %arg3[%c1, %c0_55, %c0_56, %c0_57] : memref<3x2x1x32xf32, #tpu.memory_space<vmem>>, vector<1x2x1x32xf32>
    %300 = vector.shape_cast %299 : vector<1x2x1x32xf32> to vector<2x1x32xf32>
    %c1_58 = arith.constant 1 : index
    %c0_59 = arith.constant 0 : index
    %c0_60 = arith.constant 0 : index
    %c0_61 = arith.constant 0 : index
    %301 = vector.load %arg4[%c1_58, %c0_59, %c0_60, %c0_61] : memref<3x2x1x32xf32, #tpu.memory_space<vmem>>, vector<1x2x1x32xf32>
    %302 = vector.shape_cast %301 : vector<1x2x1x32xf32> to vector<2x1x32xf32>
    %303 = vector.extract_strided_slice %300 {offsets = [0, 0, 0], sizes = [1, 1, 32], strides = [1, 1, 1]} : vector<2x1x32xf32> to vector<1x1x32xf32>
    %304 = vector.shape_cast %303 : vector<1x1x32xf32> to vector<1x32xf32>
    %305 = vector.extract_strided_slice %300 {offsets = [1, 0, 0], sizes = [1, 1, 32], strides = [1, 1, 1]} : vector<2x1x32xf32> to vector<1x1x32xf32>
    %306 = vector.shape_cast %305 : vector<1x1x32xf32> to vector<1x32xf32>
    %307 = vector.extract_strided_slice %302 {offsets = [0, 0, 0], sizes = [1, 1, 32], strides = [1, 1, 1]} : vector<2x1x32xf32> to vector<1x1x32xf32>
    %308 = vector.shape_cast %307 : vector<1x1x32xf32> to vector<1x32xf32>
    %309 = vector.extract_strided_slice %302 {offsets = [1, 0, 0], sizes = [1, 1, 32], strides = [1, 1, 1]} : vector<2x1x32xf32> to vector<1x1x32xf32>
    %310 = vector.shape_cast %309 : vector<1x1x32xf32> to vector<1x32xf32>
    %c1_62 = arith.constant 1 : index
    %c0_63 = arith.constant 0 : index
    %c0_64 = arith.constant 0 : index
    %311 = vector.load %arg5[%c1_62, %c0_63, %c0_64] : memref<3x2x32xf32, #tpu.memory_space<vmem>>, vector<1x2x32xf32>
    %312 = vector.shape_cast %311 : vector<1x2x32xf32> to vector<2x32xf32>
    %313 = vector.extract_strided_slice %295 {offsets = [0, 0], sizes = [2, 32], strides = [1, 1]} : vector<16x32xf32> to vector<2x32xf32>
    %314 = vector.broadcast %304 : vector<1x32xf32> to vector<2x32xf32>
    %315 = arith.mulf %314, %312 : vector<2x32xf32>
    %316 = arith.addf %313, %315 : vector<2x32xf32>
    %317 = vector.broadcast %308 : vector<1x32xf32> to vector<2x32xf32>
    %318 = arith.addf %316, %317 : vector<2x32xf32>
    %319 = arith.negf %318 : vector<2x32xf32>
    %320 = math.exp %319 : vector<2x32xf32>
    %cst_65 = arith.constant 1.000000e+00 : f32
    %321 = vector.broadcast %cst_65 : f32 to vector<2x32xf32>
    %322 = arith.addf %321, %320 : vector<2x32xf32>
    %323 = arith.divf %321, %322 : vector<2x32xf32>
    %324 = vector.extract_strided_slice %292 {offsets = [0, 0], sizes = [2, 32], strides = [1, 1]} : vector<16x32xf32> to vector<2x32xf32>
    %325 = arith.subf %312, %324 : vector<2x32xf32>
    %326 = arith.mulf %325, %323 : vector<2x32xf32>
    %327 = vector.extract_strided_slice %292 {offsets = [0, 0], sizes = [2, 32], strides = [1, 1]} : vector<16x32xf32> to vector<2x32xf32>
    %328 = arith.addf %326, %327 : vector<2x32xf32>
    %329 = vector.extract_strided_slice %298 {offsets = [0, 0], sizes = [2, 32], strides = [1, 1]} : vector<16x32xf32> to vector<2x32xf32>
    %330 = vector.broadcast %306 : vector<1x32xf32> to vector<2x32xf32>
    %331 = arith.mulf %330, %328 : vector<2x32xf32>
    %332 = arith.addf %329, %331 : vector<2x32xf32>
    %333 = vector.broadcast %310 : vector<1x32xf32> to vector<2x32xf32>
    %334 = arith.addf %332, %333 : vector<2x32xf32>
    %335 = arith.negf %334 : vector<2x32xf32>
    %336 = math.exp %335 : vector<2x32xf32>
    %cst_66 = arith.constant 1.000000e+00 : f32
    %337 = vector.broadcast %cst_66 : f32 to vector<2x32xf32>
    %338 = arith.addf %337, %336 : vector<2x32xf32>
    %339 = arith.divf %337, %338 : vector<2x32xf32>
    %340 = vector.extract_strided_slice %287 {offsets = [0, 0], sizes = [2, 32], strides = [1, 1]} : vector<16x32xf32> to vector<2x32xf32>
    %341 = arith.subf %328, %340 : vector<2x32xf32>
    %342 = arith.mulf %341, %339 : vector<2x32xf32>
    %343 = arith.addf %342, %340 : vector<2x32xf32>
    %c0_67 = arith.constant 0 : index
    %c0_68 = arith.constant 0 : index
    %344 = vector.load %arg10[%c0_67, %c0_68] : memref<16x32xf32, #tpu.memory_space<vmem>>, vector<2x32xf32>
    tpu.vector_store %arg10[%c0_67, %c0_68], %343 {strides = array<i32>} : memref<16x32xf32, #tpu.memory_space<vmem>>, vector<2x32xf32>,
    %345 = vector.extract_strided_slice %295 {offsets = [2, 0], sizes = [2, 32], strides = [1, 1]} : vector<16x32xf32> to vector<2x32xf32>
    %346 = vector.broadcast %304 : vector<1x32xf32> to vector<2x32xf32>
    %347 = arith.mulf %346, %328 : vector<2x32xf32>
    %348 = arith.addf %345, %347 : vector<2x32xf32>
    %349 = vector.broadcast %308 : vector<1x32xf32> to vector<2x32xf32>
    %350 = arith.addf %348, %349 : vector<2x32xf32>
    %351 = arith.negf %350 : vector<2x32xf32>
    %352 = math.exp %351 : vector<2x32xf32>
    %cst_69 = arith.constant 1.000000e+00 : f32
    %353 = vector.broadcast %cst_69 : f32 to vector<2x32xf32>
    %354 = arith.addf %353, %352 : vector<2x32xf32>
    %355 = arith.divf %353, %354 : vector<2x32xf32>
    %356 = vector.extract_strided_slice %292 {offsets = [2, 0], sizes = [2, 32], strides = [1, 1]} : vector<16x32xf32> to vector<2x32xf32>
    %357 = arith.subf %328, %356 : vector<2x32xf32>
    %358 = arith.mulf %357, %355 : vector<2x32xf32>
    %359 = vector.extract_strided_slice %292 {offsets = [2, 0], sizes = [2, 32], strides = [1, 1]} : vector<16x32xf32> to vector<2x32xf32>
    %360 = arith.addf %358, %359 : vector<2x32xf32>
    %361 = vector.extract_strided_slice %298 {offsets = [2, 0], sizes = [2, 32], strides = [1, 1]} : vector<16x32xf32> to vector<2x32xf32>
    %362 = vector.broadcast %306 : vector<1x32xf32> to vector<2x32xf32>
    %363 = arith.mulf %362, %360 : vector<2x32xf32>
    %364 = arith.addf %361, %363 : vector<2x32xf32>
    %365 = vector.broadcast %310 : vector<1x32xf32> to vector<2x32xf32>
    %366 = arith.addf %364, %365 : vector<2x32xf32>
    %367 = arith.negf %366 : vector<2x32xf32>
    %368 = math.exp %367 : vector<2x32xf32>
    %cst_70 = arith.constant 1.000000e+00 : f32
    %369 = vector.broadcast %cst_70 : f32 to vector<2x32xf32>
    %370 = arith.addf %369, %368 : vector<2x32xf32>
    %371 = arith.divf %369, %370 : vector<2x32xf32>
    %372 = vector.extract_strided_slice %287 {offsets = [2, 0], sizes = [2, 32], strides = [1, 1]} : vector<16x32xf32> to vector<2x32xf32>
    %373 = arith.subf %360, %372 : vector<2x32xf32>
    %374 = arith.mulf %373, %371 : vector<2x32xf32>
    %375 = arith.addf %374, %372 : vector<2x32xf32>
    %c2_71 = arith.constant 2 : index
    %c0_72 = arith.constant 0 : index
    %376 = vector.load %arg10[%c2_71, %c0_72] : memref<16x32xf32, #tpu.memory_space<vmem>>, vector<2x32xf32>
    tpu.vector_store %arg10[%c2_71, %c0_72], %375 {strides = array<i32>} : memref<16x32xf32, #tpu.memory_space<vmem>>, vector<2x32xf32>,
    %377 = vector.extract_strided_slice %295 {offsets = [4, 0], sizes = [2, 32], strides = [1, 1]} : vector<16x32xf32> to vector<2x32xf32>
    %378 = vector.broadcast %304 : vector<1x32xf32> to vector<2x32xf32>
    %379 = arith.mulf %378, %360 : vector<2x32xf32>
    %380 = arith.addf %377, %379 : vector<2x32xf32>
    %381 = vector.broadcast %308 : vector<1x32xf32> to vector<2x32xf32>
    %382 = arith.addf %380, %381 : vector<2x32xf32>
    %383 = arith.negf %382 : vector<2x32xf32>
    %384 = math.exp %383 : vector<2x32xf32>
    %cst_73 = arith.constant 1.000000e+00 : f32
    %385 = vector.broadcast %cst_73 : f32 to vector<2x32xf32>
    %386 = arith.addf %385, %384 : vector<2x32xf32>
    %387 = arith.divf %385, %386 : vector<2x32xf32>
    %388 = vector.extract_strided_slice %292 {offsets = [4, 0], sizes = [2, 32], strides = [1, 1]} : vector<16x32xf32> to vector<2x32xf32>
    %389 = arith.subf %360, %388 : vector<2x32xf32>
    %390 = arith.mulf %389, %387 : vector<2x32xf32>
    %391 = vector.extract_strided_slice %292 {offsets = [4, 0], sizes = [2, 32], strides = [1, 1]} : vector<16x32xf32> to vector<2x32xf32>
    %392 = arith.addf %390, %391 : vector<2x32xf32>
    %393 = vector.extract_strided_slice %298 {offsets = [4, 0], sizes = [2, 32], strides = [1, 1]} : vector<16x32xf32> to vector<2x32xf32>
    %394 = vector.broadcast %306 : vector<1x32xf32> to vector<2x32xf32>
    %395 = arith.mulf %394, %392 : vector<2x32xf32>
    %396 = arith.addf %393, %395 : vector<2x32xf32>
    %397 = vector.broadcast %310 : vector<1x32xf32> to vector<2x32xf32>
    %398 = arith.addf %396, %397 : vector<2x32xf32>
    %399 = arith.negf %398 : vector<2x32xf32>
    %400 = math.exp %399 : vector<2x32xf32>
    %cst_74 = arith.constant 1.000000e+00 : f32
    %401 = vector.broadcast %cst_74 : f32 to vector<2x32xf32>
    %402 = arith.addf %401, %400 : vector<2x32xf32>
    %403 = arith.divf %401, %402 : vector<2x32xf32>
    %404 = vector.extract_strided_slice %287 {offsets = [4, 0], sizes = [2, 32], strides = [1, 1]} : vector<16x32xf32> to vector<2x32xf32>
    %405 = arith.subf %392, %404 : vector<2x32xf32>
    %406 = arith.mulf %405, %403 : vector<2x32xf32>
    %407 = arith.addf %406, %404 : vector<2x32xf32>
    %c4_75 = arith.constant 4 : index
    %c0_76 = arith.constant 0 : index
    %408 = vector.load %arg10[%c4_75, %c0_76] : memref<16x32xf32, #tpu.memory_space<vmem>>, vector<2x32xf32>
    tpu.vector_store %arg10[%c4_75, %c0_76], %407 {strides = array<i32>} : memref<16x32xf32, #tpu.memory_space<vmem>>, vector<2x32xf32>,
    %409 = vector.extract_strided_slice %295 {offsets = [6, 0], sizes = [2, 32], strides = [1, 1]} : vector<16x32xf32> to vector<2x32xf32>
    %410 = vector.broadcast %304 : vector<1x32xf32> to vector<2x32xf32>
    %411 = arith.mulf %410, %392 : vector<2x32xf32>
    %412 = arith.addf %409, %411 : vector<2x32xf32>
    %413 = vector.broadcast %308 : vector<1x32xf32> to vector<2x32xf32>
    %414 = arith.addf %412, %413 : vector<2x32xf32>
    %415 = arith.negf %414 : vector<2x32xf32>
    %416 = math.exp %415 : vector<2x32xf32>
    %cst_77 = arith.constant 1.000000e+00 : f32
    %417 = vector.broadcast %cst_77 : f32 to vector<2x32xf32>
    %418 = arith.addf %417, %416 : vector<2x32xf32>
    %419 = arith.divf %417, %418 : vector<2x32xf32>
    %420 = vector.extract_strided_slice %292 {offsets = [6, 0], sizes = [2, 32], strides = [1, 1]} : vector<16x32xf32> to vector<2x32xf32>
    %421 = arith.subf %392, %420 : vector<2x32xf32>
    %422 = arith.mulf %421, %419 : vector<2x32xf32>
    %423 = vector.extract_strided_slice %292 {offsets = [6, 0], sizes = [2, 32], strides = [1, 1]} : vector<16x32xf32> to vector<2x32xf32>
    %424 = arith.addf %422, %423 : vector<2x32xf32>
    %425 = vector.extract_strided_slice %298 {offsets = [6, 0], sizes = [2, 32], strides = [1, 1]} : vector<16x32xf32> to vector<2x32xf32>
    %426 = vector.broadcast %306 : vector<1x32xf32> to vector<2x32xf32>
    %427 = arith.mulf %426, %424 : vector<2x32xf32>
    %428 = arith.addf %425, %427 : vector<2x32xf32>
    %429 = vector.broadcast %310 : vector<1x32xf32> to vector<2x32xf32>
    %430 = arith.addf %428, %429 : vector<2x32xf32>
    %431 = arith.negf %430 : vector<2x32xf32>
    %432 = math.exp %431 : vector<2x32xf32>
    %cst_78 = arith.constant 1.000000e+00 : f32
    %433 = vector.broadcast %cst_78 : f32 to vector<2x32xf32>
    %434 = arith.addf %433, %432 : vector<2x32xf32>
    %435 = arith.divf %433, %434 : vector<2x32xf32>
    %436 = vector.extract_strided_slice %287 {offsets = [6, 0], sizes = [2, 32], strides = [1, 1]} : vector<16x32xf32> to vector<2x32xf32>
    %437 = arith.subf %424, %436 : vector<2x32xf32>
    %438 = arith.mulf %437, %435 : vector<2x32xf32>
    %439 = arith.addf %438, %436 : vector<2x32xf32>
    %c6_79 = arith.constant 6 : index
    %c0_80 = arith.constant 0 : index
    %440 = vector.load %arg10[%c6_79, %c0_80] : memref<16x32xf32, #tpu.memory_space<vmem>>, vector<2x32xf32>
    tpu.vector_store %arg10[%c6_79, %c0_80], %439 {strides = array<i32>} : memref<16x32xf32, #tpu.memory_space<vmem>>, vector<2x32xf32>,
    %441 = vector.extract_strided_slice %295 {offsets = [8, 0], sizes = [2, 32], strides = [1, 1]} : vector<16x32xf32> to vector<2x32xf32>
    %442 = vector.broadcast %304 : vector<1x32xf32> to vector<2x32xf32>
    %443 = arith.mulf %442, %424 : vector<2x32xf32>
    %444 = arith.addf %441, %443 : vector<2x32xf32>
    %445 = vector.broadcast %308 : vector<1x32xf32> to vector<2x32xf32>
    %446 = arith.addf %444, %445 : vector<2x32xf32>
    %447 = arith.negf %446 : vector<2x32xf32>
    %448 = math.exp %447 : vector<2x32xf32>
    %cst_81 = arith.constant 1.000000e+00 : f32
    %449 = vector.broadcast %cst_81 : f32 to vector<2x32xf32>
    %450 = arith.addf %449, %448 : vector<2x32xf32>
    %451 = arith.divf %449, %450 : vector<2x32xf32>
    %452 = vector.extract_strided_slice %292 {offsets = [8, 0], sizes = [2, 32], strides = [1, 1]} : vector<16x32xf32> to vector<2x32xf32>
    %453 = arith.subf %424, %452 : vector<2x32xf32>
    %454 = arith.mulf %453, %451 : vector<2x32xf32>
    %455 = vector.extract_strided_slice %292 {offsets = [8, 0], sizes = [2, 32], strides = [1, 1]} : vector<16x32xf32> to vector<2x32xf32>
    %456 = arith.addf %454, %455 : vector<2x32xf32>
    %457 = vector.extract_strided_slice %298 {offsets = [8, 0], sizes = [2, 32], strides = [1, 1]} : vector<16x32xf32> to vector<2x32xf32>
    %458 = vector.broadcast %306 : vector<1x32xf32> to vector<2x32xf32>
    %459 = arith.mulf %458, %456 : vector<2x32xf32>
    %460 = arith.addf %457, %459 : vector<2x32xf32>
    %461 = vector.broadcast %310 : vector<1x32xf32> to vector<2x32xf32>
    %462 = arith.addf %460, %461 : vector<2x32xf32>
    %463 = arith.negf %462 : vector<2x32xf32>
    %464 = math.exp %463 : vector<2x32xf32>
    %cst_82 = arith.constant 1.000000e+00 : f32
    %465 = vector.broadcast %cst_82 : f32 to vector<2x32xf32>
    %466 = arith.addf %465, %464 : vector<2x32xf32>
    %467 = arith.divf %465, %466 : vector<2x32xf32>
    %468 = vector.extract_strided_slice %287 {offsets = [8, 0], sizes = [2, 32], strides = [1, 1]} : vector<16x32xf32> to vector<2x32xf32>
    %469 = arith.subf %456, %468 : vector<2x32xf32>
    %470 = arith.mulf %469, %467 : vector<2x32xf32>
    %471 = arith.addf %470, %468 : vector<2x32xf32>
    %c8_83 = arith.constant 8 : index
    %c0_84 = arith.constant 0 : index
    %472 = vector.load %arg10[%c8_83, %c0_84] : memref<16x32xf32, #tpu.memory_space<vmem>>, vector<2x32xf32>
    tpu.vector_store %arg10[%c8_83, %c0_84], %471 {strides = array<i32>} : memref<16x32xf32, #tpu.memory_space<vmem>>, vector<2x32xf32>,
    %473 = vector.extract_strided_slice %295 {offsets = [10, 0], sizes = [2, 32], strides = [1, 1]} : vector<16x32xf32> to vector<2x32xf32>
    %474 = vector.broadcast %304 : vector<1x32xf32> to vector<2x32xf32>
    %475 = arith.mulf %474, %456 : vector<2x32xf32>
    %476 = arith.addf %473, %475 : vector<2x32xf32>
    %477 = vector.broadcast %308 : vector<1x32xf32> to vector<2x32xf32>
    %478 = arith.addf %476, %477 : vector<2x32xf32>
    %479 = arith.negf %478 : vector<2x32xf32>
    %480 = math.exp %479 : vector<2x32xf32>
    %cst_85 = arith.constant 1.000000e+00 : f32
    %481 = vector.broadcast %cst_85 : f32 to vector<2x32xf32>
    %482 = arith.addf %481, %480 : vector<2x32xf32>
    %483 = arith.divf %481, %482 : vector<2x32xf32>
    %484 = vector.extract_strided_slice %292 {offsets = [10, 0], sizes = [2, 32], strides = [1, 1]} : vector<16x32xf32> to vector<2x32xf32>
    %485 = arith.subf %456, %484 : vector<2x32xf32>
    %486 = arith.mulf %485, %483 : vector<2x32xf32>
    %487 = vector.extract_strided_slice %292 {offsets = [10, 0], sizes = [2, 32], strides = [1, 1]} : vector<16x32xf32> to vector<2x32xf32>
    %488 = arith.addf %486, %487 : vector<2x32xf32>
    %489 = vector.extract_strided_slice %298 {offsets = [10, 0], sizes = [2, 32], strides = [1, 1]} : vector<16x32xf32> to vector<2x32xf32>
    %490 = vector.broadcast %306 : vector<1x32xf32> to vector<2x32xf32>
    %491 = arith.mulf %490, %488 : vector<2x32xf32>
    %492 = arith.addf %489, %491 : vector<2x32xf32>
    %493 = vector.broadcast %310 : vector<1x32xf32> to vector<2x32xf32>
    %494 = arith.addf %492, %493 : vector<2x32xf32>
    %495 = arith.negf %494 : vector<2x32xf32>
    %496 = math.exp %495 : vector<2x32xf32>
    %cst_86 = arith.constant 1.000000e+00 : f32
    %497 = vector.broadcast %cst_86 : f32 to vector<2x32xf32>
    %498 = arith.addf %497, %496 : vector<2x32xf32>
    %499 = arith.divf %497, %498 : vector<2x32xf32>
    %500 = vector.extract_strided_slice %287 {offsets = [10, 0], sizes = [2, 32], strides = [1, 1]} : vector<16x32xf32> to vector<2x32xf32>
    %501 = arith.subf %488, %500 : vector<2x32xf32>
    %502 = arith.mulf %501, %499 : vector<2x32xf32>
    %503 = arith.addf %502, %500 : vector<2x32xf32>
    %c10_87 = arith.constant 10 : index
    %c0_88 = arith.constant 0 : index
    %504 = vector.load %arg10[%c10_87, %c0_88] : memref<16x32xf32, #tpu.memory_space<vmem>>, vector<2x32xf32>
    tpu.vector_store %arg10[%c10_87, %c0_88], %503 {strides = array<i32>} : memref<16x32xf32, #tpu.memory_space<vmem>>, vector<2x32xf32>,
    %505 = vector.extract_strided_slice %295 {offsets = [12, 0], sizes = [2, 32], strides = [1, 1]} : vector<16x32xf32> to vector<2x32xf32>
    %506 = vector.broadcast %304 : vector<1x32xf32> to vector<2x32xf32>
    %507 = arith.mulf %506, %488 : vector<2x32xf32>
    %508 = arith.addf %505, %507 : vector<2x32xf32>
    %509 = vector.broadcast %308 : vector<1x32xf32> to vector<2x32xf32>
    %510 = arith.addf %508, %509 : vector<2x32xf32>
    %511 = arith.negf %510 : vector<2x32xf32>
    %512 = math.exp %511 : vector<2x32xf32>
    %cst_89 = arith.constant 1.000000e+00 : f32
    %513 = vector.broadcast %cst_89 : f32 to vector<2x32xf32>
    %514 = arith.addf %513, %512 : vector<2x32xf32>
    %515 = arith.divf %513, %514 : vector<2x32xf32>
    %516 = vector.extract_strided_slice %292 {offsets = [12, 0], sizes = [2, 32], strides = [1, 1]} : vector<16x32xf32> to vector<2x32xf32>
    %517 = arith.subf %488, %516 : vector<2x32xf32>
    %518 = arith.mulf %517, %515 : vector<2x32xf32>
    %519 = vector.extract_strided_slice %292 {offsets = [12, 0], sizes = [2, 32], strides = [1, 1]} : vector<16x32xf32> to vector<2x32xf32>
    %520 = arith.addf %518, %519 : vector<2x32xf32>
    %521 = vector.extract_strided_slice %298 {offsets = [12, 0], sizes = [2, 32], strides = [1, 1]} : vector<16x32xf32> to vector<2x32xf32>
    %522 = vector.broadcast %306 : vector<1x32xf32> to vector<2x32xf32>
    %523 = arith.mulf %522, %520 : vector<2x32xf32>
    %524 = arith.addf %521, %523 : vector<2x32xf32>
    %525 = vector.broadcast %310 : vector<1x32xf32> to vector<2x32xf32>
    %526 = arith.addf %524, %525 : vector<2x32xf32>
    %527 = arith.negf %526 : vector<2x32xf32>
    %528 = math.exp %527 : vector<2x32xf32>
    %cst_90 = arith.constant 1.000000e+00 : f32
    %529 = vector.broadcast %cst_90 : f32 to vector<2x32xf32>
    %530 = arith.addf %529, %528 : vector<2x32xf32>
    %531 = arith.divf %529, %530 : vector<2x32xf32>
    %532 = vector.extract_strided_slice %287 {offsets = [12, 0], sizes = [2, 32], strides = [1, 1]} : vector<16x32xf32> to vector<2x32xf32>
    %533 = arith.subf %520, %532 : vector<2x32xf32>
    %534 = arith.mulf %533, %531 : vector<2x32xf32>
    %535 = arith.addf %534, %532 : vector<2x32xf32>
    %c12_91 = arith.constant 12 : index
    %c0_92 = arith.constant 0 : index
    %536 = vector.load %arg10[%c12_91, %c0_92] : memref<16x32xf32, #tpu.memory_space<vmem>>, vector<2x32xf32>
    tpu.vector_store %arg10[%c12_91, %c0_92], %535 {strides = array<i32>} : memref<16x32xf32, #tpu.memory_space<vmem>>, vector<2x32xf32>,
    %537 = vector.extract_strided_slice %295 {offsets = [14, 0], sizes = [2, 32], strides = [1, 1]} : vector<16x32xf32> to vector<2x32xf32>
    %538 = vector.broadcast %304 : vector<1x32xf32> to vector<2x32xf32>
    %539 = arith.mulf %538, %520 : vector<2x32xf32>
    %540 = arith.addf %537, %539 : vector<2x32xf32>
    %541 = vector.broadcast %308 : vector<1x32xf32> to vector<2x32xf32>
    %542 = arith.addf %540, %541 : vector<2x32xf32>
    %543 = arith.negf %542 : vector<2x32xf32>
    %544 = math.exp %543 : vector<2x32xf32>
    %cst_93 = arith.constant 1.000000e+00 : f32
    %545 = vector.broadcast %cst_93 : f32 to vector<2x32xf32>
    %546 = arith.addf %545, %544 : vector<2x32xf32>
    %547 = arith.divf %545, %546 : vector<2x32xf32>
    %548 = vector.extract_strided_slice %292 {offsets = [14, 0], sizes = [2, 32], strides = [1, 1]} : vector<16x32xf32> to vector<2x32xf32>
    %549 = arith.subf %520, %548 : vector<2x32xf32>
    %550 = arith.mulf %549, %547 : vector<2x32xf32>
    %551 = vector.extract_strided_slice %292 {offsets = [14, 0], sizes = [2, 32], strides = [1, 1]} : vector<16x32xf32> to vector<2x32xf32>
    %552 = arith.addf %550, %551 : vector<2x32xf32>
    %553 = vector.extract_strided_slice %298 {offsets = [14, 0], sizes = [2, 32], strides = [1, 1]} : vector<16x32xf32> to vector<2x32xf32>
    %554 = vector.broadcast %306 : vector<1x32xf32> to vector<2x32xf32>
    %555 = arith.mulf %554, %552 : vector<2x32xf32>
    %556 = arith.addf %553, %555 : vector<2x32xf32>
    %557 = vector.broadcast %310 : vector<1x32xf32> to vector<2x32xf32>
    %558 = arith.addf %556, %557 : vector<2x32xf32>
    %559 = arith.negf %558 : vector<2x32xf32>
    %560 = math.exp %559 : vector<2x32xf32>
    %cst_94 = arith.constant 1.000000e+00 : f32
    %561 = vector.broadcast %cst_94 : f32 to vector<2x32xf32>
    %562 = arith.addf %561, %560 : vector<2x32xf32>
    %563 = arith.divf %561, %562 : vector<2x32xf32>
    %564 = vector.extract_strided_slice %287 {offsets = [14, 0], sizes = [2, 32], strides = [1, 1]} : vector<16x32xf32> to vector<2x32xf32>
    %565 = arith.subf %552, %564 : vector<2x32xf32>
    %566 = arith.mulf %565, %563 : vector<2x32xf32>
    %567 = arith.addf %566, %564 : vector<2x32xf32>
    %c14_95 = arith.constant 14 : index
    %c0_96 = arith.constant 0 : index
    %568 = vector.load %arg10[%c14_95, %c0_96] : memref<16x32xf32, #tpu.memory_space<vmem>>, vector<2x32xf32>
    tpu.vector_store %arg10[%c14_95, %c0_96], %567 {strides = array<i32>} : memref<16x32xf32, #tpu.memory_space<vmem>>, vector<2x32xf32>,
    %c1_97 = arith.constant 1 : index
    %c0_98 = arith.constant 0 : index
    %c0_99 = arith.constant 0 : index
    %569 = vector.load %arg9[%c1_97, %c0_98, %c0_99] : memref<3x2x32xf32, #tpu.memory_space<vmem>>, vector<1x2x32xf32>
    %570 = vector.shape_cast %569 : vector<1x2x32xf32> to vector<2x32xf32>
    %571 = vector.shape_cast %552 : vector<2x32xf32> to vector<1x2x32xf32>
    tpu.vector_store %arg9[%c1_97, %c0_98, %c0_99], %571 {strides = array<i32>} : memref<3x2x32xf32, #tpu.memory_space<vmem>>, vector<1x2x32xf32>,
    %c0_100 = arith.constant 0 : index
    %c0_101 = arith.constant 0 : index
    %572 = vector.load %arg10[%c0_100, %c0_101] : memref<16x32xf32, #tpu.memory_space<vmem>>, vector<16x32xf32>
    %c1_102 = arith.constant 1 : index
    %c0_103 = arith.constant 0 : index
    %c0_104 = arith.constant 0 : index
    %c0_105 = arith.constant 0 : index
    %573 = vector.load %arg2[%c1_102, %c0_103, %c0_104, %c0_105] : memref<2x3x32x32xf32, #tpu.memory_space<vmem>>, vector<1x3x32x32xf32>
    %574 = vector.shape_cast %573 : vector<1x3x32x32xf32> to vector<3x32x32xf32>
    %575 = vector.extract_strided_slice %574 {offsets = [0, 0, 0], sizes = [1, 32, 32], strides = [1, 1, 1]} : vector<3x32x32xf32> to vector<1x32x32xf32>
    %576 = vector.shape_cast %575 : vector<1x32x32xf32> to vector<32x32xf32>
    %cst_106 = arith.constant dense<0.000000e+00> : vector<16x32xf32>
    %577 = tpu.matmul %572, %576, %cst_106 {dimension_numbers = #tpu.dot_dimension_numbers<[1], [0], [0], [1], [0, 0, 1, 1], [], []>} : vector<16x32xf32>, vector<32x32xf32>, vector<16x32xf32> -> vector<16x32xf32>
    %578 = vector.extract_strided_slice %574 {offsets = [1, 0, 0], sizes = [1, 32, 32], strides = [1, 1, 1]} : vector<3x32x32xf32> to vector<1x32x32xf32>
    %579 = vector.shape_cast %578 : vector<1x32x32xf32> to vector<32x32xf32>
    %cst_107 = arith.constant dense<0.000000e+00> : vector<16x32xf32>
    %580 = tpu.matmul %572, %579, %cst_107 {dimension_numbers = #tpu.dot_dimension_numbers<[1], [0], [0], [1], [0, 0, 1, 1], [], []>} : vector<16x32xf32>, vector<32x32xf32>, vector<16x32xf32> -> vector<16x32xf32>
    %581 = vector.extract_strided_slice %574 {offsets = [2, 0, 0], sizes = [1, 32, 32], strides = [1, 1, 1]} : vector<3x32x32xf32> to vector<1x32x32xf32>
    %582 = vector.shape_cast %581 : vector<1x32x32xf32> to vector<32x32xf32>
    %cst_108 = arith.constant dense<0.000000e+00> : vector<16x32xf32>
    %583 = tpu.matmul %572, %582, %cst_108 {dimension_numbers = #tpu.dot_dimension_numbers<[1], [0], [0], [1], [0, 0, 1, 1], [], []>} : vector<16x32xf32>, vector<32x32xf32>, vector<16x32xf32> -> vector<16x32xf32>
    %c2_109 = arith.constant 2 : index
    %c0_110 = arith.constant 0 : index
    %c0_111 = arith.constant 0 : index
    %c0_112 = arith.constant 0 : index
    %584 = vector.load %arg3[%c2_109, %c0_110, %c0_111, %c0_112] : memref<3x2x1x32xf32, #tpu.memory_space<vmem>>, vector<1x2x1x32xf32>
    %585 = vector.shape_cast %584 : vector<1x2x1x32xf32> to vector<2x1x32xf32>
    %c2_113 = arith.constant 2 : index
    %c0_114 = arith.constant 0 : index
    %c0_115 = arith.constant 0 : index
    %c0_116 = arith.constant 0 : index
    %586 = vector.load %arg4[%c2_113, %c0_114, %c0_115, %c0_116] : memref<3x2x1x32xf32, #tpu.memory_space<vmem>>, vector<1x2x1x32xf32>
    %587 = vector.shape_cast %586 : vector<1x2x1x32xf32> to vector<2x1x32xf32>
    %588 = vector.extract_strided_slice %585 {offsets = [0, 0, 0], sizes = [1, 1, 32], strides = [1, 1, 1]} : vector<2x1x32xf32> to vector<1x1x32xf32>
    %589 = vector.shape_cast %588 : vector<1x1x32xf32> to vector<1x32xf32>
    %590 = vector.extract_strided_slice %585 {offsets = [1, 0, 0], sizes = [1, 1, 32], strides = [1, 1, 1]} : vector<2x1x32xf32> to vector<1x1x32xf32>
    %591 = vector.shape_cast %590 : vector<1x1x32xf32> to vector<1x32xf32>
    %592 = vector.extract_strided_slice %587 {offsets = [0, 0, 0], sizes = [1, 1, 32], strides = [1, 1, 1]} : vector<2x1x32xf32> to vector<1x1x32xf32>
    %593 = vector.shape_cast %592 : vector<1x1x32xf32> to vector<1x32xf32>
    %594 = vector.extract_strided_slice %587 {offsets = [1, 0, 0], sizes = [1, 1, 32], strides = [1, 1, 1]} : vector<2x1x32xf32> to vector<1x1x32xf32>
    %595 = vector.shape_cast %594 : vector<1x1x32xf32> to vector<1x32xf32>
    %c2_117 = arith.constant 2 : index
    %c0_118 = arith.constant 0 : index
    %c0_119 = arith.constant 0 : index
    %596 = vector.load %arg5[%c2_117, %c0_118, %c0_119] : memref<3x2x32xf32, #tpu.memory_space<vmem>>, vector<1x2x32xf32>
    %597 = vector.shape_cast %596 : vector<1x2x32xf32> to vector<2x32xf32>
    %598 = vector.extract_strided_slice %580 {offsets = [0, 0], sizes = [2, 32], strides = [1, 1]} : vector<16x32xf32> to vector<2x32xf32>
    %599 = vector.broadcast %589 : vector<1x32xf32> to vector<2x32xf32>
    %600 = arith.mulf %599, %597 : vector<2x32xf32>
    %601 = arith.addf %598, %600 : vector<2x32xf32>
    %602 = vector.broadcast %593 : vector<1x32xf32> to vector<2x32xf32>
    %603 = arith.addf %601, %602 : vector<2x32xf32>
    %604 = arith.negf %603 : vector<2x32xf32>
    %605 = math.exp %604 : vector<2x32xf32>
    %cst_120 = arith.constant 1.000000e+00 : f32
    %606 = vector.broadcast %cst_120 : f32 to vector<2x32xf32>
    %607 = arith.addf %606, %605 : vector<2x32xf32>
    %608 = arith.divf %606, %607 : vector<2x32xf32>
    %609 = vector.extract_strided_slice %577 {offsets = [0, 0], sizes = [2, 32], strides = [1, 1]} : vector<16x32xf32> to vector<2x32xf32>
    %610 = arith.subf %597, %609 : vector<2x32xf32>
    %611 = arith.mulf %610, %608 : vector<2x32xf32>
    %612 = vector.extract_strided_slice %577 {offsets = [0, 0], sizes = [2, 32], strides = [1, 1]} : vector<16x32xf32> to vector<2x32xf32>
    %613 = arith.addf %611, %612 : vector<2x32xf32>
    %614 = vector.extract_strided_slice %583 {offsets = [0, 0], sizes = [2, 32], strides = [1, 1]} : vector<16x32xf32> to vector<2x32xf32>
    %615 = vector.broadcast %591 : vector<1x32xf32> to vector<2x32xf32>
    %616 = arith.mulf %615, %613 : vector<2x32xf32>
    %617 = arith.addf %614, %616 : vector<2x32xf32>
    %618 = vector.broadcast %595 : vector<1x32xf32> to vector<2x32xf32>
    %619 = arith.addf %617, %618 : vector<2x32xf32>
    %620 = arith.negf %619 : vector<2x32xf32>
    %621 = math.exp %620 : vector<2x32xf32>
    %cst_121 = arith.constant 1.000000e+00 : f32
    %622 = vector.broadcast %cst_121 : f32 to vector<2x32xf32>
    %623 = arith.addf %622, %621 : vector<2x32xf32>
    %624 = arith.divf %622, %623 : vector<2x32xf32>
    %625 = vector.extract_strided_slice %572 {offsets = [0, 0], sizes = [2, 32], strides = [1, 1]} : vector<16x32xf32> to vector<2x32xf32>
    %626 = arith.subf %613, %625 : vector<2x32xf32>
    %627 = arith.mulf %626, %624 : vector<2x32xf32>
    %628 = arith.addf %627, %625 : vector<2x32xf32>
    %c0_122 = arith.constant 0 : index
    %c0_123 = arith.constant 0 : index
    %629 = vector.load %arg10[%c0_122, %c0_123] : memref<16x32xf32, #tpu.memory_space<vmem>>, vector<2x32xf32>
    tpu.vector_store %arg10[%c0_122, %c0_123], %628 {strides = array<i32>} : memref<16x32xf32, #tpu.memory_space<vmem>>, vector<2x32xf32>,
    %630 = vector.extract_strided_slice %580 {offsets = [2, 0], sizes = [2, 32], strides = [1, 1]} : vector<16x32xf32> to vector<2x32xf32>
    %631 = vector.broadcast %589 : vector<1x32xf32> to vector<2x32xf32>
    %632 = arith.mulf %631, %613 : vector<2x32xf32>
    %633 = arith.addf %630, %632 : vector<2x32xf32>
    %634 = vector.broadcast %593 : vector<1x32xf32> to vector<2x32xf32>
    %635 = arith.addf %633, %634 : vector<2x32xf32>
    %636 = arith.negf %635 : vector<2x32xf32>
    %637 = math.exp %636 : vector<2x32xf32>
    %cst_124 = arith.constant 1.000000e+00 : f32
    %638 = vector.broadcast %cst_124 : f32 to vector<2x32xf32>
    %639 = arith.addf %638, %637 : vector<2x32xf32>
    %640 = arith.divf %638, %639 : vector<2x32xf32>
    %641 = vector.extract_strided_slice %577 {offsets = [2, 0], sizes = [2, 32], strides = [1, 1]} : vector<16x32xf32> to vector<2x32xf32>
    %642 = arith.subf %613, %641 : vector<2x32xf32>
    %643 = arith.mulf %642, %640 : vector<2x32xf32>
    %644 = vector.extract_strided_slice %577 {offsets = [2, 0], sizes = [2, 32], strides = [1, 1]} : vector<16x32xf32> to vector<2x32xf32>
    %645 = arith.addf %643, %644 : vector<2x32xf32>
    %646 = vector.extract_strided_slice %583 {offsets = [2, 0], sizes = [2, 32], strides = [1, 1]} : vector<16x32xf32> to vector<2x32xf32>
    %647 = vector.broadcast %591 : vector<1x32xf32> to vector<2x32xf32>
    %648 = arith.mulf %647, %645 : vector<2x32xf32>
    %649 = arith.addf %646, %648 : vector<2x32xf32>
    %650 = vector.broadcast %595 : vector<1x32xf32> to vector<2x32xf32>
    %651 = arith.addf %649, %650 : vector<2x32xf32>
    %652 = arith.negf %651 : vector<2x32xf32>
    %653 = math.exp %652 : vector<2x32xf32>
    %cst_125 = arith.constant 1.000000e+00 : f32
    %654 = vector.broadcast %cst_125 : f32 to vector<2x32xf32>
    %655 = arith.addf %654, %653 : vector<2x32xf32>
    %656 = arith.divf %654, %655 : vector<2x32xf32>
    %657 = vector.extract_strided_slice %572 {offsets = [2, 0], sizes = [2, 32], strides = [1, 1]} : vector<16x32xf32> to vector<2x32xf32>
    %658 = arith.subf %645, %657 : vector<2x32xf32>
    %659 = arith.mulf %658, %656 : vector<2x32xf32>
    %660 = arith.addf %659, %657 : vector<2x32xf32>
    %c2_126 = arith.constant 2 : index
    %c0_127 = arith.constant 0 : index
    %661 = vector.load %arg10[%c2_126, %c0_127] : memref<16x32xf32, #tpu.memory_space<vmem>>, vector<2x32xf32>
    tpu.vector_store %arg10[%c2_126, %c0_127], %660 {strides = array<i32>} : memref<16x32xf32, #tpu.memory_space<vmem>>, vector<2x32xf32>,
    %662 = vector.extract_strided_slice %580 {offsets = [4, 0], sizes = [2, 32], strides = [1, 1]} : vector<16x32xf32> to vector<2x32xf32>
    %663 = vector.broadcast %589 : vector<1x32xf32> to vector<2x32xf32>
    %664 = arith.mulf %663, %645 : vector<2x32xf32>
    %665 = arith.addf %662, %664 : vector<2x32xf32>
    %666 = vector.broadcast %593 : vector<1x32xf32> to vector<2x32xf32>
    %667 = arith.addf %665, %666 : vector<2x32xf32>
    %668 = arith.negf %667 : vector<2x32xf32>
    %669 = math.exp %668 : vector<2x32xf32>
    %cst_128 = arith.constant 1.000000e+00 : f32
    %670 = vector.broadcast %cst_128 : f32 to vector<2x32xf32>
    %671 = arith.addf %670, %669 : vector<2x32xf32>
    %672 = arith.divf %670, %671 : vector<2x32xf32>
    %673 = vector.extract_strided_slice %577 {offsets = [4, 0], sizes = [2, 32], strides = [1, 1]} : vector<16x32xf32> to vector<2x32xf32>
    %674 = arith.subf %645, %673 : vector<2x32xf32>
    %675 = arith.mulf %674, %672 : vector<2x32xf32>
    %676 = vector.extract_strided_slice %577 {offsets = [4, 0], sizes = [2, 32], strides = [1, 1]} : vector<16x32xf32> to vector<2x32xf32>
    %677 = arith.addf %675, %676 : vector<2x32xf32>
    %678 = vector.extract_strided_slice %583 {offsets = [4, 0], sizes = [2, 32], strides = [1, 1]} : vector<16x32xf32> to vector<2x32xf32>
    %679 = vector.broadcast %591 : vector<1x32xf32> to vector<2x32xf32>
    %680 = arith.mulf %679, %677 : vector<2x32xf32>
    %681 = arith.addf %678, %680 : vector<2x32xf32>
    %682 = vector.broadcast %595 : vector<1x32xf32> to vector<2x32xf32>
    %683 = arith.addf %681, %682 : vector<2x32xf32>
    %684 = arith.negf %683 : vector<2x32xf32>
    %685 = math.exp %684 : vector<2x32xf32>
    %cst_129 = arith.constant 1.000000e+00 : f32
    %686 = vector.broadcast %cst_129 : f32 to vector<2x32xf32>
    %687 = arith.addf %686, %685 : vector<2x32xf32>
    %688 = arith.divf %686, %687 : vector<2x32xf32>
    %689 = vector.extract_strided_slice %572 {offsets = [4, 0], sizes = [2, 32], strides = [1, 1]} : vector<16x32xf32> to vector<2x32xf32>
    %690 = arith.subf %677, %689 : vector<2x32xf32>
    %691 = arith.mulf %690, %688 : vector<2x32xf32>
    %692 = arith.addf %691, %689 : vector<2x32xf32>
    %c4_130 = arith.constant 4 : index
    %c0_131 = arith.constant 0 : index
    %693 = vector.load %arg10[%c4_130, %c0_131] : memref<16x32xf32, #tpu.memory_space<vmem>>, vector<2x32xf32>
    tpu.vector_store %arg10[%c4_130, %c0_131], %692 {strides = array<i32>} : memref<16x32xf32, #tpu.memory_space<vmem>>, vector<2x32xf32>,
    %694 = vector.extract_strided_slice %580 {offsets = [6, 0], sizes = [2, 32], strides = [1, 1]} : vector<16x32xf32> to vector<2x32xf32>
    %695 = vector.broadcast %589 : vector<1x32xf32> to vector<2x32xf32>
    %696 = arith.mulf %695, %677 : vector<2x32xf32>
    %697 = arith.addf %694, %696 : vector<2x32xf32>
    %698 = vector.broadcast %593 : vector<1x32xf32> to vector<2x32xf32>
    %699 = arith.addf %697, %698 : vector<2x32xf32>
    %700 = arith.negf %699 : vector<2x32xf32>
    %701 = math.exp %700 : vector<2x32xf32>
    %cst_132 = arith.constant 1.000000e+00 : f32
    %702 = vector.broadcast %cst_132 : f32 to vector<2x32xf32>
    %703 = arith.addf %702, %701 : vector<2x32xf32>
    %704 = arith.divf %702, %703 : vector<2x32xf32>
    %705 = vector.extract_strided_slice %577 {offsets = [6, 0], sizes = [2, 32], strides = [1, 1]} : vector<16x32xf32> to vector<2x32xf32>
    %706 = arith.subf %677, %705 : vector<2x32xf32>
    %707 = arith.mulf %706, %704 : vector<2x32xf32>
    %708 = vector.extract_strided_slice %577 {offsets = [6, 0], sizes = [2, 32], strides = [1, 1]} : vector<16x32xf32> to vector<2x32xf32>
    %709 = arith.addf %707, %708 : vector<2x32xf32>
    %710 = vector.extract_strided_slice %583 {offsets = [6, 0], sizes = [2, 32], strides = [1, 1]} : vector<16x32xf32> to vector<2x32xf32>
    %711 = vector.broadcast %591 : vector<1x32xf32> to vector<2x32xf32>
    %712 = arith.mulf %711, %709 : vector<2x32xf32>
    %713 = arith.addf %710, %712 : vector<2x32xf32>
    %714 = vector.broadcast %595 : vector<1x32xf32> to vector<2x32xf32>
    %715 = arith.addf %713, %714 : vector<2x32xf32>
    %716 = arith.negf %715 : vector<2x32xf32>
    %717 = math.exp %716 : vector<2x32xf32>
    %cst_133 = arith.constant 1.000000e+00 : f32
    %718 = vector.broadcast %cst_133 : f32 to vector<2x32xf32>
    %719 = arith.addf %718, %717 : vector<2x32xf32>
    %720 = arith.divf %718, %719 : vector<2x32xf32>
    %721 = vector.extract_strided_slice %572 {offsets = [6, 0], sizes = [2, 32], strides = [1, 1]} : vector<16x32xf32> to vector<2x32xf32>
    %722 = arith.subf %709, %721 : vector<2x32xf32>
    %723 = arith.mulf %722, %720 : vector<2x32xf32>
    %724 = arith.addf %723, %721 : vector<2x32xf32>
    %c6_134 = arith.constant 6 : index
    %c0_135 = arith.constant 0 : index
    %725 = vector.load %arg10[%c6_134, %c0_135] : memref<16x32xf32, #tpu.memory_space<vmem>>, vector<2x32xf32>
    tpu.vector_store %arg10[%c6_134, %c0_135], %724 {strides = array<i32>} : memref<16x32xf32, #tpu.memory_space<vmem>>, vector<2x32xf32>,
    %726 = vector.extract_strided_slice %580 {offsets = [8, 0], sizes = [2, 32], strides = [1, 1]} : vector<16x32xf32> to vector<2x32xf32>
    %727 = vector.broadcast %589 : vector<1x32xf32> to vector<2x32xf32>
    %728 = arith.mulf %727, %709 : vector<2x32xf32>
    %729 = arith.addf %726, %728 : vector<2x32xf32>
    %730 = vector.broadcast %593 : vector<1x32xf32> to vector<2x32xf32>
    %731 = arith.addf %729, %730 : vector<2x32xf32>
    %732 = arith.negf %731 : vector<2x32xf32>
    %733 = math.exp %732 : vector<2x32xf32>
    %cst_136 = arith.constant 1.000000e+00 : f32
    %734 = vector.broadcast %cst_136 : f32 to vector<2x32xf32>
    %735 = arith.addf %734, %733 : vector<2x32xf32>
    %736 = arith.divf %734, %735 : vector<2x32xf32>
    %737 = vector.extract_strided_slice %577 {offsets = [8, 0], sizes = [2, 32], strides = [1, 1]} : vector<16x32xf32> to vector<2x32xf32>
    %738 = arith.subf %709, %737 : vector<2x32xf32>
    %739 = arith.mulf %738, %736 : vector<2x32xf32>
    %740 = vector.extract_strided_slice %577 {offsets = [8, 0], sizes = [2, 32], strides = [1, 1]} : vector<16x32xf32> to vector<2x32xf32>
    %741 = arith.addf %739, %740 : vector<2x32xf32>
    %742 = vector.extract_strided_slice %583 {offsets = [8, 0], sizes = [2, 32], strides = [1, 1]} : vector<16x32xf32> to vector<2x32xf32>
    %743 = vector.broadcast %591 : vector<1x32xf32> to vector<2x32xf32>
    %744 = arith.mulf %743, %741 : vector<2x32xf32>
    %745 = arith.addf %742, %744 : vector<2x32xf32>
    %746 = vector.broadcast %595 : vector<1x32xf32> to vector<2x32xf32>
    %747 = arith.addf %745, %746 : vector<2x32xf32>
    %748 = arith.negf %747 : vector<2x32xf32>
    %749 = math.exp %748 : vector<2x32xf32>
    %cst_137 = arith.constant 1.000000e+00 : f32
    %750 = vector.broadcast %cst_137 : f32 to vector<2x32xf32>
    %751 = arith.addf %750, %749 : vector<2x32xf32>
    %752 = arith.divf %750, %751 : vector<2x32xf32>
    %753 = vector.extract_strided_slice %572 {offsets = [8, 0], sizes = [2, 32], strides = [1, 1]} : vector<16x32xf32> to vector<2x32xf32>
    %754 = arith.subf %741, %753 : vector<2x32xf32>
    %755 = arith.mulf %754, %752 : vector<2x32xf32>
    %756 = arith.addf %755, %753 : vector<2x32xf32>
    %c8_138 = arith.constant 8 : index
    %c0_139 = arith.constant 0 : index
    %757 = vector.load %arg10[%c8_138, %c0_139] : memref<16x32xf32, #tpu.memory_space<vmem>>, vector<2x32xf32>
    tpu.vector_store %arg10[%c8_138, %c0_139], %756 {strides = array<i32>} : memref<16x32xf32, #tpu.memory_space<vmem>>, vector<2x32xf32>,
    %758 = vector.extract_strided_slice %580 {offsets = [10, 0], sizes = [2, 32], strides = [1, 1]} : vector<16x32xf32> to vector<2x32xf32>
    %759 = vector.broadcast %589 : vector<1x32xf32> to vector<2x32xf32>
    %760 = arith.mulf %759, %741 : vector<2x32xf32>
    %761 = arith.addf %758, %760 : vector<2x32xf32>
    %762 = vector.broadcast %593 : vector<1x32xf32> to vector<2x32xf32>
    %763 = arith.addf %761, %762 : vector<2x32xf32>
    %764 = arith.negf %763 : vector<2x32xf32>
    %765 = math.exp %764 : vector<2x32xf32>
    %cst_140 = arith.constant 1.000000e+00 : f32
    %766 = vector.broadcast %cst_140 : f32 to vector<2x32xf32>
    %767 = arith.addf %766, %765 : vector<2x32xf32>
    %768 = arith.divf %766, %767 : vector<2x32xf32>
    %769 = vector.extract_strided_slice %577 {offsets = [10, 0], sizes = [2, 32], strides = [1, 1]} : vector<16x32xf32> to vector<2x32xf32>
    %770 = arith.subf %741, %769 : vector<2x32xf32>
    %771 = arith.mulf %770, %768 : vector<2x32xf32>
    %772 = vector.extract_strided_slice %577 {offsets = [10, 0], sizes = [2, 32], strides = [1, 1]} : vector<16x32xf32> to vector<2x32xf32>
    %773 = arith.addf %771, %772 : vector<2x32xf32>
    %774 = vector.extract_strided_slice %583 {offsets = [10, 0], sizes = [2, 32], strides = [1, 1]} : vector<16x32xf32> to vector<2x32xf32>
    %775 = vector.broadcast %591 : vector<1x32xf32> to vector<2x32xf32>
    %776 = arith.mulf %775, %773 : vector<2x32xf32>
    %777 = arith.addf %774, %776 : vector<2x32xf32>
    %778 = vector.broadcast %595 : vector<1x32xf32> to vector<2x32xf32>
    %779 = arith.addf %777, %778 : vector<2x32xf32>
    %780 = arith.negf %779 : vector<2x32xf32>
    %781 = math.exp %780 : vector<2x32xf32>
    %cst_141 = arith.constant 1.000000e+00 : f32
    %782 = vector.broadcast %cst_141 : f32 to vector<2x32xf32>
    %783 = arith.addf %782, %781 : vector<2x32xf32>
    %784 = arith.divf %782, %783 : vector<2x32xf32>
    %785 = vector.extract_strided_slice %572 {offsets = [10, 0], sizes = [2, 32], strides = [1, 1]} : vector<16x32xf32> to vector<2x32xf32>
    %786 = arith.subf %773, %785 : vector<2x32xf32>
    %787 = arith.mulf %786, %784 : vector<2x32xf32>
    %788 = arith.addf %787, %785 : vector<2x32xf32>
    %c10_142 = arith.constant 10 : index
    %c0_143 = arith.constant 0 : index
    %789 = vector.load %arg10[%c10_142, %c0_143] : memref<16x32xf32, #tpu.memory_space<vmem>>, vector<2x32xf32>
    tpu.vector_store %arg10[%c10_142, %c0_143], %788 {strides = array<i32>} : memref<16x32xf32, #tpu.memory_space<vmem>>, vector<2x32xf32>,
    %790 = vector.extract_strided_slice %580 {offsets = [12, 0], sizes = [2, 32], strides = [1, 1]} : vector<16x32xf32> to vector<2x32xf32>
    %791 = vector.broadcast %589 : vector<1x32xf32> to vector<2x32xf32>
    %792 = arith.mulf %791, %773 : vector<2x32xf32>
    %793 = arith.addf %790, %792 : vector<2x32xf32>
    %794 = vector.broadcast %593 : vector<1x32xf32> to vector<2x32xf32>
    %795 = arith.addf %793, %794 : vector<2x32xf32>
    %796 = arith.negf %795 : vector<2x32xf32>
    %797 = math.exp %796 : vector<2x32xf32>
    %cst_144 = arith.constant 1.000000e+00 : f32
    %798 = vector.broadcast %cst_144 : f32 to vector<2x32xf32>
    %799 = arith.addf %798, %797 : vector<2x32xf32>
    %800 = arith.divf %798, %799 : vector<2x32xf32>
    %801 = vector.extract_strided_slice %577 {offsets = [12, 0], sizes = [2, 32], strides = [1, 1]} : vector<16x32xf32> to vector<2x32xf32>
    %802 = arith.subf %773, %801 : vector<2x32xf32>
    %803 = arith.mulf %802, %800 : vector<2x32xf32>
    %804 = vector.extract_strided_slice %577 {offsets = [12, 0], sizes = [2, 32], strides = [1, 1]} : vector<16x32xf32> to vector<2x32xf32>
    %805 = arith.addf %803, %804 : vector<2x32xf32>
    %806 = vector.extract_strided_slice %583 {offsets = [12, 0], sizes = [2, 32], strides = [1, 1]} : vector<16x32xf32> to vector<2x32xf32>
    %807 = vector.broadcast %591 : vector<1x32xf32> to vector<2x32xf32>
    %808 = arith.mulf %807, %805 : vector<2x32xf32>
    %809 = arith.addf %806, %808 : vector<2x32xf32>
    %810 = vector.broadcast %595 : vector<1x32xf32> to vector<2x32xf32>
    %811 = arith.addf %809, %810 : vector<2x32xf32>
    %812 = arith.negf %811 : vector<2x32xf32>
    %813 = math.exp %812 : vector<2x32xf32>
    %cst_145 = arith.constant 1.000000e+00 : f32
    %814 = vector.broadcast %cst_145 : f32 to vector<2x32xf32>
    %815 = arith.addf %814, %813 : vector<2x32xf32>
    %816 = arith.divf %814, %815 : vector<2x32xf32>
    %817 = vector.extract_strided_slice %572 {offsets = [12, 0], sizes = [2, 32], strides = [1, 1]} : vector<16x32xf32> to vector<2x32xf32>
    %818 = arith.subf %805, %817 : vector<2x32xf32>
    %819 = arith.mulf %818, %816 : vector<2x32xf32>
    %820 = arith.addf %819, %817 : vector<2x32xf32>
    %c12_146 = arith.constant 12 : index
    %c0_147 = arith.constant 0 : index
    %821 = vector.load %arg10[%c12_146, %c0_147] : memref<16x32xf32, #tpu.memory_space<vmem>>, vector<2x32xf32>
    tpu.vector_store %arg10[%c12_146, %c0_147], %820 {strides = array<i32>} : memref<16x32xf32, #tpu.memory_space<vmem>>, vector<2x32xf32>,
    %822 = vector.extract_strided_slice %580 {offsets = [14, 0], sizes = [2, 32], strides = [1, 1]} : vector<16x32xf32> to vector<2x32xf32>
    %823 = vector.broadcast %589 : vector<1x32xf32> to vector<2x32xf32>
    %824 = arith.mulf %823, %805 : vector<2x32xf32>
    %825 = arith.addf %822, %824 : vector<2x32xf32>
    %826 = vector.broadcast %593 : vector<1x32xf32> to vector<2x32xf32>
    %827 = arith.addf %825, %826 : vector<2x32xf32>
    %828 = arith.negf %827 : vector<2x32xf32>
    %829 = math.exp %828 : vector<2x32xf32>
    %cst_148 = arith.constant 1.000000e+00 : f32
    %830 = vector.broadcast %cst_148 : f32 to vector<2x32xf32>
    %831 = arith.addf %830, %829 : vector<2x32xf32>
    %832 = arith.divf %830, %831 : vector<2x32xf32>
    %833 = vector.extract_strided_slice %577 {offsets = [14, 0], sizes = [2, 32], strides = [1, 1]} : vector<16x32xf32> to vector<2x32xf32>
    %834 = arith.subf %805, %833 : vector<2x32xf32>
    %835 = arith.mulf %834, %832 : vector<2x32xf32>
    %836 = vector.extract_strided_slice %577 {offsets = [14, 0], sizes = [2, 32], strides = [1, 1]} : vector<16x32xf32> to vector<2x32xf32>
    %837 = arith.addf %835, %836 : vector<2x32xf32>
    %838 = vector.extract_strided_slice %583 {offsets = [14, 0], sizes = [2, 32], strides = [1, 1]} : vector<16x32xf32> to vector<2x32xf32>
    %839 = vector.broadcast %591 : vector<1x32xf32> to vector<2x32xf32>
    %840 = arith.mulf %839, %837 : vector<2x32xf32>
    %841 = arith.addf %838, %840 : vector<2x32xf32>
    %842 = vector.broadcast %595 : vector<1x32xf32> to vector<2x32xf32>
    %843 = arith.addf %841, %842 : vector<2x32xf32>
    %844 = arith.negf %843 : vector<2x32xf32>
    %845 = math.exp %844 : vector<2x32xf32>
    %cst_149 = arith.constant 1.000000e+00 : f32
    %846 = vector.broadcast %cst_149 : f32 to vector<2x32xf32>
    %847 = arith.addf %846, %845 : vector<2x32xf32>
    %848 = arith.divf %846, %847 : vector<2x32xf32>
    %849 = vector.extract_strided_slice %572 {offsets = [14, 0], sizes = [2, 32], strides = [1, 1]} : vector<16x32xf32> to vector<2x32xf32>
    %850 = arith.subf %837, %849 : vector<2x32xf32>
    %851 = arith.mulf %850, %848 : vector<2x32xf32>
    %852 = arith.addf %851, %849 : vector<2x32xf32>
    %c14_150 = arith.constant 14 : index
    %c0_151 = arith.constant 0 : index
    %853 = vector.load %arg10[%c14_150, %c0_151] : memref<16x32xf32, #tpu.memory_space<vmem>>, vector<2x32xf32>
    tpu.vector_store %arg10[%c14_150, %c0_151], %852 {strides = array<i32>} : memref<16x32xf32, #tpu.memory_space<vmem>>, vector<2x32xf32>,
    %c2_152 = arith.constant 2 : index
    %c0_153 = arith.constant 0 : index
    %c0_154 = arith.constant 0 : index
    %854 = vector.load %arg9[%c2_152, %c0_153, %c0_154] : memref<3x2x32xf32, #tpu.memory_space<vmem>>, vector<1x2x32xf32>
    %855 = vector.shape_cast %854 : vector<1x2x32xf32> to vector<2x32xf32>
    %856 = vector.shape_cast %837 : vector<2x32xf32> to vector<1x2x32xf32>
    tpu.vector_store %arg9[%c2_152, %c0_153, %c0_154], %856 {strides = array<i32>} : memref<3x2x32xf32, #tpu.memory_space<vmem>>, vector<1x2x32xf32>,
    %c0_155 = arith.constant 0 : index
    %c0_156 = arith.constant 0 : index
    %857 = vector.load %arg10[%c0_155, %c0_156] : memref<16x32xf32, #tpu.memory_space<vmem>>, vector<16x32xf32>
    %c0_157 = arith.constant 0 : index
    %c0_158 = arith.constant 0 : index
    %858 = vector.load %arg6[%c0_157, %c0_158] : memref<32x16xf32, #tpu.memory_space<vmem>>, vector<32x16xf32>
    %cst_159 = arith.constant dense<0.000000e+00> : vector<16x16xf32>
    %859 = tpu.matmul %857, %858, %cst_159 {dimension_numbers = #tpu.dot_dimension_numbers<[1], [0], [0], [1], [0, 0, 1, 1], [], []>} : vector<16x32xf32>, vector<32x16xf32>, vector<16x16xf32> -> vector<16x16xf32>
    %c0_160 = arith.constant 0 : index
    %c0_161 = arith.constant 0 : index
    %860 = vector.load %arg7[%c0_160, %c0_161] : memref<1x16xf32, #tpu.memory_space<vmem>>, vector<1x16xf32>
    %861 = vector.broadcast %860 : vector<1x16xf32> to vector<16x16xf32>
    %862 = arith.addf %859, %861 : vector<16x16xf32>
    %c0_162 = arith.constant 0 : index
    %c0_163 = arith.constant 0 : index
    %863 = vector.load %arg8[%c0_162, %c0_163] : memref<16x16xf32, #tpu.memory_space<vmem>>, vector<16x16xf32>
    tpu.vector_store %arg8[%c0_162, %c0_163], %862 {strides = array<i32>} : memref<16x16xf32, #tpu.memory_space<vmem>>, vector<16x16xf32>,
    return
  }
}

</mosaic_0001>

<llo_original>
// kernel: model_forward.1
$region0: #{model_forward.1}
  #allocation0 [shape = 'u32[]', space=smem, size = 0x4, offset = 0x4, fixed_abs, tag = 'smem constant byte address 0x4 - core index']
  #allocation1 [shape = 'u32[144,128]{1,0:T(1,128)}', space=vmem, size = 0x12000, scoped, tag = 'internal scratch']
  #allocation2 [shape = 'f32[16,32]{1,0:T(8,128)}', space=vmem, size = 0x2000, scoped, tag = 'scratch operand']
  %s0 = inlined_call_operand.vmem [shape: f32[16,16], index: 0, kind: input, shape index: {}]
  %s1 = inlined_call_operand.vmem [shape: f32[4,16,32], index: 1, kind: input, shape index: {}]
  %s2 = inlined_call_operand.vmem [shape: f32[2,3,32,32], index: 2, kind: input, shape index: {}]
  %s3 = inlined_call_operand.vmem [shape: f32[3,2,1,32], index: 3, kind: input, shape index: {}]
  %s4 = inlined_call_operand.vmem [shape: f32[3,2,1,32], index: 4, kind: input, shape index: {}]
  %s5 = inlined_call_operand.vmem [shape: f32[3,2,32], index: 5, kind: input, shape index: {}]
  %s6 = inlined_call_operand.vmem [shape: f32[32,16], index: 6, kind: input, shape index: {}]
  %s7 = inlined_call_operand.vmem [shape: f32[1,16], index: 7, kind: input, shape index: {}]
  %s8 = inlined_call_operand.hbm [shape: f32[16,16], index: 8, kind: output, shape index: {0}]
  %s9 = inlined_call_operand.hbm [shape: f32[3,2,32], index: 9, kind: output, shape index: {1}]
  %10 = xla_tuple %s8, %s9
  %s11 = sld [smem:[#allocation0]]
  $region50: #{model_forward.1} parent=0
    _
  %s13 = ssub.s32 1, %s11
  %s14 = scalar_select 0, %s13, %s11
  $region1: #{model_forward.1} parent=0
    #allocation3 [shape = 'u8[8192]{0}', space=vmem, size = 0x2000, scoped, tag = 'output window, operand 0, single buffered']
    #allocation4 [shape = 's32[1]{0}', space=sflag, size = 0x4, scoped, tag = 'scoped memory for model_forward.1']
    #allocation5 [shape = 'u8[3072]{0}', space=vmem, size = 0xc00, scoped, tag = 'output window, operand 1, single buffered']
    #allocation6 [shape = 's32[1]{0}', space=sflag, size = 0x4, scoped, tag = 'scoped memory for model_forward.1']
    %15 = vsyncpa [#allocation4], 0
    %16 = vsyncpa [#allocation6], 0
    // Predicated region
    $region2: #{model_forward.1} parent=1 // pred_check
      _
    $region3: #{model_forward.1} parent=1 // pred_check_branch
      %18 = sbr.rel (0) target = $region5
    $region4: #{model_forward.1} parent=1 // pred_region
      _
    $region5: #{model_forward.1} parent=1 // pred_fallthru
      _
    // Predicated region
    $region6: #{model_forward.1} parent=1 // pred_check
      _
    $region7: #{model_forward.1} parent=1 // pred_check_branch
      %20 = sbr.rel (0) target = $region9
    $region8: #{model_forward.1} parent=1 // pred_region
      _
    $region9: #{model_forward.1} parent=1 // pred_fallthru
      _
    // Predicated region
    $region10: #{model_forward.1} parent=1 // pred_check
      _
    $region11: #{model_forward.1} parent=1 // pred_check_branch
      %22 = sbr.rel (0) target = $region13
    $region12: #{model_forward.1} parent=1 // pred_region
      _
    $region13: #{model_forward.1} parent=1 // pred_fallthru
      _
    // Predicated region
    $region14: #{model_forward.1} parent=1 // pred_check
      _
    $region15: #{model_forward.1} parent=1 // pred_check_branch
      %24 = sbr.rel (0) target = $region17
    $region16: #{model_forward.1} parent=1 // pred_region
      _
    $region17: #{model_forward.1} parent=1 // pred_fallthru
      _
    // Predicated region
    $region18: #{model_forward.1} parent=1 // pred_check
      _
    $region19: #{model_forward.1} parent=1 // pred_check_branch
      %26 = sbr.rel (0) target = $region21
    $region20: #{model_forward.1} parent=1 // pred_region
      _
    $region21: #{model_forward.1} parent=1 // pred_fallthru
      _
    // Predicated region
    $region22: #{model_forward.1} parent=1 // pred_check
      _
    $region23: #{model_forward.1} parent=1 // pred_check_branch
      %28 = sbr.rel (0) target = $region25
    $region24: #{model_forward.1} parent=1 // pred_region
      _
    $region25: #{model_forward.1} parent=1 // pred_fallthru
      _
    // Predicated region
    $region26: #{model_forward.1} parent=1 // pred_check
      _
    $region27: #{model_forward.1} parent=1 // pred_check_branch
      %30 = sbr.rel (0) target = $region29
    $region28: #{model_forward.1} parent=1 // pred_region
      _
    $region29: #{model_forward.1} parent=1 // pred_fallthru
      _
    // Predicated region
    $region30: #{model_forward.1} parent=1 // pred_check
      _
    $region31: #{model_forward.1} parent=1 // pred_check_branch
      %32 = sbr.rel (0) target = $region33
    $region32: #{model_forward.1} parent=1 // pred_region
      _
    $region33: #{model_forward.1} parent=1 // pred_fallthru
      _
    %v33 = vld [vmem:[%s0] sm:$0xff]
    %v34 = vld [vmem:[%s0 + $0x8] sm:$0xff]
    %v35 = vld [vmem:[%s1] sm:$0xff]
    %v36 = vld [vmem:[%s1 + $0x8] sm:$0xff]
    %v37 = vld [vmem:[%s1 + $0x10] sm:$0xff]
    %v38 = vld [vmem:[%s1 + $0x18] sm:$0xff]
    %v39 = vld [vmem:[%s1 + $0x20] sm:$0xff]
    %v40 = vld [vmem:[%s1 + $0x28] sm:$0xff]
    %v41 = vld [vmem:[%s1 + $0x30] sm:$0xff]
    %v42 = vld [vmem:[%s1 + $0x38] sm:$0xff]
    %vm43 = vcmask 130048
    %v45 = vsel %vm43, %v33, 0
    %v48 = vsel %vm43, %v34, 0
    %50 = vmatprep.subr.mxu0 0.0
    %51 = vmatpush1.msra.mxu0 %v35
    %52 = vmatprep.subr.mxu0 0.0
    %53 = vmatpush1.msra.mxu0 %v36
    %54 = vmatprep.subr.mxu0 0.0
    %55 = vmatpush1.msra.mxu0 0.0
    %56 = vmatprep.subr.mxu0 0.0
    %57 = vmatpush1.msra.mxu0 0.0
    %58 = vmatprep.subr.mxu0 0.0
    %59 = vmatpush1.msra.mxu0 0.0
    %60 = vmatprep.subr.mxu0 0.0
    %61 = vmatpush1.msra.mxu0 0.0
    %62 = vmatprep.subr.mxu0 0.0
    %63 = vmatpush1.msra.mxu0 0.0
    %64 = vmatprep.subr.mxu0 0.0
    %65 = vmatpush1.msra.mxu0 0.0
    %66 = vmatprep.subr.mxu0 0.0
    %67 = vmatpush1.msra.mxu0 0.0
    %68 = vmatprep.subr.mxu0 0.0
    %69 = vmatpush1.msra.mxu0 0.0
    %70 = vmatprep.subr.mxu0 0.0
    %71 = vmatpush1.msra.mxu0 0.0
    %72 = vmatprep.subr.mxu0 0.0
    %73 = vmatpush1.msra.mxu0 0.0
    %74 = vmatprep.subr.mxu0 0.0
    %75 = vmatpush1.msra.mxu0 0.0
    %76 = vmatprep.subr.mxu0 0.0
    %77 = vmatpush1.msra.mxu0 0.0
    %78 = vmatprep.subr.mxu0 0.0
    %79 = vmatpush1.msra.mxu0 0.0
    %80 = vmatprep.subr.mxu0 0.0
    %81 = vmatpush1.msra.mxu0 0.0
    %82 = vmatprep.subr.mxu0 0.0
    %83 = vmatpush1.msra.mxu0 0.0
    %84 = vmatprep.subr.mxu0 0.0
    %85 = vmatpush1.msra.mxu0 0.0
    %86 = vmatprep.subr.mxu0 0.0
    %87 = vmatpush1.msra.mxu0 0.0
    %88 = vmatprep.subr.mxu0 0.0
    %89 = vmatpush1.msra.mxu0 0.0
    %90 = vmatprep.subr.mxu0 0.0
    %91 = vmatpush1.msra.mxu0 0.0
    %92 = vmatprep.subr.mxu0 0.0
    %93 = vmatpush1.msra.mxu0 0.0
    %94 = vmatprep.subr.mxu0 0.0
    %95 = vmatpush1.msra.mxu0 0.0
    %96 = vmatprep.subr.mxu0 0.0
    %97 = vmatpush1.msra.mxu0 0.0
    %98 = vmatprep.subr.mxu0 0.0
    %99 = vmatpush1.msra.mxu0 0.0
    %100 = vmatprep.subr.mxu0 0.0
    %101 = vmatpush1.msra.mxu0 0.0
    %102 = vmatprep.subr.mxu0 0.0
    %103 = vmatpush1.msra.mxu0 0.0
    %104 = vmatprep.subr.mxu0 0.0
    %105 = vmatpush1.msra.mxu0 0.0
    %106 = vmatprep.subr.mxu0 0.0
    %107 = vmatpush1.msra.mxu0 0.0
    %108 = vmatprep.subr.mxu0 0.0
    %109 = vmatpush1.msra.mxu0 0.0
    %110 = vmatprep.subr.mxu0 0.0
    %111 = vmatpush1.msra.mxu0 0.0
    %112 = vmatprep.subr.mxu0 0.0
    %113 = vmatpush1.msra.mxu0 0.0
    %114 = vmatprep.mubr.f32.mxu0 0.0
    %115 = vmatmul.mubr.f32.gmra.mrb[0].mxu0 %v45
    %v116 = vpop.f32.mrb[0].mxu0
    %v117 = vadd.f32 0.0, %v116
    %v118 = vpop.f32.mrb[0].mxu0
    %119 = vmatprep.mubr.f32.mxu0 0.0
    %120 = vmatmul.mubr.f32.gmra.mrb[0].mxu0 %v48
    %v121 = vpop.f32.mrb[0].mxu0
    %v122 = vadd.f32 0.0, %v121
    %v123 = vpop.f32.mrb[0].mxu0
    %124 = vdwg.mxu0
    %125 = vmatprep.subr.mxu0 0.0
    %126 = vmatpush1.msra.mxu0 %v37
    %127 = vmatprep.subr.mxu0 0.0
    %128 = vmatpush1.msra.mxu0 %v38
    %129 = vmatprep.subr.mxu0 0.0
    %130 = vmatpush1.msra.mxu0 0.0
    %131 = vmatprep.subr.mxu0 0.0
    %132 = vmatpush1.msra.mxu0 0.0
    %133 = vmatprep.subr.mxu0 0.0
    %134 = vmatpush1.msra.mxu0 0.0
    %135 = vmatprep.subr.mxu0 0.0
    %136 = vmatpush1.msra.mxu0 0.0
    %137 = vmatprep.subr.mxu0 0.0
    %138 = vmatpush1.msra.mxu0 0.0
    %139 = vmatprep.subr.mxu0 0.0
    %140 = vmatpush1.msra.mxu0 0.0
    %141 = vmatprep.subr.mxu0 0.0
    %142 = vmatpush1.msra.mxu0 0.0
    %143 = vmatprep.subr.mxu0 0.0
    %144 = vmatpush1.msra.mxu0 0.0
    %145 = vmatprep.subr.mxu0 0.0
    %146 = vmatpush1.msra.mxu0 0.0
    %147 = vmatprep.subr.mxu0 0.0
    %148 = vmatpush1.msra.mxu0 0.0
    %149 = vmatprep.subr.mxu0 0.0
    %150 = vmatpush1.msra.mxu0 0.0
    %151 = vmatprep.subr.mxu0 0.0
    %152 = vmatpush1.msra.mxu0 0.0
    %153 = vmatprep.subr.mxu0 0.0
    %154 = vmatpush1.msra.mxu0 0.0
    %155 = vmatprep.subr.mxu0 0.0
    %156 = vmatpush1.msra.mxu0 0.0
    %157 = vmatprep.subr.mxu0 0.0
    %158 = vmatpush1.msra.mxu0 0.0
    %159 = vmatprep.subr.mxu0 0.0
    %160 = vmatpush1.msra.mxu0 0.0
    %161 = vmatprep.subr.mxu0 0.0
    %162 = vmatpush1.msra.mxu0 0.0
    %163 = vmatprep.subr.mxu0 0.0
    %164 = vmatpush1.msra.mxu0 0.0
    %165 = vmatprep.subr.mxu0 0.0
    %166 = vmatpush1.msra.mxu0 0.0
    %167 = vmatprep.subr.mxu0 0.0
    %168 = vmatpush1.msra.mxu0 0.0
    %169 = vmatprep.subr.mxu0 0.0
    %170 = vmatpush1.msra.mxu0 0.0
    %171 = vmatprep.subr.mxu0 0.0
    %172 = vmatpush1.msra.mxu0 0.0
    %173 = vmatprep.subr.mxu0 0.0
    %174 = vmatpush1.msra.mxu0 0.0
    %175 = vmatprep.subr.mxu0 0.0
    %176 = vmatpush1.msra.mxu0 0.0
    %177 = vmatprep.subr.mxu0 0.0
    %178 = vmatpush1.msra.mxu0 0.0
    %179 = vmatprep.subr.mxu0 0.0
    %180 = vmatpush1.msra.mxu0 0.0
    %181 = vmatprep.subr.mxu0 0.0
    %182 = vmatpush1.msra.mxu0 0.0
    %183 = vmatprep.subr.mxu0 0.0
    %184 = vmatpush1.msra.mxu0 0.0
    %185 = vmatprep.subr.mxu0 0.0
    %186 = vmatpush1.msra.mxu0 0.0
    %187 = vmatprep.subr.mxu0 0.0
    %188 = vmatpush1.msra.mxu0 0.0
    %189 = vmatprep.mubr.f32.mxu0 0.0
    %190 = vmatmul.mubr.f32.gmra.mrb[0].mxu0 %v45
    %v191 = vpop.f32.mrb[0].mxu0
    %v192 = vadd.f32 0.0, %v191
    %v193 = vpop.f32.mrb[0].mxu0
    %194 = vmatprep.mubr.f32.mxu0 0.0
    %195 = vmatmul.mubr.f32.gmra.mrb[0].mxu0 %v48
    %v196 = vpop.f32.mrb[0].mxu0
    %v197 = vadd.f32 0.0, %v196
    %v198 = vpop.f32.mrb[0].mxu0
    %199 = vdwg.mxu0
    %200 = vmatprep.subr.mxu0 0.0
    %201 = vmatpush1.msra.mxu0 %v39
    %202 = vmatprep.subr.mxu0 0.0
    %203 = vmatpush1.msra.mxu0 %v40
    %204 = vmatprep.subr.mxu0 0.0
    %205 = vmatpush1.msra.mxu0 0.0
    %206 = vmatprep.subr.mxu0 0.0
    %207 = vmatpush1.msra.mxu0 0.0
    %208 = vmatprep.subr.mxu0 0.0
    %209 = vmatpush1.msra.mxu0 0.0
    %210 = vmatprep.subr.mxu0 0.0
    %211 = vmatpush1.msra.mxu0 0.0
    %212 = vmatprep.subr.mxu0 0.0
    %213 = vmatpush1.msra.mxu0 0.0
    %214 = vmatprep.subr.mxu0 0.0
    %215 = vmatpush1.msra.mxu0 0.0
    %216 = vmatprep.subr.mxu0 0.0
    %217 = vmatpush1.msra.mxu0 0.0
    %218 = vmatprep.subr.mxu0 0.0
    %219 = vmatpush1.msra.mxu0 0.0
    %220 = vmatprep.subr.mxu0 0.0
    %221 = vmatpush1.msra.mxu0 0.0
    %222 = vmatprep.subr.mxu0 0.0
    %223 = vmatpush1.msra.mxu0 0.0
    %224 = vmatprep.subr.mxu0 0.0
    %225 = vmatpush1.msra.mxu0 0.0
    %226 = vmatprep.subr.mxu0 0.0
    %227 = vmatpush1.msra.mxu0 0.0
    %228 = vmatprep.subr.mxu0 0.0
    %229 = vmatpush1.msra.mxu0 0.0
    %230 = vmatprep.subr.mxu0 0.0
    %231 = vmatpush1.msra.mxu0 0.0
    %232 = vmatprep.subr.mxu0 0.0
    %233 = vmatpush1.msra.mxu0 0.0
    %234 = vmatprep.subr.mxu0 0.0
    %235 = vmatpush1.msra.mxu0 0.0
    %236 = vmatprep.subr.mxu0 0.0
    %237 = vmatpush1.msra.mxu0 0.0
    %238 = vmatprep.subr.mxu0 0.0
    %239 = vmatpush1.msra.mxu0 0.0
    %240 = vmatprep.subr.mxu0 0.0
    %241 = vmatpush1.msra.mxu0 0.0
    %242 = vmatprep.subr.mxu0 0.0
    %243 = vmatpush1.msra.mxu0 0.0
    %244 = vmatprep.subr.mxu0 0.0
    %245 = vmatpush1.msra.mxu0 0.0
    %246 = vmatprep.subr.mxu0 0.0
    %247 = vmatpush1.msra.mxu0 0.0
    %248 = vmatprep.subr.mxu0 0.0
    %249 = vmatpush1.msra.mxu0 0.0
    %250 = vmatprep.subr.mxu0 0.0
    %251 = vmatpush1.msra.mxu0 0.0
    %252 = vmatprep.subr.mxu0 0.0
    %253 = vmatpush1.msra.mxu0 0.0
    %254 = vmatprep.subr.mxu0 0.0
    %255 = vmatpush1.msra.mxu0 0.0
    %256 = vmatprep.subr.mxu0 0.0
    %257 = vmatpush1.msra.mxu0 0.0
    %258 = vmatprep.subr.mxu0 0.0
    %259 = vmatpush1.msra.mxu0 0.0
    %260 = vmatprep.subr.mxu0 0.0
    %261 = vmatpush1.msra.mxu0 0.0
    %262 = vmatprep.subr.mxu0 0.0
    %263 = vmatpush1.msra.mxu0 0.0
    %264 = vmatprep.mubr.f32.mxu0 0.0
    %265 = vmatmul.mubr.f32.gmra.mrb[0].mxu0 %v45
    %v266 = vpop.f32.mrb[0].mxu0
    %v267 = vadd.f32 0.0, %v266
    %v268 = vpop.f32.mrb[0].mxu0
    %269 = vmatprep.mubr.f32.mxu0 0.0
    %270 = vmatmul.mubr.f32.gmra.mrb[0].mxu0 %v48
    %v271 = vpop.f32.mrb[0].mxu0
    %v272 = vadd.f32 0.0, %v271
    %v273 = vpop.f32.mrb[0].mxu0
    %274 = vdwg.mxu0
    %275 = vmatprep.subr.mxu0 0.0
    %276 = vmatpush1.msra.mxu0 %v41
    %277 = vmatprep.subr.mxu0 0.0
    %278 = vmatpush1.msra.mxu0 %v42
    %279 = vmatprep.subr.mxu0 0.0
    %280 = vmatpush1.msra.mxu0 0.0
    %281 = vmatprep.subr.mxu0 0.0
    %282 = vmatpush1.msra.mxu0 0.0
    %283 = vmatprep.subr.mxu0 0.0
    %284 = vmatpush1.msra.mxu0 0.0
    %285 = vmatprep.subr.mxu0 0.0
    %286 = vmatpush1.msra.mxu0 0.0
    %287 = vmatprep.subr.mxu0 0.0
    %288 = vmatpush1.msra.mxu0 0.0
    %289 = vmatprep.subr.mxu0 0.0
    %290 = vmatpush1.msra.mxu0 0.0
    %291 = vmatprep.subr.mxu0 0.0
    %292 = vmatpush1.msra.mxu0 0.0
    %293 = vmatprep.subr.mxu0 0.0
    %294 = vmatpush1.msra.mxu0 0.0
    %295 = vmatprep.subr.mxu0 0.0
    %296 = vmatpush1.msra.mxu0 0.0
    %297 = vmatprep.subr.mxu0 0.0
    %298 = vmatpush1.msra.mxu0 0.0
    %299 = vmatprep.subr.mxu0 0.0
    %300 = vmatpush1.msra.mxu0 0.0
    %301 = vmatprep.subr.mxu0 0.0
    %302 = vmatpush1.msra.mxu0 0.0
    %303 = vmatprep.subr.mxu0 0.0
    %304 = vmatpush1.msra.mxu0 0.0
    %305 = vmatprep.subr.mxu0 0.0
    %306 = vmatpush1.msra.mxu0 0.0
    %307 = vmatprep.subr.mxu0 0.0
    %308 = vmatpush1.msra.mxu0 0.0
    %309 = vmatprep.subr.mxu0 0.0
    %310 = vmatpush1.msra.mxu0 0.0
    %311 = vmatprep.subr.mxu0 0.0
    %312 = vmatpush1.msra.mxu0 0.0
    %313 = vmatprep.subr.mxu0 0.0
    %314 = vmatpush1.msra.mxu0 0.0
    %315 = vmatprep.subr.mxu0 0.0
    %316 = vmatpush1.msra.mxu0 0.0
    %317 = vmatprep.subr.mxu0 0.0
    %318 = vmatpush1.msra.mxu0 0.0
    %319 = vmatprep.subr.mxu0 0.0
    %320 = vmatpush1.msra.mxu0 0.0
    %321 = vmatprep.subr.mxu0 0.0
    %322 = vmatpush1.msra.mxu0 0.0
    %323 = vmatprep.subr.mxu0 0.0
    %324 = vmatpush1.msra.mxu0 0.0
    %325 = vmatprep.subr.mxu0 0.0
    %326 = vmatpush1.msra.mxu0 0.0
    %327 = vmatprep.subr.mxu0 0.0
    %328 = vmatpush1.msra.mxu0 0.0
    %329 = vmatprep.subr.mxu0 0.0
    %330 = vmatpush1.msra.mxu0 0.0
    %331 = vmatprep.subr.mxu0 0.0
    %332 = vmatpush1.msra.mxu0 0.0
    %333 = vmatprep.subr.mxu0 0.0
    %334 = vmatpush1.msra.mxu0 0.0
    %335 = vmatprep.subr.mxu0 0.0
    %336 = vmatpush1.msra.mxu0 0.0
    %337 = vmatprep.subr.mxu0 0.0
    %338 = vmatpush1.msra.mxu0 0.0
    %339 = vmatprep.mubr.f32.mxu0 0.0
    %340 = vmatmul.mubr.f32.gmra.mrb[0].mxu0 %v45
    %v341 = vpop.f32.mrb[0].mxu0
    %v342 = vadd.f32 0.0, %v341
    %v343 = vpop.f32.mrb[0].mxu0
    %344 = vmatprep.mubr.f32.mxu0 0.0
    %345 = vmatmul.mubr.f32.gmra.mrb[0].mxu0 %v48
    %v346 = vpop.f32.mrb[0].mxu0
    %v347 = vadd.f32 0.0, %v346
    %v348 = vpop.f32.mrb[0].mxu0
    %349 = vdwg.mxu0
    %v350 = vld [vmem:[%s3] sm:$0x1]
    %v351 = vld [vmem:[%s3 + $0x1] sm:$0x1]
    %v352 = vld [vmem:[%s4] sm:$0x1]
    %v353 = vld [vmem:[%s4 + $0x1] sm:$0x1]
    %v354 = vld [vmem:[%s5] sm:$0x3]
    %v356 = vlaneseq
    %v357 = vshrl.u32 %v356, 7
    %v358 = vsub.s32 0, %v357
    %v359 = vrot.slane %v350, %v358
    %v361 = vmul.f32 %v359, %v354
    %v362 = vadd.f32 %v192, %v361
    %v364 = vlaneseq
    %v365 = vshrl.u32 %v364, 7
    %v366 = vsub.s32 0, %v365
    %v367 = vrot.slane %v352, %v366
    %v369 = vadd.f32 %v362, %v367
    %v370 = vxor.u32 %v369, 2147483648
    %v371 = vmul.f32 %v370, 1.442695
    %v372 = vpow.pop %v371
    %v373 = vadd.f32 %v372, 1.0
    %v374 = vrcp.pop %v373
    %v375 = vmul.f32 1.0, %v374
    %v376 = vsub.f32 %v354, %v117
    %v377 = vmul.f32 %v376, %v375
    %v378 = vadd.f32 %v377, %v117
    %v380 = vlaneseq
    %v381 = vshrl.u32 %v380, 7
    %v382 = vsub.s32 0, %v381
    %v383 = vrot.slane %v351, %v382
    %v385 = vmul.f32 %v383, %v378
    %v386 = vadd.f32 %v267, %v385
    %v388 = vlaneseq
    %v389 = vshrl.u32 %v388, 7
    %v390 = vsub.s32 0, %v389
    %v391 = vrot.slane %v353, %v390
    %v393 = vadd.f32 %v386, %v391
    %v394 = vxor.u32 %v393, 2147483648
    %v395 = vmul.f32 %v394, 1.442695
    %v396 = vpow.pop %v395
    %v397 = vadd.f32 %v396, 1.0
    %v398 = vrcp.pop %v397
    %v399 = vmul.f32 1.0, %v398
    %v400 = vsub.f32 %v378, %v342
    %v401 = vmul.f32 %v400, %v399
    %v402 = vadd.f32 %v401, %v342
    %vm403 = vcmask 254976
    %404 = vst.msk [vmem:[#allocation2] sm:$0x3] %vm403, %v402
    %v405 = vmul.f32 %v359, %v378
    %v407 = vrot.slane %v405, 6
    %v409 = vadd.f32 %v192, %v407
    %v410 = vadd.f32 %v409, %v367
    %v411 = vxor.u32 %v410, 2147483648
    %v412 = vmul.f32 %v411, 1.442695
    %v413 = vpow.pop %v412
    %v414 = vadd.f32 %v413, 1.0
    %v415 = vrcp.pop %v414
    %v416 = vmul.f32 1.0, %v415
    %v418 = vrot.slane %v117, 2
    %v420 = vsub.f32 %v378, %v418
    %v422 = vrot.slane %v416, 2
    %v424 = vmul.f32 %v420, %v422
    %v425 = vadd.f32 %v424, %v418
    %v426 = vmul.f32 %v383, %v425
    %v428 = vrot.slane %v426, 6
    %v430 = vadd.f32 %v267, %v428
    %v431 = vadd.f32 %v430, %v391
    %v432 = vxor.u32 %v431, 2147483648
    %v433 = vmul.f32 %v432, 1.442695
    %v434 = vpow.pop %v433
    %v435 = vadd.f32 %v434, 1.0
    %v436 = vrcp.pop %v435
    %v437 = vmul.f32 1.0, %v436
    %v439 = vrot.slane %v342, 2
    %v441 = vsub.f32 %v425, %v439
    %v443 = vrot.slane %v437, 2
    %v445 = vmul.f32 %v441, %v443
    %v446 = vadd.f32 %v445, %v439
    %447 = vst.msk [vmem:[#allocation2 + $0x2] sm:$0x3] %vm403, %v446
    %v448 = vmul.f32 %v359, %v425
    %v450 = vrot.slane %v448, 4
    %v452 = vadd.f32 %v192, %v450
    %v453 = vadd.f32 %v452, %v367
    %v454 = vxor.u32 %v453, 2147483648
    %v455 = vmul.f32 %v454, 1.442695
    %v456 = vpow.pop %v455
    %v457 = vadd.f32 %v456, 1.0
    %v458 = vrcp.pop %v457
    %v459 = vmul.f32 1.0, %v458
    %v460 = vrot.slane %v117, 4
    %v462 = vsub.f32 %v425, %v460
    %v464 = vrot.slane %v459, 4
    %v466 = vmul.f32 %v462, %v464
    %v467 = vadd.f32 %v466, %v460
    %v468 = vmul.f32 %v383, %v467
    %v470 = vrot.slane %v468, 4
    %v472 = vadd.f32 %v267, %v470
    %v473 = vadd.f32 %v472, %v391
    %v474 = vxor.u32 %v473, 2147483648
    %v475 = vmul.f32 %v474, 1.442695
    %v476 = vpow.pop %v475
    %v477 = vadd.f32 %v476, 1.0
    %v478 = vrcp.pop %v477
    %v479 = vmul.f32 1.0, %v478
    %v480 = vrot.slane %v342, 4
    %v482 = vsub.f32 %v467, %v480
    %v484 = vrot.slane %v479, 4
    %v486 = vmul.f32 %v482, %v484
    %v487 = vadd.f32 %v486, %v480
    %488 = vst.msk [vmem:[#allocation2 + $0x4] sm:$0x3] %vm403, %v487
    %v489 = vmul.f32 %v359, %v467
    %v491 = vrot.slane %v489, 2
    %v493 = vadd.f32 %v192, %v491
    %v494 = vadd.f32 %v493, %v367
    %v495 = vxor.u32 %v494, 2147483648
    %v496 = vmul.f32 %v495, 1.442695
    %v497 = vpow.pop %v496
    %v498 = vadd.f32 %v497, 1.0
    %v499 = vrcp.pop %v498
    %v500 = vmul.f32 1.0, %v499
    %v501 = vrot.slane %v117, 6
    %v503 = vsub.f32 %v467, %v501
    %v505 = vrot.slane %v500, 6
    %v507 = vmul.f32 %v503, %v505
    %v508 = vadd.f32 %v507, %v501
    %v509 = vmul.f32 %v383, %v508
    %v511 = vrot.slane %v509, 2
    %v513 = vadd.f32 %v267, %v511
    %v514 = vadd.f32 %v513, %v391
    %v515 = vxor.u32 %v514, 2147483648
    %v516 = vmul.f32 %v515, 1.442695
    %v517 = vpow.pop %v516
    %v518 = vadd.f32 %v517, 1.0
    %v519 = vrcp.pop %v518
    %v520 = vmul.f32 1.0, %v519
    %v521 = vrot.slane %v342, 6
    %v523 = vsub.f32 %v508, %v521
    %v525 = vrot.slane %v520, 6
    %v527 = vmul.f32 %v523, %v525
    %v528 = vadd.f32 %v527, %v521
    %529 = vst.msk [vmem:[#allocation2 + $0x6] sm:$0x3] %vm403, %v528
    %v530 = vmul.f32 %v359, %v508
    %v531 = vadd.f32 %v197, %v530
    %v532 = vadd.f32 %v531, %v367
    %v533 = vxor.u32 %v532, 2147483648
    %v534 = vmul.f32 %v533, 1.442695
    %v535 = vpow.pop %v534
    %v536 = vadd.f32 %v535, 1.0
    %v537 = vrcp.pop %v536
    %v538 = vmul.f32 1.0, %v537
    %v539 = vsub.f32 %v508, %v122
    %v540 = vmul.f32 %v539, %v538
    %v541 = vadd.f32 %v540, %v122
    %v542 = vmul.f32 %v383, %v541
    %v543 = vadd.f32 %v272, %v542
    %v544 = vadd.f32 %v543, %v391
    %v545 = vxor.u32 %v544, 2147483648
    %v546 = vmul.f32 %v545, 1.442695
    %v547 = vpow.pop %v546
    %v548 = vadd.f32 %v547, 1.0
    %v549 = vrcp.pop %v548
    %v550 = vmul.f32 1.0, %v549
    %v551 = vsub.f32 %v541, %v347
    %v552 = vmul.f32 %v551, %v550
    %v553 = vadd.f32 %v552, %v347
    %554 = vst.msk [vmem:[#allocation2 + $0x8] sm:$0x3] %vm403, %v553
    %v555 = vmul.f32 %v359, %v541
    %v557 = vrot.slane %v555, 6
    %v559 = vadd.f32 %v197, %v557
    %v560 = vadd.f32 %v559, %v367
    %v561 = vxor.u32 %v560, 2147483648
    %v562 = vmul.f32 %v561, 1.442695
    %v563 = vpow.pop %v562
    %v564 = vadd.f32 %v563, 1.0
    %v565 = vrcp.pop %v564
    %v566 = vmul.f32 1.0, %v565
    %v568 = vrot.slane %v122, 2
    %v570 = vsub.f32 %v541, %v568
    %v572 = vrot.slane %v566, 2
    %v574 = vmul.f32 %v570, %v572
    %v575 = vadd.f32 %v574, %v568
    %v576 = vmul.f32 %v383, %v575
    %v578 = vrot.slane %v576, 6
    %v580 = vadd.f32 %v272, %v578
    %v581 = vadd.f32 %v580, %v391
    %v582 = vxor.u32 %v581, 2147483648
    %v583 = vmul.f32 %v582, 1.442695
    %v584 = vpow.pop %v583
    %v585 = vadd.f32 %v584, 1.0
    %v586 = vrcp.pop %v585
    %v587 = vmul.f32 1.0, %v586
    %v589 = vrot.slane %v347, 2
    %v591 = vsub.f32 %v575, %v589
    %v593 = vrot.slane %v587, 2
    %v595 = vmul.f32 %v591, %v593
    %v596 = vadd.f32 %v595, %v589
    %597 = vst.msk [vmem:[#allocation2 + $0xa] sm:$0x3] %vm403, %v596
    %v598 = vmul.f32 %v359, %v575
    %v600 = vrot.slane %v598, 4
    %v602 = vadd.f32 %v197, %v600
    %v603 = vadd.f32 %v602, %v367
    %v604 = vxor.u32 %v603, 2147483648
    %v605 = vmul.f32 %v604, 1.442695
    %v606 = vpow.pop %v605
    %v607 = vadd.f32 %v606, 1.0
    %v608 = vrcp.pop %v607
    %v609 = vmul.f32 1.0, %v608
    %v610 = vrot.slane %v122, 4
    %v612 = vsub.f32 %v575, %v610
    %v614 = vrot.slane %v609, 4
    %v616 = vmul.f32 %v612, %v614
    %v617 = vadd.f32 %v616, %v610
    %v618 = vmul.f32 %v383, %v617
    %v620 = vrot.slane %v618, 4
    %v622 = vadd.f32 %v272, %v620
    %v623 = vadd.f32 %v622, %v391
    %v624 = vxor.u32 %v623, 2147483648
    %v625 = vmul.f32 %v624, 1.442695
    %v626 = vpow.pop %v625
    %v627 = vadd.f32 %v626, 1.0
    %v628 = vrcp.pop %v627
    %v629 = vmul.f32 1.0, %v628
    %v630 = vrot.slane %v347, 4
    %v632 = vsub.f32 %v617, %v630
    %v634 = vrot.slane %v629, 4
    %v636 = vmul.f32 %v632, %v634
    %v637 = vadd.f32 %v636, %v630
    %638 = vst.msk [vmem:[#allocation2 + $0xc] sm:$0x3] %vm403, %v637
    %v639 = vmul.f32 %v359, %v617
    %v641 = vrot.slane %v639, 2
    %v643 = vadd.f32 %v197, %v641
    %v644 = vadd.f32 %v643, %v367
    %v645 = vxor.u32 %v644, 2147483648
    %v646 = vmul.f32 %v645, 1.442695
    %v647 = vpow.pop %v646
    %v648 = vadd.f32 %v647, 1.0
    %v649 = vrcp.pop %v648
    %v650 = vmul.f32 1.0, %v649
    %v651 = vrot.slane %v122, 6
    %v653 = vsub.f32 %v617, %v651
    %v655 = vrot.slane %v650, 6
    %v657 = vmul.f32 %v653, %v655
    %v658 = vadd.f32 %v657, %v651
    %v659 = vmul.f32 %v383, %v658
    %v661 = vrot.slane %v659, 2
    %v663 = vadd.f32 %v272, %v661
    %v664 = vadd.f32 %v663, %v391
    %v665 = vxor.u32 %v664, 2147483648
    %v666 = vmul.f32 %v665, 1.442695
    %v667 = vpow.pop %v666
    %v668 = vadd.f32 %v667, 1.0
    %v669 = vrcp.pop %v668
    %v670 = vmul.f32 1.0, %v669
    %v671 = vrot.slane %v347, 6
    %v673 = vsub.f32 %v658, %v671
    %v675 = vrot.slane %v670, 6
    %v677 = vmul.f32 %v673, %v675
    %v678 = vadd.f32 %v677, %v671
    %679 = vst.msk [vmem:[#allocation2 + $0xe] sm:$0x3] %vm403, %v678
    %680 = vst.msk [vmem:[#allocation5] sm:$0x3] %vm403, %v658
    %v681 = vld [vmem:[#allocation2] sm:$0xff]
    %v682 = vld [vmem:[#allocation2 + $0x8] sm:$0xff]
    %v683 = vld [vmem:[%s2] sm:$0xff]
    %v684 = vld [vmem:[%s2 + $0x8] sm:$0xff]
    %v685 = vld [vmem:[%s2 + $0x10] sm:$0xff]
    %v686 = vld [vmem:[%s2 + $0x18] sm:$0xff]
    %v687 = vld [vmem:[%s2 + $0x20] sm:$0xff]
    %v688 = vld [vmem:[%s2 + $0x28] sm:$0xff]
    %v689 = vld [vmem:[%s2 + $0x30] sm:$0xff]
    %v690 = vld [vmem:[%s2 + $0x38] sm:$0xff]
    %v691 = vld [vmem:[%s2 + $0x40] sm:$0xff]
    %v692 = vld [vmem:[%s2 + $0x48] sm:$0xff]
    %v693 = vld [vmem:[%s2 + $0x50] sm:$0xff]
    %v694 = vld [vmem:[%s2 + $0x58] sm:$0xff]
    %vm695 = vcmask 261120
    %v697 = vsel %vm695, %v681, 0
    %v700 = vsel %vm695, %v682, 0
    %702 = vmatprep.subr.mxu0 0.0
    %703 = vmatpush1.msra.mxu0 %v683
    %704 = vmatprep.subr.mxu0 0.0
    %705 = vmatpush1.msra.mxu0 %v684
    %706 = vmatprep.subr.mxu0 0.0
    %707 = vmatpush1.msra.mxu0 %v685
    %708 = vmatprep.subr.mxu0 0.0
    %709 = vmatpush1.msra.mxu0 %v686
    %710 = vmatprep.subr.mxu0 0.0
    %711 = vmatpush1.msra.mxu0 0.0
    %712 = vmatprep.subr.mxu0 0.0
    %713 = vmatpush1.msra.mxu0 0.0
    %714 = vmatprep.subr.mxu0 0.0
    %715 = vmatpush1.msra.mxu0 0.0
    %716 = vmatprep.subr.mxu0 0.0
    %717 = vmatpush1.msra.mxu0 0.0
    %718 = vmatprep.subr.mxu0 0.0
    %719 = vmatpush1.msra.mxu0 0.0
    %720 = vmatprep.subr.mxu0 0.0
    %721 = vmatpush1.msra.mxu0 0.0
    %722 = vmatprep.subr.mxu0 0.0
    %723 = vmatpush1.msra.mxu0 0.0
    %724 = vmatprep.subr.mxu0 0.0
    %725 = vmatpush1.msra.mxu0 0.0
    %726 = vmatprep.subr.mxu0 0.0
    %727 = vmatpush1.msra.mxu0 0.0
    %728 = vmatprep.subr.mxu0 0.0
    %729 = vmatpush1.msra.mxu0 0.0
    %730 = vmatprep.subr.mxu0 0.0
    %731 = vmatpush1.msra.mxu0 0.0
    %732 = vmatprep.subr.mxu0 0.0
    %733 = vmatpush1.msra.mxu0 0.0
    %734 = vmatprep.subr.mxu0 0.0
    %735 = vmatpush1.msra.mxu0 0.0
    %736 = vmatprep.subr.mxu0 0.0
    %737 = vmatpush1.msra.mxu0 0.0
    %738 = vmatprep.subr.mxu0 0.0
    %739 = vmatpush1.msra.mxu0 0.0
    %740 = vmatprep.subr.mxu0 0.0
    %741 = vmatpush1.msra.mxu0 0.0
    %742 = vmatprep.subr.mxu0 0.0
    %743 = vmatpush1.msra.mxu0 0.0
    %744 = vmatprep.subr.mxu0 0.0
    %745 = vmatpush1.msra.mxu0 0.0
    %746 = vmatprep.subr.mxu0 0.0
    %747 = vmatpush1.msra.mxu0 0.0
    %748 = vmatprep.subr.mxu0 0.0
    %749 = vmatpush1.msra.mxu0 0.0
    %750 = vmatprep.subr.mxu0 0.0
    %751 = vmatpush1.msra.mxu0 0.0
    %752 = vmatprep.subr.mxu0 0.0
    %753 = vmatpush1.msra.mxu0 0.0
    %754 = vmatprep.subr.mxu0 0.0
    %755 = vmatpush1.msra.mxu0 0.0
    %756 = vmatprep.subr.mxu0 0.0
    %757 = vmatpush1.msra.mxu0 0.0
    %758 = vmatprep.subr.mxu0 0.0
    %759 = vmatpush1.msra.mxu0 0.0
    %760 = vmatprep.subr.mxu0 0.0
    %761 = vmatpush1.msra.mxu0 0.0
    %762 = vmatprep.subr.mxu0 0.0
    %763 = vmatpush1.msra.mxu0 0.0
    %764 = vmatprep.subr.mxu0 0.0
    %765 = vmatpush1.msra.mxu0 0.0
    %766 = vmatprep.mubr.f32.mxu0 0.0
    %767 = vmatmul.mubr.f32.gmra.mrb[0].mxu0 %v697
    %v768 = vpop.f32.mrb[0].mxu0
    %v769 = vadd.f32 0.0, %v768
    %v770 = vpop.f32.mrb[0].mxu0
    %771 = vmatprep.mubr.f32.mxu0 0.0
    %772 = vmatmul.mubr.f32.gmra.mrb[0].mxu0 %v700
    %v773 = vpop.f32.mrb[0].mxu0
    %v774 = vadd.f32 0.0, %v773
    %v775 = vpop.f32.mrb[0].mxu0
    %776 = vdwg.mxu0
    %777 = vmatprep.subr.mxu0 0.0
    %778 = vmatpush1.msra.mxu0 %v687
    %779 = vmatprep.subr.mxu0 0.0
    %780 = vmatpush1.msra.mxu0 %v688
    %781 = vmatprep.subr.mxu0 0.0
    %782 = vmatpush1.msra.mxu0 %v689
    %783 = vmatprep.subr.mxu0 0.0
    %784 = vmatpush1.msra.mxu0 %v690
    %785 = vmatprep.subr.mxu0 0.0
    %786 = vmatpush1.msra.mxu0 0.0
    %787 = vmatprep.subr.mxu0 0.0
    %788 = vmatpush1.msra.mxu0 0.0
    %789 = vmatprep.subr.mxu0 0.0
    %790 = vmatpush1.msra.mxu0 0.0
    %791 = vmatprep.subr.mxu0 0.0
    %792 = vmatpush1.msra.mxu0 0.0
    %793 = vmatprep.subr.mxu0 0.0
    %794 = vmatpush1.msra.mxu0 0.0
    %795 = vmatprep.subr.mxu0 0.0
    %796 = vmatpush1.msra.mxu0 0.0
    %797 = vmatprep.subr.mxu0 0.0
    %798 = vmatpush1.msra.mxu0 0.0
    %799 = vmatprep.subr.mxu0 0.0
    %800 = vmatpush1.msra.mxu0 0.0
    %801 = vmatprep.subr.mxu0 0.0
    %802 = vmatpush1.msra.mxu0 0.0
    %803 = vmatprep.subr.mxu0 0.0
    %804 = vmatpush1.msra.mxu0 0.0
    %805 = vmatprep.subr.mxu0 0.0
    %806 = vmatpush1.msra.mxu0 0.0
    %807 = vmatprep.subr.mxu0 0.0
    %808 = vmatpush1.msra.mxu0 0.0
    %809 = vmatprep.subr.mxu0 0.0
    %810 = vmatpush1.msra.mxu0 0.0
    %811 = vmatprep.subr.mxu0 0.0
    %812 = vmatpush1.msra.mxu0 0.0
    %813 = vmatprep.subr.mxu0 0.0
    %814 = vmatpush1.msra.mxu0 0.0
    %815 = vmatprep.subr.mxu0 0.0
    %816 = vmatpush1.msra.mxu0 0.0
    %817 = vmatprep.subr.mxu0 0.0
    %818 = vmatpush1.msra.mxu0 0.0
    %819 = vmatprep.subr.mxu0 0.0
    %820 = vmatpush1.msra.mxu0 0.0
    %821 = vmatprep.subr.mxu0 0.0
    %822 = vmatpush1.msra.mxu0 0.0
    %823 = vmatprep.subr.mxu0 0.0
    %824 = vmatpush1.msra.mxu0 0.0
    %825 = vmatprep.subr.mxu0 0.0
    %826 = vmatpush1.msra.mxu0 0.0
    %827 = vmatprep.subr.mxu0 0.0
    %828 = vmatpush1.msra.mxu0 0.0
    %829 = vmatprep.subr.mxu0 0.0
    %830 = vmatpush1.msra.mxu0 0.0
    %831 = vmatprep.subr.mxu0 0.0
    %832 = vmatpush1.msra.mxu0 0.0
    %833 = vmatprep.subr.mxu0 0.0
    %834 = vmatpush1.msra.mxu0 0.0
    %835 = vmatprep.subr.mxu0 0.0
    %836 = vmatpush1.msra.mxu0 0.0
    %837 = vmatprep.subr.mxu0 0.0
    %838 = vmatpush1.msra.mxu0 0.0
    %839 = vmatprep.subr.mxu0 0.0
    %840 = vmatpush1.msra.mxu0 0.0
    %841 = vmatprep.mubr.f32.mxu0 0.0
    %842 = vmatmul.mubr.f32.gmra.mrb[0].mxu0 %v697
    %v843 = vpop.f32.mrb[0].mxu0
    %v844 = vadd.f32 0.0, %v843
    %v845 = vpop.f32.mrb[0].mxu0
    %846 = vmatprep.mubr.f32.mxu0 0.0
    %847 = vmatmul.mubr.f32.gmra.mrb[0].mxu0 %v700
    %v848 = vpop.f32.mrb[0].mxu0
    %v849 = vadd.f32 0.0, %v848
    %v850 = vpop.f32.mrb[0].mxu0
    %851 = vdwg.mxu0
    %852 = vmatprep.subr.mxu0 0.0
    %853 = vmatpush1.msra.mxu0 %v691
    %854 = vmatprep.subr.mxu0 0.0
    %855 = vmatpush1.msra.mxu0 %v692
    %856 = vmatprep.subr.mxu0 0.0
    %857 = vmatpush1.msra.mxu0 %v693
    %858 = vmatprep.subr.mxu0 0.0
    %859 = vmatpush1.msra.mxu0 %v694
    %860 = vmatprep.subr.mxu0 0.0
    %861 = vmatpush1.msra.mxu0 0.0
    %862 = vmatprep.subr.mxu0 0.0
    %863 = vmatpush1.msra.mxu0 0.0
    %864 = vmatprep.subr.mxu0 0.0
    %865 = vmatpush1.msra.mxu0 0.0
    %866 = vmatprep.subr.mxu0 0.0
    %867 = vmatpush1.msra.mxu0 0.0
    %868 = vmatprep.subr.mxu0 0.0
    %869 = vmatpush1.msra.mxu0 0.0
    %870 = vmatprep.subr.mxu0 0.0
    %871 = vmatpush1.msra.mxu0 0.0
    %872 = vmatprep.subr.mxu0 0.0
    %873 = vmatpush1.msra.mxu0 0.0
    %874 = vmatprep.subr.mxu0 0.0
    %875 = vmatpush1.msra.mxu0 0.0
    %876 = vmatprep.subr.mxu0 0.0
    %877 = vmatpush1.msra.mxu0 0.0
    %878 = vmatprep.subr.mxu0 0.0
    %879 = vmatpush1.msra.mxu0 0.0
    %880 = vmatprep.subr.mxu0 0.0
    %881 = vmatpush1.msra.mxu0 0.0
    %882 = vmatprep.subr.mxu0 0.0
    %883 = vmatpush1.msra.mxu0 0.0
    %884 = vmatprep.subr.mxu0 0.0
    %885 = vmatpush1.msra.mxu0 0.0
    %886 = vmatprep.subr.mxu0 0.0
    %887 = vmatpush1.msra.mxu0 0.0
    %888 = vmatprep.subr.mxu0 0.0
    %889 = vmatpush1.msra.mxu0 0.0
    %890 = vmatprep.subr.mxu0 0.0
    %891 = vmatpush1.msra.mxu0 0.0
    %892 = vmatprep.subr.mxu0 0.0
    %893 = vmatpush1.msra.mxu0 0.0
    %894 = vmatprep.subr.mxu0 0.0
    %895 = vmatpush1.msra.mxu0 0.0
    %896 = vmatprep.subr.mxu0 0.0
    %897 = vmatpush1.msra.mxu0 0.0
    %898 = vmatprep.subr.mxu0 0.0
    %899 = vmatpush1.msra.mxu0 0.0
    %900 = vmatprep.subr.mxu0 0.0
    %901 = vmatpush1.msra.mxu0 0.0
    %902 = vmatprep.subr.mxu0 0.0
    %903 = vmatpush1.msra.mxu0 0.0
    %904 = vmatprep.subr.mxu0 0.0
    %905 = vmatpush1.msra.mxu0 0.0
    %906 = vmatprep.subr.mxu0 0.0
    %907 = vmatpush1.msra.mxu0 0.0
    %908 = vmatprep.subr.mxu0 0.0
    %909 = vmatpush1.msra.mxu0 0.0
    %910 = vmatprep.subr.mxu0 0.0
    %911 = vmatpush1.msra.mxu0 0.0
    %912 = vmatprep.subr.mxu0 0.0
    %913 = vmatpush1.msra.mxu0 0.0
    %914 = vmatprep.subr.mxu0 0.0
    %915 = vmatpush1.msra.mxu0 0.0
    %916 = vmatprep.mubr.f32.mxu0 0.0
    %917 = vmatmul.mubr.f32.gmra.mrb[0].mxu0 %v697
    %v918 = vpop.f32.mrb[0].mxu0
    %v919 = vadd.f32 0.0, %v918
    %v920 = vpop.f32.mrb[0].mxu0
    %921 = vmatprep.mubr.f32.mxu0 0.0
    %922 = vmatmul.mubr.f32.gmra.mrb[0].mxu0 %v700
    %v923 = vpop.f32.mrb[0].mxu0
    %v924 = vadd.f32 0.0, %v923
    %v925 = vpop.f32.mrb[0].mxu0
    %926 = vdwg.mxu0
    %s927 = scalar_lea.vmem %s3, 2
    %v928 = vld [vmem:[%s927] sm:$0x1]
    %v929 = vld [vmem:[%s927 + $0x1] sm:$0x1]
    %s930 = scalar_lea.vmem %s4, 2
    %v931 = vld [vmem:[%s930] sm:$0x1]
    %v932 = vld [vmem:[%s930 + $0x1] sm:$0x1]
    %s933 = scalar_lea.vmem %s5, 2
    %v934 = vld [vmem:[%s933] sm:$0x3]
    %v936 = vlaneseq
    %v937 = vshrl.u32 %v936, 7
    %v938 = vsub.s32 0, %v937
    %v939 = vrot.slane %v928, %v938
    %v941 = vmul.f32 %v939, %v934
    %v942 = vadd.f32 %v844, %v941
    %v944 = vlaneseq
    %v945 = vshrl.u32 %v944, 7
    %v946 = vsub.s32 0, %v945
    %v947 = vrot.slane %v931, %v946
    %v949 = vadd.f32 %v942, %v947
    %v950 = vxor.u32 %v949, 2147483648
    %v951 = vmul.f32 %v950, 1.442695
    %v952 = vpow.pop %v951
    %v953 = vadd.f32 %v952, 1.0
    %v954 = vrcp.pop %v953
    %v955 = vmul.f32 1.0, %v954
    %v956 = vsub.f32 %v934, %v769
    %v957 = vmul.f32 %v956, %v955
    %v958 = vadd.f32 %v957, %v769
    %v960 = vlaneseq
    %v961 = vshrl.u32 %v960, 7
    %v962 = vsub.s32 0, %v961
    %v963 = vrot.slane %v929, %v962
    %v965 = vmul.f32 %v963, %v958
    %v966 = vadd.f32 %v919, %v965
    %v968 = vlaneseq
    %v969 = vshrl.u32 %v968, 7
    %v970 = vsub.s32 0, %v969
    %v971 = vrot.slane %v932, %v970
    %v973 = vadd.f32 %v966, %v971
    %v974 = vxor.u32 %v973, 2147483648
    %v975 = vmul.f32 %v974, 1.442695
    %v976 = vpow.pop %v975
    %v977 = vadd.f32 %v976, 1.0
    %v978 = vrcp.pop %v977
    %v979 = vmul.f32 1.0, %v978
    %v980 = vsub.f32 %v958, %v681
    %v981 = vmul.f32 %v980, %v979
    %v982 = vadd.f32 %v981, %v681
    %983 = vst.msk [vmem:[#allocation2] sm:$0x3] %vm403, %v982
    %v984 = vmul.f32 %v939, %v958
    %v986 = vrot.slane %v984, 6
    %v988 = vadd.f32 %v844, %v986
    %v989 = vadd.f32 %v988, %v947
    %v990 = vxor.u32 %v989, 2147483648
    %v991 = vmul.f32 %v990, 1.442695
    %v992 = vpow.pop %v991
    %v993 = vadd.f32 %v992, 1.0
    %v994 = vrcp.pop %v993
    %v995 = vmul.f32 1.0, %v994
    %v997 = vrot.slane %v769, 2
    %v999 = vsub.f32 %v958, %v997
    %v1001 = vrot.slane %v995, 2
    %v1003 = vmul.f32 %v999, %v1001
    %v1004 = vadd.f32 %v1003, %v997
    %v1005 = vmul.f32 %v963, %v1004
    %v1007 = vrot.slane %v1005, 6
    %v1009 = vadd.f32 %v919, %v1007
    %v1010 = vadd.f32 %v1009, %v971
    %v1011 = vxor.u32 %v1010, 2147483648
    %v1012 = vmul.f32 %v1011, 1.442695
    %v1013 = vpow.pop %v1012
    %v1014 = vadd.f32 %v1013, 1.0
    %v1015 = vrcp.pop %v1014
    %v1016 = vmul.f32 1.0, %v1015
    %v1017 = vrot.slane %v681, 2
    %v1019 = vsub.f32 %v1004, %v1017
    %v1021 = vrot.slane %v1016, 2
    %v1023 = vmul.f32 %v1019, %v1021
    %v1024 = vadd.f32 %v1023, %v1017
    %1025 = vst.msk [vmem:[#allocation2 + $0x2] sm:$0x3] %vm403, %v1024
    %v1026 = vmul.f32 %v939, %v1004
    %v1028 = vrot.slane %v1026, 4
    %v1030 = vadd.f32 %v844, %v1028
    %v1031 = vadd.f32 %v1030, %v947
    %v1032 = vxor.u32 %v1031, 2147483648
    %v1033 = vmul.f32 %v1032, 1.442695
    %v1034 = vpow.pop %v1033
    %v1035 = vadd.f32 %v1034, 1.0
    %v1036 = vrcp.pop %v1035
    %v1037 = vmul.f32 1.0, %v1036
    %v1038 = vrot.slane %v769, 4
    %v1040 = vsub.f32 %v1004, %v1038
    %v1042 = vrot.slane %v1037, 4
    %v1044 = vmul.f32 %v1040, %v1042
    %v1045 = vadd.f32 %v1044, %v1038
    %v1046 = vmul.f32 %v963, %v1045
    %v1048 = vrot.slane %v1046, 4
    %v1050 = vadd.f32 %v919, %v1048
    %v1051 = vadd.f32 %v1050, %v971
    %v1052 = vxor.u32 %v1051, 2147483648
    %v1053 = vmul.f32 %v1052, 1.442695
    %v1054 = vpow.pop %v1053
    %v1055 = vadd.f32 %v1054, 1.0
    %v1056 = vrcp.pop %v1055
    %v1057 = vmul.f32 1.0, %v1056
    %v1058 = vrot.slane %v681, 4
    %v1060 = vsub.f32 %v1045, %v1058
    %v1062 = vrot.slane %v1057, 4
    %v1064 = vmul.f32 %v1060, %v1062
    %v1065 = vadd.f32 %v1064, %v1058
    %1066 = vst.msk [vmem:[#allocation2 + $0x4] sm:$0x3] %vm403, %v1065
    %v1067 = vmul.f32 %v939, %v1045
    %v1069 = vrot.slane %v1067, 2
    %v1071 = vadd.f32 %v844, %v1069
    %v1072 = vadd.f32 %v1071, %v947
    %v1073 = vxor.u32 %v1072, 2147483648
    %v1074 = vmul.f32 %v1073, 1.442695
    %v1075 = vpow.pop %v1074
    %v1076 = vadd.f32 %v1075, 1.0
    %v1077 = vrcp.pop %v1076
    %v1078 = vmul.f32 1.0, %v1077
    %v1079 = vrot.slane %v769, 6
    %v1081 = vsub.f32 %v1045, %v1079
    %v1083 = vrot.slane %v1078, 6
    %v1085 = vmul.f32 %v1081, %v1083
    %v1086 = vadd.f32 %v1085, %v1079
    %v1087 = vmul.f32 %v963, %v1086
    %v1089 = vrot.slane %v1087, 2
    %v1091 = vadd.f32 %v919, %v1089
    %v1092 = vadd.f32 %v1091, %v971
    %v1093 = vxor.u32 %v1092, 2147483648
    %v1094 = vmul.f32 %v1093, 1.442695
    %v1095 = vpow.pop %v1094
    %v1096 = vadd.f32 %v1095, 1.0
    %v1097 = vrcp.pop %v1096
    %v1098 = vmul.f32 1.0, %v1097
    %v1099 = vrot.slane %v681, 6
    %v1101 = vsub.f32 %v1086, %v1099
    %v1103 = vrot.slane %v1098, 6
    %v1105 = vmul.f32 %v1101, %v1103
    %v1106 = vadd.f32 %v1105, %v1099
    %1107 = vst.msk [vmem:[#allocation2 + $0x6] sm:$0x3] %vm403, %v1106
    %v1108 = vmul.f32 %v939, %v1086
    %v1109 = vadd.f32 %v849, %v1108
    %v1110 = vadd.f32 %v1109, %v947
    %v1111 = vxor.u32 %v1110, 2147483648
    %v1112 = vmul.f32 %v1111, 1.442695
    %v1113 = vpow.pop %v1112
    %v1114 = vadd.f32 %v1113, 1.0
    %v1115 = vrcp.pop %v1114
    %v1116 = vmul.f32 1.0, %v1115
    %v1117 = vsub.f32 %v1086, %v774
    %v1118 = vmul.f32 %v1117, %v1116
    %v1119 = vadd.f32 %v1118, %v774
    %v1120 = vmul.f32 %v963, %v1119
    %v1121 = vadd.f32 %v924, %v1120
    %v1122 = vadd.f32 %v1121, %v971
    %v1123 = vxor.u32 %v1122, 2147483648
    %v1124 = vmul.f32 %v1123, 1.442695
    %v1125 = vpow.pop %v1124
    %v1126 = vadd.f32 %v1125, 1.0
    %v1127 = vrcp.pop %v1126
    %v1128 = vmul.f32 1.0, %v1127
    %v1129 = vsub.f32 %v1119, %v682
    %v1130 = vmul.f32 %v1129, %v1128
    %v1131 = vadd.f32 %v1130, %v682
    %1132 = vst.msk [vmem:[#allocation2 + $0x8] sm:$0x3] %vm403, %v1131
    %v1133 = vmul.f32 %v939, %v1119
    %v1135 = vrot.slane %v1133, 6
    %v1137 = vadd.f32 %v849, %v1135
    %v1138 = vadd.f32 %v1137, %v947
    %v1139 = vxor.u32 %v1138, 2147483648
    %v1140 = vmul.f32 %v1139, 1.442695
    %v1141 = vpow.pop %v1140
    %v1142 = vadd.f32 %v1141, 1.0
    %v1143 = vrcp.pop %v1142
    %v1144 = vmul.f32 1.0, %v1143
    %v1146 = vrot.slane %v774, 2
    %v1148 = vsub.f32 %v1119, %v1146
    %v1150 = vrot.slane %v1144, 2
    %v1152 = vmul.f32 %v1148, %v1150
    %v1153 = vadd.f32 %v1152, %v1146
    %v1154 = vmul.f32 %v963, %v1153
    %v1156 = vrot.slane %v1154, 6
    %v1158 = vadd.f32 %v924, %v1156
    %v1159 = vadd.f32 %v1158, %v971
    %v1160 = vxor.u32 %v1159, 2147483648
    %v1161 = vmul.f32 %v1160, 1.442695
    %v1162 = vpow.pop %v1161
    %v1163 = vadd.f32 %v1162, 1.0
    %v1164 = vrcp.pop %v1163
    %v1165 = vmul.f32 1.0, %v1164
    %v1166 = vrot.slane %v682, 2
    %v1168 = vsub.f32 %v1153, %v1166
    %v1170 = vrot.slane %v1165, 2
    %v1172 = vmul.f32 %v1168, %v1170
    %v1173 = vadd.f32 %v1172, %v1166
    %1174 = vst.msk [vmem:[#allocation2 + $0xa] sm:$0x3] %vm403, %v1173
    %v1175 = vmul.f32 %v939, %v1153
    %v1177 = vrot.slane %v1175, 4
    %v1179 = vadd.f32 %v849, %v1177
    %v1180 = vadd.f32 %v1179, %v947
    %v1181 = vxor.u32 %v1180, 2147483648
    %v1182 = vmul.f32 %v1181, 1.442695
    %v1183 = vpow.pop %v1182
    %v1184 = vadd.f32 %v1183, 1.0
    %v1185 = vrcp.pop %v1184
    %v1186 = vmul.f32 1.0, %v1185
    %v1187 = vrot.slane %v774, 4
    %v1189 = vsub.f32 %v1153, %v1187
    %v1191 = vrot.slane %v1186, 4
    %v1193 = vmul.f32 %v1189, %v1191
    %v1194 = vadd.f32 %v1193, %v1187
    %v1195 = vmul.f32 %v963, %v1194
    %v1197 = vrot.slane %v1195, 4
    %v1199 = vadd.f32 %v924, %v1197
    %v1200 = vadd.f32 %v1199, %v971
    %v1201 = vxor.u32 %v1200, 2147483648
    %v1202 = vmul.f32 %v1201, 1.442695
    %v1203 = vpow.pop %v1202
    %v1204 = vadd.f32 %v1203, 1.0
    %v1205 = vrcp.pop %v1204
    %v1206 = vmul.f32 1.0, %v1205
    %v1207 = vrot.slane %v682, 4
    %v1209 = vsub.f32 %v1194, %v1207
    %v1211 = vrot.slane %v1206, 4
    %v1213 = vmul.f32 %v1209, %v1211
    %v1214 = vadd.f32 %v1213, %v1207
    %1215 = vst.msk [vmem:[#allocation2 + $0xc] sm:$0x3] %vm403, %v1214
    %v1216 = vmul.f32 %v939, %v1194
    %v1218 = vrot.slane %v1216, 2
    %v1220 = vadd.f32 %v849, %v1218
    %v1221 = vadd.f32 %v1220, %v947
    %v1222 = vxor.u32 %v1221, 2147483648
    %v1223 = vmul.f32 %v1222, 1.442695
    %v1224 = vpow.pop %v1223
    %v1225 = vadd.f32 %v1224, 1.0
    %v1226 = vrcp.pop %v1225
    %v1227 = vmul.f32 1.0, %v1226
    %v1228 = vrot.slane %v774, 6
    %v1230 = vsub.f32 %v1194, %v1228
    %v1232 = vrot.slane %v1227, 6
    %v1234 = vmul.f32 %v1230, %v1232
    %v1235 = vadd.f32 %v1234, %v1228
    %v1236 = vmul.f32 %v963, %v1235
    %v1238 = vrot.slane %v1236, 2
    %v1240 = vadd.f32 %v924, %v1238
    %v1241 = vadd.f32 %v1240, %v971
    %v1242 = vxor.u32 %v1241, 2147483648
    %v1243 = vmul.f32 %v1242, 1.442695
    %v1244 = vpow.pop %v1243
    %v1245 = vadd.f32 %v1244, 1.0
    %v1246 = vrcp.pop %v1245
    %v1247 = vmul.f32 1.0, %v1246
    %v1248 = vrot.slane %v682, 6
    %v1250 = vsub.f32 %v1235, %v1248
    %v1252 = vrot.slane %v1247, 6
    %v1254 = vmul.f32 %v1250, %v1252
    %v1255 = vadd.f32 %v1254, %v1248
    %1256 = vst.msk [vmem:[#allocation2 + $0xe] sm:$0x3] %vm403, %v1255
    %s1257 = scalar_lea.vmem [#allocation5], 2
    %1258 = vst.msk [vmem:[%s1257] sm:$0x3] %vm403, %v1235
    %v1259 = vld [vmem:[#allocation2] sm:$0xff]
    %v1260 = vld [vmem:[#allocation2 + $0x8] sm:$0xff]
    %s1261 = scalar_lea.vmem %s2, 96
    %v1262 = vld [vmem:[%s1261] sm:$0xff]
    %v1263 = vld [vmem:[%s1261 + $0x8] sm:$0xff]
    %v1264 = vld [vmem:[%s1261 + $0x10] sm:$0xff]
    %v1265 = vld [vmem:[%s1261 + $0x18] sm:$0xff]
    %v1266 = vld [vmem:[%s1261 + $0x20] sm:$0xff]
    %v1267 = vld [vmem:[%s1261 + $0x28] sm:$0xff]
    %v1268 = vld [vmem:[%s1261 + $0x30] sm:$0xff]
    %v1269 = vld [vmem:[%s1261 + $0x38] sm:$0xff]
    %v1270 = vld [vmem:[%s1261 + $0x40] sm:$0xff]
    %v1271 = vld [vmem:[%s1261 + $0x48] sm:$0xff]
    %v1272 = vld [vmem:[%s1261 + $0x50] sm:$0xff]
    %v1273 = vld [vmem:[%s1261 + $0x58] sm:$0xff]
    %v1275 = vsel %vm695, %v1259, 0
    %v1278 = vsel %vm695, %v1260, 0
    %1280 = vmatprep.subr.mxu0 0.0
    %1281 = vmatpush1.msra.mxu0 %v1262
    %1282 = vmatprep.subr.mxu0 0.0
    %1283 = vmatpush1.msra.mxu0 %v1263
    %1284 = vmatprep.subr.mxu0 0.0
    %1285 = vmatpush1.msra.mxu0 %v1264
    %1286 = vmatprep.subr.mxu0 0.0
    %1287 = vmatpush1.msra.mxu0 %v1265
    %1288 = vmatprep.subr.mxu0 0.0
    %1289 = vmatpush1.msra.mxu0 0.0
    %1290 = vmatprep.subr.mxu0 0.0
    %1291 = vmatpush1.msra.mxu0 0.0
    %1292 = vmatprep.subr.mxu0 0.0
    %1293 = vmatpush1.msra.mxu0 0.0
    %1294 = vmatprep.subr.mxu0 0.0
    %1295 = vmatpush1.msra.mxu0 0.0
    %1296 = vmatprep.subr.mxu0 0.0
    %1297 = vmatpush1.msra.mxu0 0.0
    %1298 = vmatprep.subr.mxu0 0.0
    %1299 = vmatpush1.msra.mxu0 0.0
    %1300 = vmatprep.subr.mxu0 0.0
    %1301 = vmatpush1.msra.mxu0 0.0
    %1302 = vmatprep.subr.mxu0 0.0
    %1303 = vmatpush1.msra.mxu0 0.0
    %1304 = vmatprep.subr.mxu0 0.0
    %1305 = vmatpush1.msra.mxu0 0.0
    %1306 = vmatprep.subr.mxu0 0.0
    %1307 = vmatpush1.msra.mxu0 0.0
    %1308 = vmatprep.subr.mxu0 0.0
    %1309 = vmatpush1.msra.mxu0 0.0
    %1310 = vmatprep.subr.mxu0 0.0
    %1311 = vmatpush1.msra.mxu0 0.0
    %1312 = vmatprep.subr.mxu0 0.0
    %1313 = vmatpush1.msra.mxu0 0.0
    %1314 = vmatprep.subr.mxu0 0.0
    %1315 = vmatpush1.msra.mxu0 0.0
    %1316 = vmatprep.subr.mxu0 0.0
    %1317 = vmatpush1.msra.mxu0 0.0
    %1318 = vmatprep.subr.mxu0 0.0
    %1319 = vmatpush1.msra.mxu0 0.0
    %1320 = vmatprep.subr.mxu0 0.0
    %1321 = vmatpush1.msra.mxu0 0.0
    %1322 = vmatprep.subr.mxu0 0.0
    %1323 = vmatpush1.msra.mxu0 0.0
    %1324 = vmatprep.subr.mxu0 0.0
    %1325 = vmatpush1.msra.mxu0 0.0
    %1326 = vmatprep.subr.mxu0 0.0
    %1327 = vmatpush1.msra.mxu0 0.0
    %1328 = vmatprep.subr.mxu0 0.0
    %1329 = vmatpush1.msra.mxu0 0.0
    %1330 = vmatprep.subr.mxu0 0.0
    %1331 = vmatpush1.msra.mxu0 0.0
    %1332 = vmatprep.subr.mxu0 0.0
    %1333 = vmatpush1.msra.mxu0 0.0
    %1334 = vmatprep.subr.mxu0 0.0
    %1335 = vmatpush1.msra.mxu0 0.0
    %1336 = vmatprep.subr.mxu0 0.0
    %1337 = vmatpush1.msra.mxu0 0.0
    %1338 = vmatprep.subr.mxu0 0.0
    %1339 = vmatpush1.msra.mxu0 0.0
    %1340 = vmatprep.subr.mxu0 0.0
    %1341 = vmatpush1.msra.mxu0 0.0
    %1342 = vmatprep.subr.mxu0 0.0
    %1343 = vmatpush1.msra.mxu0 0.0
    %1344 = vmatprep.mubr.f32.mxu0 0.0
    %1345 = vmatmul.mubr.f32.gmra.mrb[0].mxu0 %v1275
    %v1346 = vpop.f32.mrb[0].mxu0
    %v1347 = vadd.f32 0.0, %v1346
    %v1348 = vpop.f32.mrb[0].mxu0
    %1349 = vmatprep.mubr.f32.mxu0 0.0
    %1350 = vmatmul.mubr.f32.gmra.mrb[0].mxu0 %v1278
    %v1351 = vpop.f32.mrb[0].mxu0
    %v1352 = vadd.f32 0.0, %v1351
    %v1353 = vpop.f32.mrb[0].mxu0
    %1354 = vdwg.mxu0
    %1355 = vmatprep.subr.mxu0 0.0
    %1356 = vmatpush1.msra.mxu0 %v1266
    %1357 = vmatprep.subr.mxu0 0.0
    %1358 = vmatpush1.msra.mxu0 %v1267
    %1359 = vmatprep.subr.mxu0 0.0
    %1360 = vmatpush1.msra.mxu0 %v1268
    %1361 = vmatprep.subr.mxu0 0.0
    %1362 = vmatpush1.msra.mxu0 %v1269
    %1363 = vmatprep.subr.mxu0 0.0
    %1364 = vmatpush1.msra.mxu0 0.0
    %1365 = vmatprep.subr.mxu0 0.0
    %1366 = vmatpush1.msra.mxu0 0.0
    %1367 = vmatprep.subr.mxu0 0.0
    %1368 = vmatpush1.msra.mxu0 0.0
    %1369 = vmatprep.subr.mxu0 0.0
    %1370 = vmatpush1.msra.mxu0 0.0
    %1371 = vmatprep.subr.mxu0 0.0
    %1372 = vmatpush1.msra.mxu0 0.0
    %1373 = vmatprep.subr.mxu0 0.0
    %1374 = vmatpush1.msra.mxu0 0.0
    %1375 = vmatprep.subr.mxu0 0.0
    %1376 = vmatpush1.msra.mxu0 0.0
    %1377 = vmatprep.subr.mxu0 0.0
    %1378 = vmatpush1.msra.mxu0 0.0
    %1379 = vmatprep.subr.mxu0 0.0
    %1380 = vmatpush1.msra.mxu0 0.0
    %1381 = vmatprep.subr.mxu0 0.0
    %1382 = vmatpush1.msra.mxu0 0.0
    %1383 = vmatprep.subr.mxu0 0.0
    %1384 = vmatpush1.msra.mxu0 0.0
    %1385 = vmatprep.subr.mxu0 0.0
    %1386 = vmatpush1.msra.mxu0 0.0
    %1387 = vmatprep.subr.mxu0 0.0
    %1388 = vmatpush1.msra.mxu0 0.0
    %1389 = vmatprep.subr.mxu0 0.0
    %1390 = vmatpush1.msra.mxu0 0.0
    %1391 = vmatprep.subr.mxu0 0.0
    %1392 = vmatpush1.msra.mxu0 0.0
    %1393 = vmatprep.subr.mxu0 0.0
    %1394 = vmatpush1.msra.mxu0 0.0
    %1395 = vmatprep.subr.mxu0 0.0
    %1396 = vmatpush1.msra.mxu0 0.0
    %1397 = vmatprep.subr.mxu0 0.0
    %1398 = vmatpush1.msra.mxu0 0.0
    %1399 = vmatprep.subr.mxu0 0.0
    %1400 = vmatpush1.msra.mxu0 0.0
    %1401 = vmatprep.subr.mxu0 0.0
    %1402 = vmatpush1.msra.mxu0 0.0
    %1403 = vmatprep.subr.mxu0 0.0
    %1404 = vmatpush1.msra.mxu0 0.0
    %1405 = vmatprep.subr.mxu0 0.0
    %1406 = vmatpush1.msra.mxu0 0.0
    %1407 = vmatprep.subr.mxu0 0.0
    %1408 = vmatpush1.msra.mxu0 0.0
    %1409 = vmatprep.subr.mxu0 0.0
    %1410 = vmatpush1.msra.mxu0 0.0
    %1411 = vmatprep.subr.mxu0 0.0
    %1412 = vmatpush1.msra.mxu0 0.0
    %1413 = vmatprep.subr.mxu0 0.0
    %1414 = vmatpush1.msra.mxu0 0.0
    %1415 = vmatprep.subr.mxu0 0.0
    %1416 = vmatpush1.msra.mxu0 0.0
    %1417 = vmatprep.subr.mxu0 0.0
    %1418 = vmatpush1.msra.mxu0 0.0
    %1419 = vmatprep.mubr.f32.mxu0 0.0
    %1420 = vmatmul.mubr.f32.gmra.mrb[0].mxu0 %v1275
    %v1421 = vpop.f32.mrb[0].mxu0
    %v1422 = vadd.f32 0.0, %v1421
    %v1423 = vpop.f32.mrb[0].mxu0
    %1424 = vmatprep.mubr.f32.mxu0 0.0
    %1425 = vmatmul.mubr.f32.gmra.mrb[0].mxu0 %v1278
    %v1426 = vpop.f32.mrb[0].mxu0
    %v1427 = vadd.f32 0.0, %v1426
    %v1428 = vpop.f32.mrb[0].mxu0
    %1429 = vdwg.mxu0
    %1430 = vmatprep.subr.mxu0 0.0
    %1431 = vmatpush1.msra.mxu0 %v1270
    %1432 = vmatprep.subr.mxu0 0.0
    %1433 = vmatpush1.msra.mxu0 %v1271
    %1434 = vmatprep.subr.mxu0 0.0
    %1435 = vmatpush1.msra.mxu0 %v1272
    %1436 = vmatprep.subr.mxu0 0.0
    %1437 = vmatpush1.msra.mxu0 %v1273
    %1438 = vmatprep.subr.mxu0 0.0
    %1439 = vmatpush1.msra.mxu0 0.0
    %1440 = vmatprep.subr.mxu0 0.0
    %1441 = vmatpush1.msra.mxu0 0.0
    %1442 = vmatprep.subr.mxu0 0.0
    %1443 = vmatpush1.msra.mxu0 0.0
    %1444 = vmatprep.subr.mxu0 0.0
    %1445 = vmatpush1.msra.mxu0 0.0
    %1446 = vmatprep.subr.mxu0 0.0
    %1447 = vmatpush1.msra.mxu0 0.0
    %1448 = vmatprep.subr.mxu0 0.0
    %1449 = vmatpush1.msra.mxu0 0.0
    %1450 = vmatprep.subr.mxu0 0.0
    %1451 = vmatpush1.msra.mxu0 0.0
    %1452 = vmatprep.subr.mxu0 0.0
    %1453 = vmatpush1.msra.mxu0 0.0
    %1454 = vmatprep.subr.mxu0 0.0
    %1455 = vmatpush1.msra.mxu0 0.0
    %1456 = vmatprep.subr.mxu0 0.0
    %1457 = vmatpush1.msra.mxu0 0.0
    %1458 = vmatprep.subr.mxu0 0.0
    %1459 = vmatpush1.msra.mxu0 0.0
    %1460 = vmatprep.subr.mxu0 0.0
    %1461 = vmatpush1.msra.mxu0 0.0
    %1462 = vmatprep.subr.mxu0 0.0
    %1463 = vmatpush1.msra.mxu0 0.0
    %1464 = vmatprep.subr.mxu0 0.0
    %1465 = vmatpush1.msra.mxu0 0.0
    %1466 = vmatprep.subr.mxu0 0.0
    %1467 = vmatpush1.msra.mxu0 0.0
    %1468 = vmatprep.subr.mxu0 0.0
    %1469 = vmatpush1.msra.mxu0 0.0
    %1470 = vmatprep.subr.mxu0 0.0
    %1471 = vmatpush1.msra.mxu0 0.0
    %1472 = vmatprep.subr.mxu0 0.0
    %1473 = vmatpush1.msra.mxu0 0.0
    %1474 = vmatprep.subr.mxu0 0.0
    %1475 = vmatpush1.msra.mxu0 0.0
    %1476 = vmatprep.subr.mxu0 0.0
    %1477 = vmatpush1.msra.mxu0 0.0
    %1478 = vmatprep.subr.mxu0 0.0
    %1479 = vmatpush1.msra.mxu0 0.0
    %1480 = vmatprep.subr.mxu0 0.0
    %1481 = vmatpush1.msra.mxu0 0.0
    %1482 = vmatprep.subr.mxu0 0.0
    %1483 = vmatpush1.msra.mxu0 0.0
    %1484 = vmatprep.subr.mxu0 0.0
    %1485 = vmatpush1.msra.mxu0 0.0
    %1486 = vmatprep.subr.mxu0 0.0
    %1487 = vmatpush1.msra.mxu0 0.0
    %1488 = vmatprep.subr.mxu0 0.0
    %1489 = vmatpush1.msra.mxu0 0.0
    %1490 = vmatprep.subr.mxu0 0.0
    %1491 = vmatpush1.msra.mxu0 0.0
    %1492 = vmatprep.subr.mxu0 0.0
    %1493 = vmatpush1.msra.mxu0 0.0
    %1494 = vmatprep.mubr.f32.mxu0 0.0
    %1495 = vmatmul.mubr.f32.gmra.mrb[0].mxu0 %v1275
    %v1496 = vpop.f32.mrb[0].mxu0
    %v1497 = vadd.f32 0.0, %v1496
    %v1498 = vpop.f32.mrb[0].mxu0
    %1499 = vmatprep.mubr.f32.mxu0 0.0
    %1500 = vmatmul.mubr.f32.gmra.mrb[0].mxu0 %v1278
    %v1501 = vpop.f32.mrb[0].mxu0
    %v1502 = vadd.f32 0.0, %v1501
    %v1503 = vpop.f32.mrb[0].mxu0
    %1504 = vdwg.mxu0
    %s1505 = scalar_lea.vmem %s3, 4
    %v1506 = vld [vmem:[%s1505] sm:$0x1]
    %v1507 = vld [vmem:[%s1505 + $0x1] sm:$0x1]
    %s1508 = scalar_lea.vmem %s4, 4
    %v1509 = vld [vmem:[%s1508] sm:$0x1]
    %v1510 = vld [vmem:[%s1508 + $0x1] sm:$0x1]
    %s1511 = scalar_lea.vmem %s5, 4
    %v1512 = vld [vmem:[%s1511] sm:$0x3]
    %v1514 = vlaneseq
    %v1515 = vshrl.u32 %v1514, 7
    %v1516 = vsub.s32 0, %v1515
    %v1517 = vrot.slane %v1506, %v1516
    %v1519 = vmul.f32 %v1517, %v1512
    %v1520 = vadd.f32 %v1422, %v1519
    %v1522 = vlaneseq
    %v1523 = vshrl.u32 %v1522, 7
    %v1524 = vsub.s32 0, %v1523
    %v1525 = vrot.slane %v1509, %v1524
    %v1527 = vadd.f32 %v1520, %v1525
    %v1528 = vxor.u32 %v1527, 2147483648
    %v1529 = vmul.f32 %v1528, 1.442695
    %v1530 = vpow.pop %v1529
    %v1531 = vadd.f32 %v1530, 1.0
    %v1532 = vrcp.pop %v1531
    %v1533 = vmul.f32 1.0, %v1532
    %v1534 = vsub.f32 %v1512, %v1347
    %v1535 = vmul.f32 %v1534, %v1533
    %v1536 = vadd.f32 %v1535, %v1347
    %v1538 = vlaneseq
    %v1539 = vshrl.u32 %v1538, 7
    %v1540 = vsub.s32 0, %v1539
    %v1541 = vrot.slane %v1507, %v1540
    %v1543 = vmul.f32 %v1541, %v1536
    %v1544 = vadd.f32 %v1497, %v1543
    %v1546 = vlaneseq
    %v1547 = vshrl.u32 %v1546, 7
    %v1548 = vsub.s32 0, %v1547
    %v1549 = vrot.slane %v1510, %v1548
    %v1551 = vadd.f32 %v1544, %v1549
    %v1552 = vxor.u32 %v1551, 2147483648
    %v1553 = vmul.f32 %v1552, 1.442695
    %v1554 = vpow.pop %v1553
    %v1555 = vadd.f32 %v1554, 1.0
    %v1556 = vrcp.pop %v1555
    %v1557 = vmul.f32 1.0, %v1556
    %v1558 = vsub.f32 %v1536, %v1259
    %v1559 = vmul.f32 %v1558, %v1557
    %v1560 = vadd.f32 %v1559, %v1259
    %1561 = vst.msk [vmem:[#allocation2] sm:$0x3] %vm403, %v1560
    %v1562 = vmul.f32 %v1517, %v1536
    %v1564 = vrot.slane %v1562, 6
    %v1566 = vadd.f32 %v1422, %v1564
    %v1567 = vadd.f32 %v1566, %v1525
    %v1568 = vxor.u32 %v1567, 2147483648
    %v1569 = vmul.f32 %v1568, 1.442695
    %v1570 = vpow.pop %v1569
    %v1571 = vadd.f32 %v1570, 1.0
    %v1572 = vrcp.pop %v1571
    %v1573 = vmul.f32 1.0, %v1572
    %v1575 = vrot.slane %v1347, 2
    %v1577 = vsub.f32 %v1536, %v1575
    %v1579 = vrot.slane %v1573, 2
    %v1581 = vmul.f32 %v1577, %v1579
    %v1582 = vadd.f32 %v1581, %v1575
    %v1583 = vmul.f32 %v1541, %v1582
    %v1585 = vrot.slane %v1583, 6
    %v1587 = vadd.f32 %v1497, %v1585
    %v1588 = vadd.f32 %v1587, %v1549
    %v1589 = vxor.u32 %v1588, 2147483648
    %v1590 = vmul.f32 %v1589, 1.442695
    %v1591 = vpow.pop %v1590
    %v1592 = vadd.f32 %v1591, 1.0
    %v1593 = vrcp.pop %v1592
    %v1594 = vmul.f32 1.0, %v1593
    %v1595 = vrot.slane %v1259, 2
    %v1597 = vsub.f32 %v1582, %v1595
    %v1599 = vrot.slane %v1594, 2
    %v1601 = vmul.f32 %v1597, %v1599
    %v1602 = vadd.f32 %v1601, %v1595
    %1603 = vst.msk [vmem:[#allocation2 + $0x2] sm:$0x3] %vm403, %v1602
    %v1604 = vmul.f32 %v1517, %v1582
    %v1606 = vrot.slane %v1604, 4
    %v1608 = vadd.f32 %v1422, %v1606
    %v1609 = vadd.f32 %v1608, %v1525
    %v1610 = vxor.u32 %v1609, 2147483648
    %v1611 = vmul.f32 %v1610, 1.442695
    %v1612 = vpow.pop %v1611
    %v1613 = vadd.f32 %v1612, 1.0
    %v1614 = vrcp.pop %v1613
    %v1615 = vmul.f32 1.0, %v1614
    %v1616 = vrot.slane %v1347, 4
    %v1618 = vsub.f32 %v1582, %v1616
    %v1620 = vrot.slane %v1615, 4
    %v1622 = vmul.f32 %v1618, %v1620
    %v1623 = vadd.f32 %v1622, %v1616
    %v1624 = vmul.f32 %v1541, %v1623
    %v1626 = vrot.slane %v1624, 4
    %v1628 = vadd.f32 %v1497, %v1626
    %v1629 = vadd.f32 %v1628, %v1549
    %v1630 = vxor.u32 %v1629, 2147483648
    %v1631 = vmul.f32 %v1630, 1.442695
    %v1632 = vpow.pop %v1631
    %v1633 = vadd.f32 %v1632, 1.0
    %v1634 = vrcp.pop %v1633
    %v1635 = vmul.f32 1.0, %v1634
    %v1636 = vrot.slane %v1259, 4
    %v1638 = vsub.f32 %v1623, %v1636
    %v1640 = vrot.slane %v1635, 4
    %v1642 = vmul.f32 %v1638, %v1640
    %v1643 = vadd.f32 %v1642, %v1636
    %1644 = vst.msk [vmem:[#allocation2 + $0x4] sm:$0x3] %vm403, %v1643
    %v1645 = vmul.f32 %v1517, %v1623
    %v1647 = vrot.slane %v1645, 2
    %v1649 = vadd.f32 %v1422, %v1647
    %v1650 = vadd.f32 %v1649, %v1525
    %v1651 = vxor.u32 %v1650, 2147483648
    %v1652 = vmul.f32 %v1651, 1.442695
    %v1653 = vpow.pop %v1652
    %v1654 = vadd.f32 %v1653, 1.0
    %v1655 = vrcp.pop %v1654
    %v1656 = vmul.f32 1.0, %v1655
    %v1657 = vrot.slane %v1347, 6
    %v1659 = vsub.f32 %v1623, %v1657
    %v1661 = vrot.slane %v1656, 6
    %v1663 = vmul.f32 %v1659, %v1661
    %v1664 = vadd.f32 %v1663, %v1657
    %v1665 = vmul.f32 %v1541, %v1664
    %v1667 = vrot.slane %v1665, 2
    %v1669 = vadd.f32 %v1497, %v1667
    %v1670 = vadd.f32 %v1669, %v1549
    %v1671 = vxor.u32 %v1670, 2147483648
    %v1672 = vmul.f32 %v1671, 1.442695
    %v1673 = vpow.pop %v1672
    %v1674 = vadd.f32 %v1673, 1.0
    %v1675 = vrcp.pop %v1674
    %v1676 = vmul.f32 1.0, %v1675
    %v1677 = vrot.slane %v1259, 6
    %v1679 = vsub.f32 %v1664, %v1677
    %v1681 = vrot.slane %v1676, 6
    %v1683 = vmul.f32 %v1679, %v1681
    %v1684 = vadd.f32 %v1683, %v1677
    %1685 = vst.msk [vmem:[#allocation2 + $0x6] sm:$0x3] %vm403, %v1684
    %v1686 = vmul.f32 %v1517, %v1664
    %v1687 = vadd.f32 %v1427, %v1686
    %v1688 = vadd.f32 %v1687, %v1525
    %v1689 = vxor.u32 %v1688, 2147483648
    %v1690 = vmul.f32 %v1689, 1.442695
    %v1691 = vpow.pop %v1690
    %v1692 = vadd.f32 %v1691, 1.0
    %v1693 = vrcp.pop %v1692
    %v1694 = vmul.f32 1.0, %v1693
    %v1695 = vsub.f32 %v1664, %v1352
    %v1696 = vmul.f32 %v1695, %v1694
    %v1697 = vadd.f32 %v1696, %v1352
    %v1698 = vmul.f32 %v1541, %v1697
    %v1699 = vadd.f32 %v1502, %v1698
    %v1700 = vadd.f32 %v1699, %v1549
    %v1701 = vxor.u32 %v1700, 2147483648
    %v1702 = vmul.f32 %v1701, 1.442695
    %v1703 = vpow.pop %v1702
    %v1704 = vadd.f32 %v1703, 1.0
    %v1705 = vrcp.pop %v1704
    %v1706 = vmul.f32 1.0, %v1705
    %v1707 = vsub.f32 %v1697, %v1260
    %v1708 = vmul.f32 %v1707, %v1706
    %v1709 = vadd.f32 %v1708, %v1260
    %1710 = vst.msk [vmem:[#allocation2 + $0x8] sm:$0x3] %vm403, %v1709
    %v1711 = vmul.f32 %v1517, %v1697
    %v1713 = vrot.slane %v1711, 6
    %v1715 = vadd.f32 %v1427, %v1713
    %v1716 = vadd.f32 %v1715, %v1525
    %v1717 = vxor.u32 %v1716, 2147483648
    %v1718 = vmul.f32 %v1717, 1.442695
    %v1719 = vpow.pop %v1718
    %v1720 = vadd.f32 %v1719, 1.0
    %v1721 = vrcp.pop %v1720
    %v1722 = vmul.f32 1.0, %v1721
    %v1724 = vrot.slane %v1352, 2
    %v1726 = vsub.f32 %v1697, %v1724
    %v1728 = vrot.slane %v1722, 2
    %v1730 = vmul.f32 %v1726, %v1728
    %v1731 = vadd.f32 %v1730, %v1724
    %v1732 = vmul.f32 %v1541, %v1731
    %v1734 = vrot.slane %v1732, 6
    %v1736 = vadd.f32 %v1502, %v1734
    %v1737 = vadd.f32 %v1736, %v1549
    %v1738 = vxor.u32 %v1737, 2147483648
    %v1739 = vmul.f32 %v1738, 1.442695
    %v1740 = vpow.pop %v1739
    %v1741 = vadd.f32 %v1740, 1.0
    %v1742 = vrcp.pop %v1741
    %v1743 = vmul.f32 1.0, %v1742
    %v1744 = vrot.slane %v1260, 2
    %v1746 = vsub.f32 %v1731, %v1744
    %v1748 = vrot.slane %v1743, 2
    %v1750 = vmul.f32 %v1746, %v1748
    %v1751 = vadd.f32 %v1750, %v1744
    %1752 = vst.msk [vmem:[#allocation2 + $0xa] sm:$0x3] %vm403, %v1751
    %v1753 = vmul.f32 %v1517, %v1731
    %v1755 = vrot.slane %v1753, 4
    %v1757 = vadd.f32 %v1427, %v1755
    %v1758 = vadd.f32 %v1757, %v1525
    %v1759 = vxor.u32 %v1758, 2147483648
    %v1760 = vmul.f32 %v1759, 1.442695
    %v1761 = vpow.pop %v1760
    %v1762 = vadd.f32 %v1761, 1.0
    %v1763 = vrcp.pop %v1762
    %v1764 = vmul.f32 1.0, %v1763
    %v1765 = vrot.slane %v1352, 4
    %v1767 = vsub.f32 %v1731, %v1765
    %v1769 = vrot.slane %v1764, 4
    %v1771 = vmul.f32 %v1767, %v1769
    %v1772 = vadd.f32 %v1771, %v1765
    %v1773 = vmul.f32 %v1541, %v1772
    %v1775 = vrot.slane %v1773, 4
    %v1777 = vadd.f32 %v1502, %v1775
    %v1778 = vadd.f32 %v1777, %v1549
    %v1779 = vxor.u32 %v1778, 2147483648
    %v1780 = vmul.f32 %v1779, 1.442695
    %v1781 = vpow.pop %v1780
    %v1782 = vadd.f32 %v1781, 1.0
    %v1783 = vrcp.pop %v1782
    %v1784 = vmul.f32 1.0, %v1783
    %v1785 = vrot.slane %v1260, 4
    %v1787 = vsub.f32 %v1772, %v1785
    %v1789 = vrot.slane %v1784, 4
    %v1791 = vmul.f32 %v1787, %v1789
    %v1792 = vadd.f32 %v1791, %v1785
    %1793 = vst.msk [vmem:[#allocation2 + $0xc] sm:$0x3] %vm403, %v1792
    %v1794 = vmul.f32 %v1517, %v1772
    %v1796 = vrot.slane %v1794, 2
    %v1798 = vadd.f32 %v1427, %v1796
    %v1799 = vadd.f32 %v1798, %v1525
    %v1800 = vxor.u32 %v1799, 2147483648
    %v1801 = vmul.f32 %v1800, 1.442695
    %v1802 = vpow.pop %v1801
    %v1803 = vadd.f32 %v1802, 1.0
    %v1804 = vrcp.pop %v1803
    %v1805 = vmul.f32 1.0, %v1804
    %v1806 = vrot.slane %v1352, 6
    %v1808 = vsub.f32 %v1772, %v1806
    %v1810 = vrot.slane %v1805, 6
    %v1812 = vmul.f32 %v1808, %v1810
    %v1813 = vadd.f32 %v1812, %v1806
    %v1814 = vmul.f32 %v1541, %v1813
    %v1816 = vrot.slane %v1814, 2
    %v1818 = vadd.f32 %v1502, %v1816
    %v1819 = vadd.f32 %v1818, %v1549
    %v1820 = vxor.u32 %v1819, 2147483648
    %v1821 = vmul.f32 %v1820, 1.442695
    %v1822 = vpow.pop %v1821
    %v1823 = vadd.f32 %v1822, 1.0
    %v1824 = vrcp.pop %v1823
    %v1825 = vmul.f32 1.0, %v1824
    %v1826 = vrot.slane %v1260, 6
    %v1828 = vsub.f32 %v1813, %v1826
    %v1830 = vrot.slane %v1825, 6
    %v1832 = vmul.f32 %v1828, %v1830
    %v1833 = vadd.f32 %v1832, %v1826
    %1834 = vst.msk [vmem:[#allocation2 + $0xe] sm:$0x3] %vm403, %v1833
    %s1835 = scalar_lea.vmem [#allocation5], 4
    %1836 = vst.msk [vmem:[%s1835] sm:$0x3] %vm403, %v1813
    %v1837 = vld [vmem:[#allocation2] sm:$0xff]
    %v1838 = vld [vmem:[#allocation2 + $0x8] sm:$0xff]
    %v1839 = vld [vmem:[%s6] sm:$0xff]
    %v1840 = vld [vmem:[%s6 + $0x8] sm:$0xff]
    %v1841 = vld [vmem:[%s6 + $0x10] sm:$0xff]
    %v1842 = vld [vmem:[%s6 + $0x18] sm:$0xff]
    %v1843 = vld [vmem:[%s7] sm:$0x1]
    %v1845 = vlaneseq
    %v1846 = vshrl.u32 %v1845, 7
    %v1847 = vsub.s32 0, %v1846
    %v1848 = vrot.slane %v1843, %v1847
    %v1851 = vsel %vm695, %v1837, 0
    %v1854 = vsel %vm695, %v1838, 0
    %1856 = vmatprep.subr.mxu0 0.0
    %1857 = vmatpush1.msra.mxu0 %v1839
    %1858 = vmatprep.subr.mxu0 0.0
    %1859 = vmatpush1.msra.mxu0 %v1840
    %1860 = vmatprep.subr.mxu0 0.0
    %1861 = vmatpush1.msra.mxu0 %v1841
    %1862 = vmatprep.subr.mxu0 0.0
    %1863 = vmatpush1.msra.mxu0 %v1842
    %1864 = vmatprep.subr.mxu0 0.0
    %1865 = vmatpush1.msra.mxu0 0.0
    %1866 = vmatprep.subr.mxu0 0.0
    %1867 = vmatpush1.msra.mxu0 0.0
    %1868 = vmatprep.subr.mxu0 0.0
    %1869 = vmatpush1.msra.mxu0 0.0
    %1870 = vmatprep.subr.mxu0 0.0
    %1871 = vmatpush1.msra.mxu0 0.0
    %1872 = vmatprep.subr.mxu0 0.0
    %1873 = vmatpush1.msra.mxu0 0.0
    %1874 = vmatprep.subr.mxu0 0.0
    %1875 = vmatpush1.msra.mxu0 0.0
    %1876 = vmatprep.subr.mxu0 0.0
    %1877 = vmatpush1.msra.mxu0 0.0
    %1878 = vmatprep.subr.mxu0 0.0
    %1879 = vmatpush1.msra.mxu0 0.0
    %1880 = vmatprep.subr.mxu0 0.0
    %1881 = vmatpush1.msra.mxu0 0.0
    %1882 = vmatprep.subr.mxu0 0.0
    %1883 = vmatpush1.msra.mxu0 0.0
    %1884 = vmatprep.subr.mxu0 0.0
    %1885 = vmatpush1.msra.mxu0 0.0
    %1886 = vmatprep.subr.mxu0 0.0
    %1887 = vmatpush1.msra.mxu0 0.0
    %1888 = vmatprep.subr.mxu0 0.0
    %1889 = vmatpush1.msra.mxu0 0.0
    %1890 = vmatprep.subr.mxu0 0.0
    %1891 = vmatpush1.msra.mxu0 0.0
    %1892 = vmatprep.subr.mxu0 0.0
    %1893 = vmatpush1.msra.mxu0 0.0
    %1894 = vmatprep.subr.mxu0 0.0
    %1895 = vmatpush1.msra.mxu0 0.0
    %1896 = vmatprep.subr.mxu0 0.0
    %1897 = vmatpush1.msra.mxu0 0.0
    %1898 = vmatprep.subr.mxu0 0.0
    %1899 = vmatpush1.msra.mxu0 0.0
    %1900 = vmatprep.subr.mxu0 0.0
    %1901 = vmatpush1.msra.mxu0 0.0
    %1902 = vmatprep.subr.mxu0 0.0
    %1903 = vmatpush1.msra.mxu0 0.0
    %1904 = vmatprep.subr.mxu0 0.0
    %1905 = vmatpush1.msra.mxu0 0.0
    %1906 = vmatprep.subr.mxu0 0.0
    %1907 = vmatpush1.msra.mxu0 0.0
    %1908 = vmatprep.subr.mxu0 0.0
    %1909 = vmatpush1.msra.mxu0 0.0
    %1910 = vmatprep.subr.mxu0 0.0
    %1911 = vmatpush1.msra.mxu0 0.0
    %1912 = vmatprep.subr.mxu0 0.0
    %1913 = vmatpush1.msra.mxu0 0.0
    %1914 = vmatprep.subr.mxu0 0.0
    %1915 = vmatpush1.msra.mxu0 0.0
    %1916 = vmatprep.subr.mxu0 0.0
    %1917 = vmatpush1.msra.mxu0 0.0
    %1918 = vmatprep.subr.mxu0 0.0
    %1919 = vmatpush1.msra.mxu0 0.0
    %1920 = vmatprep.mubr.f32.mxu0 0.0
    %1921 = vmatmul.mubr.f32.gmra.mrb[0].mxu0 %v1851
    %v1922 = vpop.f32.mrb[0].mxu0
    %v1923 = vadd.f32 %v1848, %v1922
    %v1924 = vpop.f32.mrb[0].mxu0
    %1925 = vmatprep.mubr.f32.mxu0 0.0
    %1926 = vmatmul.mubr.f32.gmra.mrb[0].mxu0 %v1854
    %v1927 = vpop.f32.mrb[0].mxu0
    %v1928 = vadd.f32 %v1848, %v1927
    %v1929 = vpop.f32.mrb[0].mxu0
    %1930 = vdwg.mxu0
    %1931 = vst.msk [vmem:[#allocation3] sm:$0xff] %vm43, %v1923
    %1932 = vst.msk [vmem:[#allocation3 + $0x8] sm:$0xff] %vm43, %v1928
    // Predicated region
    $region34: #{model_forward.1} parent=1 // pred_check
      _
    $region35: #{model_forward.1} parent=1 // pred_check_branch
      %1934 = sbr.rel (0) target = $region37
    $region36: #{model_forward.1} parent=1 // pred_region
      %s1936 = ssub.s32 256, 256
      %1937 = vsyncadd [#allocation4], %s1936
      %s1938 = sshll.u32 [#allocation3], 4
      %s1939 = int_to_ptr.vmem [resolvable:$true] %s1938
      %1944 = dma.vmem_to_hbm [thread:$0]  %s1939, 256, %s8, [#allocation4], 128, 128, 8
    $region37: #{model_forward.1} parent=1 // pred_fallthru
      _
    // Predicated region
    $region38: #{model_forward.1} parent=1 // pred_check
      _
    $region39: #{model_forward.1} parent=1 // pred_check_branch
      %1946 = sbr.rel (0) target = $region41
    $region40: #{model_forward.1} parent=1 // pred_region
      %s1948 = ssub.s32 96, 96
      %1949 = vsyncadd [#allocation6], %s1948
      %s1950 = sshll.u32 [#allocation5], 4
      %s1951 = int_to_ptr.vmem [resolvable:$true] %s1950
      %1956 = dma.vmem_to_hbm [thread:$0]  %s1951, 96, %s9, [#allocation6], 32, 32, 2
    $region41: #{model_forward.1} parent=1 // pred_fallthru
      _
    // Predicated region
    $region42: #{model_forward.1} parent=1 // pred_check
      _
    $region43: #{model_forward.1} parent=1 // pred_check_branch
      %1958 = sbr.rel (0) target = $region45
    $region44: #{model_forward.1} parent=1 // pred_region
      %1959 = dma.done [#allocation4], 256
    $region45: #{model_forward.1} parent=1 // pred_fallthru
      _
    // Predicated region
    $region46: #{model_forward.1} parent=1 // pred_check
      _
    $region47: #{model_forward.1} parent=1 // pred_check_branch
      %1961 = sbr.rel (0) target = $region49
    $region48: #{model_forward.1} parent=1 // pred_region
      %1962 = dma.done [#allocation6], 96
    $region49: #{model_forward.1} parent=1 // pred_fallthru
      _
    %1963 = vsyncpa [#allocation4], 1
    %1964 = vsyncpa [#allocation6], 1

</llo_original>
